<compile_context>
chip_gen: v7x
topology: tpu7x:2x2x1
jax: 0.10.0
libtpu: 0.0.40
codegen_flags: <defaults>
</compile_context>

<pallas_src>
import functools

import jax
import jax.numpy as jnp
from jax.experimental import pallas as pl
from jax.experimental.pallas import tpu as pltpu

C = 64          # conv channels (residual add requires in_channels == 64)
KH = KW = 3     # 3x3 kernels
NTAP = KH * KW  # 9 taps


def _build_patch_t(xv, col, H, W):
    """Transposed im2col patch for a 3x3 SAME conv.

    xv  : (C, H*W) f32   one image, NCHW spatial flattened (lane dim = H*W)
    col : (1, H*W) int32 per-pixel column index (iota % W)
    returns (9*C, H*W) f32 with rows ordered (kh, kw, cin).
    """
    HW = H * W
    zpad = jnp.zeros((xv.shape[0], W + 1), xv.dtype)
    # One lane-dim pad per conv: gives zero rows above/below the image so the
    # H boundary needs no masks and every tap is a plain static lane slice.
    xp = jnp.concatenate([zpad, xv, zpad], axis=1)        # (C, HW + 2W + 2)
    taps = []
    for dh in (-1, 0, 1):          # kh = dh + 1
        for dw in (-1, 0, 1):      # kw = dw + 1
            off = dh * W + dw
            s = (W + 1) + off
            t = xp[:, s:s + HW]    # = x[:, idx + off] (or zero H-padding)
            # W is not padded in the flat layout, so a +-1 column shift wraps
            # into the neighbouring row: mask those lanes to zero (cheap VPU
            # select against a precomputed per-lane column index).
            if dw == -1:
                t = jnp.where(col >= 1, t, 0.0)
            elif dw == 1:
                t = jnp.where(col <= W - 2, t, 0.0)
            taps.append(t)
    # Sublane-dim concat (each tap starts at a multiple of C=64 sublanes):
    # no lane relayout, unlike the previous minor-dim concatenation.
    return jnp.concatenate(taps, axis=0)                  # (9C, HW)


def residual_block_kernel(x_ref, w1t_ref, w2t_ref, b1_ref, b2_ref, out_ref,
                          *, H, W, b_tile):
    # x_ref   : (b_tile, C, H*W) f32  NCHW input, spatial flattened
    # w*t_ref : (C, 9*C) bf16         transposed conv weights, BN scale folded
    # b*_ref  : (C, 1) f32            folded BN shift (per output channel)
    # out_ref : (b_tile, C, H*W)
    HW = H * W
    col = jax.lax.broadcasted_iota(jnp.int32, (1, HW), 1) % W

    w1t = w1t_ref[...]
    w2t = w2t_ref[...]
    b1 = b1_ref[...]
    b2 = b2_ref[...]

    for b in range(b_tile):
        x = x_ref[b]                                               # (C, HW) f32
        # ---- conv1 (BN1 scale folded into weights) + shift + ReLU ----
        p1 = _build_patch_t(x, col, H, W).astype(jnp.bfloat16)     # (9C, HW)
        h = jnp.dot(w1t, p1, preferred_element_type=jnp.float32)   # (C, HW) f32
        h = jnp.maximum(h + b1, 0.0)
        # ---- conv2 (BN2 scale folded) + shift + residual (f32 residual) ----
        p2 = _build_patch_t(h, col, H, W).astype(jnp.bfloat16)
        y = jnp.dot(w2t, p2, preferred_element_type=jnp.float32)
        out_ref[b] = (y + b2 + x).astype(out_ref.dtype)            # lane-dense store


def residual_block_nchw(x_nchw, params, *, b_tile=2):
    """PyTorch-facing entry point: NCHW in, NCHW out (no transposes needed)."""
    w1, w2, s1, b1, s2, b2 = params
    N, Cin, H, W = x_nchw.shape
    assert Cin == C, "residual add requires in_channels == 64"
    HW = H * W
    b_tile = max(1, min(b_tile, N))
    assert N % b_tile == 0, "b_tile must divide the batch"

    x_flat = x_nchw.reshape(N, C, HW)   # free reshape (row-major NCHW)

    # Fold the per-output-channel BN scale into the conv weights, transpose to
    # the (C_out, 9*C_in) weight-stationary layout, cast to bf16 for the MXU.
    # Column order is (kh, kw, cin), matching the in-kernel tap stacking order.
    w1t = (w1 * s1.reshape(1, 1, 1, C)).reshape(NTAP * C, C).T.astype(jnp.bfloat16)
    w2t = (w2 * s2.reshape(1, 1, 1, C)).reshape(NTAP * C, C).T.astype(jnp.bfloat16)
    b1t = b1.reshape(C, 1).astype(jnp.float32)
    b2t = b2.reshape(C, 1).astype(jnp.float32)

    flops = 2 * (2 * N * HW * (NTAP * C) * C)          # two 3x3 convs as matmuls
    bytes_accessed = (2 * N * C * HW * 4               # x in + out (f32)
                      + 2 * NTAP * C * C * 2           # both weight slabs (bf16)
                      + 2 * C * 4)                     # folded shifts

    kernel = functools.partial(residual_block_kernel, H=H, W=W, b_tile=b_tile)
    out_flat = pl.pallas_call(
        kernel,
        out_shape=jax.ShapeDtypeStruct((N, C, HW), x_nchw.dtype),
        grid_spec=pltpu.PrefetchScalarGridSpec(
            num_scalar_prefetch=0,
            grid=(N // b_tile,),
            in_specs=[
                pl.BlockSpec((b_tile, C, HW), lambda n: (n, 0, 0)),
                pl.BlockSpec((C, NTAP * C), lambda n: (0, 0)),
                pl.BlockSpec((C, NTAP * C), lambda n: (0, 0)),
                pl.BlockSpec((C, 1), lambda n: (0, 0)),
                pl.BlockSpec((C, 1), lambda n: (0, 0)),
            ],
            out_specs=pl.BlockSpec((b_tile, C, HW), lambda n: (n, 0, 0)),
        ),
        compiler_params=pltpu.CompilerParams(
            dimension_semantics=("parallel",)),
        cost_estimate=pl.CostEstimate(flops=flops, transcendentals=0,
                                      bytes_accessed=bytes_accessed),
    )(x_flat, w1t, w2t, b1t, b2t)
    return out_flat.reshape(N, C, H, W)


def make_params(key):
    """Deterministic synthetic parameters matching the module's __init__."""
    k1, k2, k3, k4 = jax.random.split(key, 4)
    # Conv weights: TruncatedNormal(std=0.02), HWIO layout, no bias.
    w1 = jax.random.truncated_normal(k1, -2.0, 2.0, (KH, KW, C, C), jnp.float32) * 0.02
    w2 = jax.random.truncated_normal(k2, -2.0, 2.0, (KH, KW, C, C), jnp.float32) * 0.02
    # BatchNorm: gamma ~ TruncatedNormal(mean=1, std=0.02), beta = 0,
    # running_mean = 0, running_var = 1, eps = 1e-5 (inference mode, folded).
    eps = 1e-5
    g1 = 1.0 + jax.random.truncated_normal(k3, -2.0, 2.0, (C,), jnp.float32) * 0.02
    g2 = 1.0 + jax.random.truncated_normal(k4, -2.0, 2.0, (C,), jnp.float32) * 0.02
    beta1 = jnp.zeros((C,), jnp.float32)
    beta2 = jnp.zeros((C,), jnp.float32)
    rmean = jnp.zeros((C,), jnp.float32)
    rvar = jnp.ones((C,), jnp.float32)
    s1 = (g1 / jnp.sqrt(rvar + eps)).reshape(1, C)
    b1 = (beta1 - rmean * g1 / jnp.sqrt(rvar + eps)).reshape(1, C)
    s2 = (g2 / jnp.sqrt(rvar + eps)).reshape(1, C)
    b2 = (beta2 - rmean * g2 / jnp.sqrt(rvar + eps)).reshape(1, C)
    return (w1, w2, s1, b1, s2, b2)


def reference_nchw(x, w1, w2, s1, b1, s2, b2):
    """Plain-JAX NCHW reference (full f32) for correctness checking."""
    def conv(z, w):
        return jax.lax.conv_general_dilated(
            z, w, window_strides=(1, 1), padding="SAME",
            dimension_numbers=("NCHW", "HWIO", "NCHW"))
    s1c, b1c = s1.reshape(1, C, 1, 1), b1.reshape(1, C, 1, 1)
    s2c, b2c = s2.reshape(1, C, 1, 1), b2.reshape(1, C, 1, 1)
    h = jnp.maximum(conv(x, w1) * s1c + b1c, 0.0)
    h = conv(h, w2) * s2c + b2c
    return x + h


if __name__ == "__main__":
    key = jax.random.PRNGKey(0)
    kx, kp = jax.random.split(key)

    N, H, W = 2, 16, 16
    x_nchw = jax.random.normal(kx, (N, C, H, W), jnp.float32)   # PyTorch layout
    params = make_params(kp)

    out = jax.block_until_ready(residual_block_nchw(x_nchw, params, b_tile=2))

    ref = reference_nchw(x_nchw, *params)
    assert out.shape == x_nchw.shape
    # bf16 MXU operands with f32 accumulation -> slightly looser tolerance.
    assert jnp.allclose(out, ref, atol=2e-2, rtol=2e-2), "mismatch vs reference"

    print("KERNEL_OK")
</pallas_src>

<mosaic_0001>
module attributes {stable_mosaic.version = 11 : i64} {
  func.func @residual_block_kernel(%arg0: i32, %arg1: memref<2x64x256xf32, #tpu.memory_space<vmem>>, %arg2: memref<64x576xbf16, #tpu.memory_space<vmem>>, %arg3: memref<64x576xbf16, #tpu.memory_space<vmem>>, %arg4: memref<64x1xf32, #tpu.memory_space<vmem>>, %arg5: memref<64x1xf32, #tpu.memory_space<vmem>>, %arg6: memref<2x64x256xf32, #tpu.memory_space<vmem>>) attributes {dimension_semantics = [#tpu.dimension_semantics<parallel>], iteration_bounds = array<i64: 1>, scalar_prefetch = 0 : i64, scratch_operands = 0 : i64, tpu.core_type = #tpu.core_type<tc>, window_params = [{transform_indices = @transform_0, window_bounds = array<i64: 2, 64, 256>}, {pipeline_mode = #tpu.pipeline_mode<synchronous>, transform_indices = @transform_1, window_bounds = array<i64: 64, 576>}, {pipeline_mode = #tpu.pipeline_mode<synchronous>, transform_indices = @transform_2, window_bounds = array<i64: 64, 576>}, {pipeline_mode = #tpu.pipeline_mode<synchronous>, transform_indices = @transform_3, window_bounds = array<i64: 64, 1>}, {pipeline_mode = #tpu.pipeline_mode<synchronous>, transform_indices = @transform_4, window_bounds = array<i64: 64, 1>}, {transform_indices = @transform_5, window_bounds = array<i64: 2, 64, 256>}]} {
    %0 = tpu.iota {dimensions = array<i32: 1>} : vector<1x256xi32>
    %c16_i32 = arith.constant 16 : i32
    %c0_i32 = arith.constant 0 : i32
    %1 = arith.cmpi eq, %c16_i32, %c0_i32 : i32
    %c1_i32 = arith.constant 1 : i32
    %2 = arith.select %1, %c1_i32, %c16_i32 : i32
    %3 = vector.broadcast %2 : i32 to vector<1x256xi32>
    %4 = arith.remsi %0, %3 : vector<1x256xi32>
    %c0_i32_0 = arith.constant 0 : i32
    %5 = vector.broadcast %c0_i32_0 : i32 to vector<1x256xi32>
    %6 = arith.cmpi ne, %4, %5 : vector<1x256xi32>
    %c0_i32_1 = arith.constant 0 : i32
    %7 = vector.broadcast %c0_i32_1 : i32 to vector<1x256xi32>
    %8 = arith.cmpi slt, %4, %7 : vector<1x256xi32>
    %c0_i32_2 = arith.constant 0 : i32
    %9 = arith.cmpi slt, %2, %c0_i32_2 : i32
    %10 = vector.broadcast %9 : i1 to vector<1x256xi1>
    %11 = vector.broadcast %10 : vector<1x256xi1> to vector<1x256xi1>
    %12 = arith.xori %8, %11 : vector<1x256xi1>
    %13 = arith.andi %12, %6 : vector<1x256xi1>
    %14 = vector.broadcast %2 : i32 to vector<1x256xi32>
    %15 = arith.addi %4, %14 : vector<1x256xi32>
    %16 = arith.select %13, %15, %4 : vector<1x256xi1>, vector<1x256xi32>
    %c0 = arith.constant 0 : index
    %c0_3 = arith.constant 0 : index
    %17 = vector.load %arg2[%c0, %c0_3] : memref<64x576xbf16, #tpu.memory_space<vmem>>, vector<64x576xbf16>
    %c0_4 = arith.constant 0 : index
    %c0_5 = arith.constant 0 : index
    %18 = vector.load %arg3[%c0_4, %c0_5] : memref<64x576xbf16, #tpu.memory_space<vmem>>, vector<64x576xbf16>
    %c0_6 = arith.constant 0 : index
    %c0_7 = arith.constant 0 : index
    %19 = vector.load %arg4[%c0_6, %c0_7] : memref<64x1xf32, #tpu.memory_space<vmem>>, vector<64x1xf32>
    %c0_8 = arith.constant 0 : index
    %c0_9 = arith.constant 0 : index
    %20 = vector.load %arg5[%c0_8, %c0_9] : memref<64x1xf32, #tpu.memory_space<vmem>>, vector<64x1xf32>
    %c0_10 = arith.constant 0 : index
    %c0_11 = arith.constant 0 : index
    %c0_12 = arith.constant 0 : index
    %21 = vector.load %arg1[%c0_10, %c0_11, %c0_12] : memref<2x64x256xf32, #tpu.memory_space<vmem>>, vector<1x64x256xf32>
    %22 = vector.shape_cast %21 : vector<1x64x256xf32> to vector<64x256xf32>
    %cst = arith.constant 0.000000e+00 : f32
    %23 = vector.broadcast %cst : f32 to vector<64x17xf32>
    %24 = tpu.concatenate %23, %22, %23 in 1 : vector<64x17xf32>, vector<64x256xf32>, vector<64x17xf32> -> vector<64x290xf32>
    %25 = vector.extract_strided_slice %24 {offsets = [0, 0], sizes = [64, 256], strides = [1, 1]} : vector<64x290xf32> to vector<64x256xf32>
    %c1_i32_13 = arith.constant 1 : i32
    %26 = vector.broadcast %c1_i32_13 : i32 to vector<1x256xi32>
    %27 = arith.cmpi sge, %16, %26 : vector<1x256xi32>
    %cst_14 = arith.constant 0.000000e+00 : f32
    %28 = vector.shape_cast %27 : vector<1x256xi1> to vector<1x256xi1>
    %29 = vector.broadcast %28 : vector<1x256xi1> to vector<64x256xi1>
    %30 = vector.broadcast %cst_14 : f32 to vector<64x256xf32>
    %31 = arith.select %29, %25, %30 : vector<64x256xi1>, vector<64x256xf32>
    %32 = vector.extract_strided_slice %24 {offsets = [0, 1], sizes = [64, 256], strides = [1, 1]} : vector<64x290xf32> to vector<64x256xf32>
    %33 = vector.extract_strided_slice %24 {offsets = [0, 2], sizes = [64, 256], strides = [1, 1]} : vector<64x290xf32> to vector<64x256xf32>
    %c14_i32 = arith.constant 14 : i32
    %34 = vector.broadcast %c14_i32 : i32 to vector<1x256xi32>
    %35 = arith.cmpi sle, %16, %34 : vector<1x256xi32>
    %cst_15 = arith.constant 0.000000e+00 : f32
    %36 = vector.shape_cast %35 : vector<1x256xi1> to vector<1x256xi1>
    %37 = vector.broadcast %36 : vector<1x256xi1> to vector<64x256xi1>
    %38 = vector.broadcast %cst_15 : f32 to vector<64x256xf32>
    %39 = arith.select %37, %33, %38 : vector<64x256xi1>, vector<64x256xf32>
    %40 = vector.extract_strided_slice %24 {offsets = [0, 16], sizes = [64, 256], strides = [1, 1]} : vector<64x290xf32> to vector<64x256xf32>
    %c1_i32_16 = arith.constant 1 : i32
    %41 = vector.broadcast %c1_i32_16 : i32 to vector<1x256xi32>
    %42 = arith.cmpi sge, %16, %41 : vector<1x256xi32>
    %cst_17 = arith.constant 0.000000e+00 : f32
    %43 = vector.shape_cast %42 : vector<1x256xi1> to vector<1x256xi1>
    %44 = vector.broadcast %43 : vector<1x256xi1> to vector<64x256xi1>
    %45 = vector.broadcast %cst_17 : f32 to vector<64x256xf32>
    %46 = arith.select %44, %40, %45 : vector<64x256xi1>, vector<64x256xf32>
    %47 = vector.extract_strided_slice %24 {offsets = [0, 17], sizes = [64, 256], strides = [1, 1]} : vector<64x290xf32> to vector<64x256xf32>
    %48 = vector.extract_strided_slice %24 {offsets = [0, 18], sizes = [64, 256], strides = [1, 1]} : vector<64x290xf32> to vector<64x256xf32>
    %c14_i32_18 = arith.constant 14 : i32
    %49 = vector.broadcast %c14_i32_18 : i32 to vector<1x256xi32>
    %50 = arith.cmpi sle, %16, %49 : vector<1x256xi32>
    %cst_19 = arith.constant 0.000000e+00 : f32
    %51 = vector.shape_cast %50 : vector<1x256xi1> to vector<1x256xi1>
    %52 = vector.broadcast %51 : vector<1x256xi1> to vector<64x256xi1>
    %53 = vector.broadcast %cst_19 : f32 to vector<64x256xf32>
    %54 = arith.select %52, %48, %53 : vector<64x256xi1>, vector<64x256xf32>
    %55 = vector.extract_strided_slice %24 {offsets = [0, 32], sizes = [64, 256], strides = [1, 1]} : vector<64x290xf32> to vector<64x256xf32>
    %c1_i32_20 = arith.constant 1 : i32
    %56 = vector.broadcast %c1_i32_20 : i32 to vector<1x256xi32>
    %57 = arith.cmpi sge, %16, %56 : vector<1x256xi32>
    %cst_21 = arith.constant 0.000000e+00 : f32
    %58 = vector.shape_cast %57 : vector<1x256xi1> to vector<1x256xi1>
    %59 = vector.broadcast %58 : vector<1x256xi1> to vector<64x256xi1>
    %60 = vector.broadcast %cst_21 : f32 to vector<64x256xf32>
    %61 = arith.select %59, %55, %60 : vector<64x256xi1>, vector<64x256xf32>
    %62 = vector.extract_strided_slice %24 {offsets = [0, 33], sizes = [64, 256], strides = [1, 1]} : vector<64x290xf32> to vector<64x256xf32>
    %63 = vector.extract_strided_slice %24 {offsets = [0, 34], sizes = [64, 256], strides = [1, 1]} : vector<64x290xf32> to vector<64x256xf32>
    %c14_i32_22 = arith.constant 14 : i32
    %64 = vector.broadcast %c14_i32_22 : i32 to vector<1x256xi32>
    %65 = arith.cmpi sle, %16, %64 : vector<1x256xi32>
    %cst_23 = arith.constant 0.000000e+00 : f32
    %66 = vector.shape_cast %65 : vector<1x256xi1> to vector<1x256xi1>
    %67 = vector.broadcast %66 : vector<1x256xi1> to vector<64x256xi1>
    %68 = vector.broadcast %cst_23 : f32 to vector<64x256xf32>
    %69 = arith.select %67, %63, %68 : vector<64x256xi1>, vector<64x256xf32>
    %70 = tpu.concatenate %31, %32, %39, %46, %47, %54, %61, %62, %69 in 0 : vector<64x256xf32>, vector<64x256xf32>, vector<64x256xf32>, vector<64x256xf32>, vector<64x256xf32>, vector<64x256xf32>, vector<64x256xf32>, vector<64x256xf32>, vector<64x256xf32> -> vector<576x256xf32>
    %71 = arith.truncf %70 : vector<576x256xf32> to vector<576x256xbf16>
    %cst_24 = arith.constant dense<0.000000e+00> : vector<64x256xf32>
    %72 = tpu.matmul %17, %71, %cst_24 {dimension_numbers = #tpu.dot_dimension_numbers<[1], [0], [0], [1], [0, 0, 1, 1], [], []>} : vector<64x576xbf16>, vector<576x256xbf16>, vector<64x256xf32> -> vector<64x256xf32>
    %73 = vector.broadcast %19 : vector<64x1xf32> to vector<64x256xf32>
    %74 = arith.addf %72, %73 : vector<64x256xf32>
    %cst_25 = arith.constant 0.000000e+00 : f32
    %75 = vector.broadcast %cst_25 : f32 to vector<64x256xf32>
    %76 = arith.maximumf %74, %75 : vector<64x256xf32>
    %cst_26 = arith.constant 0.000000e+00 : f32
    %77 = vector.broadcast %cst_26 : f32 to vector<64x17xf32>
    %78 = tpu.concatenate %77, %76, %77 in 1 : vector<64x17xf32>, vector<64x256xf32>, vector<64x17xf32> -> vector<64x290xf32>
    %79 = vector.extract_strided_slice %78 {offsets = [0, 0], sizes = [64, 256], strides = [1, 1]} : vector<64x290xf32> to vector<64x256xf32>
    %c1_i32_27 = arith.constant 1 : i32
    %80 = vector.broadcast %c1_i32_27 : i32 to vector<1x256xi32>
    %81 = arith.cmpi sge, %16, %80 : vector<1x256xi32>
    %cst_28 = arith.constant 0.000000e+00 : f32
    %82 = vector.shape_cast %81 : vector<1x256xi1> to vector<1x256xi1>
    %83 = vector.broadcast %82 : vector<1x256xi1> to vector<64x256xi1>
    %84 = vector.broadcast %cst_28 : f32 to vector<64x256xf32>
    %85 = arith.select %83, %79, %84 : vector<64x256xi1>, vector<64x256xf32>
    %86 = vector.extract_strided_slice %78 {offsets = [0, 1], sizes = [64, 256], strides = [1, 1]} : vector<64x290xf32> to vector<64x256xf32>
    %87 = vector.extract_strided_slice %78 {offsets = [0, 2], sizes = [64, 256], strides = [1, 1]} : vector<64x290xf32> to vector<64x256xf32>
    %c14_i32_29 = arith.constant 14 : i32
    %88 = vector.broadcast %c14_i32_29 : i32 to vector<1x256xi32>
    %89 = arith.cmpi sle, %16, %88 : vector<1x256xi32>
    %cst_30 = arith.constant 0.000000e+00 : f32
    %90 = vector.shape_cast %89 : vector<1x256xi1> to vector<1x256xi1>
    %91 = vector.broadcast %90 : vector<1x256xi1> to vector<64x256xi1>
    %92 = vector.broadcast %cst_30 : f32 to vector<64x256xf32>
    %93 = arith.select %91, %87, %92 : vector<64x256xi1>, vector<64x256xf32>
    %94 = vector.extract_strided_slice %78 {offsets = [0, 16], sizes = [64, 256], strides = [1, 1]} : vector<64x290xf32> to vector<64x256xf32>
    %c1_i32_31 = arith.constant 1 : i32
    %95 = vector.broadcast %c1_i32_31 : i32 to vector<1x256xi32>
    %96 = arith.cmpi sge, %16, %95 : vector<1x256xi32>
    %cst_32 = arith.constant 0.000000e+00 : f32
    %97 = vector.shape_cast %96 : vector<1x256xi1> to vector<1x256xi1>
    %98 = vector.broadcast %97 : vector<1x256xi1> to vector<64x256xi1>
    %99 = vector.broadcast %cst_32 : f32 to vector<64x256xf32>
    %100 = arith.select %98, %94, %99 : vector<64x256xi1>, vector<64x256xf32>
    %101 = vector.extract_strided_slice %78 {offsets = [0, 17], sizes = [64, 256], strides = [1, 1]} : vector<64x290xf32> to vector<64x256xf32>
    %102 = vector.extract_strided_slice %78 {offsets = [0, 18], sizes = [64, 256], strides = [1, 1]} : vector<64x290xf32> to vector<64x256xf32>
    %c14_i32_33 = arith.constant 14 : i32
    %103 = vector.broadcast %c14_i32_33 : i32 to vector<1x256xi32>
    %104 = arith.cmpi sle, %16, %103 : vector<1x256xi32>
    %cst_34 = arith.constant 0.000000e+00 : f32
    %105 = vector.shape_cast %104 : vector<1x256xi1> to vector<1x256xi1>
    %106 = vector.broadcast %105 : vector<1x256xi1> to vector<64x256xi1>
    %107 = vector.broadcast %cst_34 : f32 to vector<64x256xf32>
    %108 = arith.select %106, %102, %107 : vector<64x256xi1>, vector<64x256xf32>
    %109 = vector.extract_strided_slice %78 {offsets = [0, 32], sizes = [64, 256], strides = [1, 1]} : vector<64x290xf32> to vector<64x256xf32>
    %c1_i32_35 = arith.constant 1 : i32
    %110 = vector.broadcast %c1_i32_35 : i32 to vector<1x256xi32>
    %111 = arith.cmpi sge, %16, %110 : vector<1x256xi32>
    %cst_36 = arith.constant 0.000000e+00 : f32
    %112 = vector.shape_cast %111 : vector<1x256xi1> to vector<1x256xi1>
    %113 = vector.broadcast %112 : vector<1x256xi1> to vector<64x256xi1>
    %114 = vector.broadcast %cst_36 : f32 to vector<64x256xf32>
    %115 = arith.select %113, %109, %114 : vector<64x256xi1>, vector<64x256xf32>
    %116 = vector.extract_strided_slice %78 {offsets = [0, 33], sizes = [64, 256], strides = [1, 1]} : vector<64x290xf32> to vector<64x256xf32>
    %117 = vector.extract_strided_slice %78 {offsets = [0, 34], sizes = [64, 256], strides = [1, 1]} : vector<64x290xf32> to vector<64x256xf32>
    %c14_i32_37 = arith.constant 14 : i32
    %118 = vector.broadcast %c14_i32_37 : i32 to vector<1x256xi32>
    %119 = arith.cmpi sle, %16, %118 : vector<1x256xi32>
    %cst_38 = arith.constant 0.000000e+00 : f32
    %120 = vector.shape_cast %119 : vector<1x256xi1> to vector<1x256xi1>
    %121 = vector.broadcast %120 : vector<1x256xi1> to vector<64x256xi1>
    %122 = vector.broadcast %cst_38 : f32 to vector<64x256xf32>
    %123 = arith.select %121, %117, %122 : vector<64x256xi1>, vector<64x256xf32>
    %124 = tpu.concatenate %85, %86, %93, %100, %101, %108, %115, %116, %123 in 0 : vector<64x256xf32>, vector<64x256xf32>, vector<64x256xf32>, vector<64x256xf32>, vector<64x256xf32>, vector<64x256xf32>, vector<64x256xf32>, vector<64x256xf32>, vector<64x256xf32> -> vector<576x256xf32>
    %125 = arith.truncf %124 : vector<576x256xf32> to vector<576x256xbf16>
    %cst_39 = arith.constant dense<0.000000e+00> : vector<64x256xf32>
    %126 = tpu.matmul %18, %125, %cst_39 {dimension_numbers = #tpu.dot_dimension_numbers<[1], [0], [0], [1], [0, 0, 1, 1], [], []>} : vector<64x576xbf16>, vector<576x256xbf16>, vector<64x256xf32> -> vector<64x256xf32>
    %127 = vector.broadcast %20 : vector<64x1xf32> to vector<64x256xf32>
    %128 = arith.addf %126, %127 : vector<64x256xf32>
    %129 = arith.addf %128, %22 : vector<64x256xf32>
    %c0_40 = arith.constant 0 : index
    %c0_41 = arith.constant 0 : index
    %c0_42 = arith.constant 0 : index
    %130 = vector.load %arg6[%c0_40, %c0_41, %c0_42] : memref<2x64x256xf32, #tpu.memory_space<vmem>>, vector<1x64x256xf32>
    %131 = vector.shape_cast %130 : vector<1x64x256xf32> to vector<64x256xf32>
    %132 = vector.shape_cast %129 : vector<64x256xf32> to vector<1x64x256xf32>
    tpu.vector_store %arg6[%c0_40, %c0_41, %c0_42], %132 {strides = array<i32>} : memref<2x64x256xf32, #tpu.memory_space<vmem>>, vector<1x64x256xf32>,
    %c1 = arith.constant 1 : index
    %c0_43 = arith.constant 0 : index
    %c0_44 = arith.constant 0 : index
    %133 = vector.load %arg1[%c1, %c0_43, %c0_44] : memref<2x64x256xf32, #tpu.memory_space<vmem>>, vector<1x64x256xf32>
    %134 = vector.shape_cast %133 : vector<1x64x256xf32> to vector<64x256xf32>
    %cst_45 = arith.constant 0.000000e+00 : f32
    %135 = vector.broadcast %cst_45 : f32 to vector<64x17xf32>
    %136 = tpu.concatenate %135, %134, %135 in 1 : vector<64x17xf32>, vector<64x256xf32>, vector<64x17xf32> -> vector<64x290xf32>
    %137 = vector.extract_strided_slice %136 {offsets = [0, 0], sizes = [64, 256], strides = [1, 1]} : vector<64x290xf32> to vector<64x256xf32>
    %c1_i32_46 = arith.constant 1 : i32
    %138 = vector.broadcast %c1_i32_46 : i32 to vector<1x256xi32>
    %139 = arith.cmpi sge, %16, %138 : vector<1x256xi32>
    %cst_47 = arith.constant 0.000000e+00 : f32
    %140 = vector.shape_cast %139 : vector<1x256xi1> to vector<1x256xi1>
    %141 = vector.broadcast %140 : vector<1x256xi1> to vector<64x256xi1>
    %142 = vector.broadcast %cst_47 : f32 to vector<64x256xf32>
    %143 = arith.select %141, %137, %142 : vector<64x256xi1>, vector<64x256xf32>
    %144 = vector.extract_strided_slice %136 {offsets = [0, 1], sizes = [64, 256], strides = [1, 1]} : vector<64x290xf32> to vector<64x256xf32>
    %145 = vector.extract_strided_slice %136 {offsets = [0, 2], sizes = [64, 256], strides = [1, 1]} : vector<64x290xf32> to vector<64x256xf32>
    %c14_i32_48 = arith.constant 14 : i32
    %146 = vector.broadcast %c14_i32_48 : i32 to vector<1x256xi32>
    %147 = arith.cmpi sle, %16, %146 : vector<1x256xi32>
    %cst_49 = arith.constant 0.000000e+00 : f32
    %148 = vector.shape_cast %147 : vector<1x256xi1> to vector<1x256xi1>
    %149 = vector.broadcast %148 : vector<1x256xi1> to vector<64x256xi1>
    %150 = vector.broadcast %cst_49 : f32 to vector<64x256xf32>
    %151 = arith.select %149, %145, %150 : vector<64x256xi1>, vector<64x256xf32>
    %152 = vector.extract_strided_slice %136 {offsets = [0, 16], sizes = [64, 256], strides = [1, 1]} : vector<64x290xf32> to vector<64x256xf32>
    %c1_i32_50 = arith.constant 1 : i32
    %153 = vector.broadcast %c1_i32_50 : i32 to vector<1x256xi32>
    %154 = arith.cmpi sge, %16, %153 : vector<1x256xi32>
    %cst_51 = arith.constant 0.000000e+00 : f32
    %155 = vector.shape_cast %154 : vector<1x256xi1> to vector<1x256xi1>
    %156 = vector.broadcast %155 : vector<1x256xi1> to vector<64x256xi1>
    %157 = vector.broadcast %cst_51 : f32 to vector<64x256xf32>
    %158 = arith.select %156, %152, %157 : vector<64x256xi1>, vector<64x256xf32>
    %159 = vector.extract_strided_slice %136 {offsets = [0, 17], sizes = [64, 256], strides = [1, 1]} : vector<64x290xf32> to vector<64x256xf32>
    %160 = vector.extract_strided_slice %136 {offsets = [0, 18], sizes = [64, 256], strides = [1, 1]} : vector<64x290xf32> to vector<64x256xf32>
    %c14_i32_52 = arith.constant 14 : i32
    %161 = vector.broadcast %c14_i32_52 : i32 to vector<1x256xi32>
    %162 = arith.cmpi sle, %16, %161 : vector<1x256xi32>
    %cst_53 = arith.constant 0.000000e+00 : f32
    %163 = vector.shape_cast %162 : vector<1x256xi1> to vector<1x256xi1>
    %164 = vector.broadcast %163 : vector<1x256xi1> to vector<64x256xi1>
    %165 = vector.broadcast %cst_53 : f32 to vector<64x256xf32>
    %166 = arith.select %164, %160, %165 : vector<64x256xi1>, vector<64x256xf32>
    %167 = vector.extract_strided_slice %136 {offsets = [0, 32], sizes = [64, 256], strides = [1, 1]} : vector<64x290xf32> to vector<64x256xf32>
    %c1_i32_54 = arith.constant 1 : i32
    %168 = vector.broadcast %c1_i32_54 : i32 to vector<1x256xi32>
    %169 = arith.cmpi sge, %16, %168 : vector<1x256xi32>
    %cst_55 = arith.constant 0.000000e+00 : f32
    %170 = vector.shape_cast %169 : vector<1x256xi1> to vector<1x256xi1>
    %171 = vector.broadcast %170 : vector<1x256xi1> to vector<64x256xi1>
    %172 = vector.broadcast %cst_55 : f32 to vector<64x256xf32>
    %173 = arith.select %171, %167, %172 : vector<64x256xi1>, vector<64x256xf32>
    %174 = vector.extract_strided_slice %136 {offsets = [0, 33], sizes = [64, 256], strides = [1, 1]} : vector<64x290xf32> to vector<64x256xf32>
    %175 = vector.extract_strided_slice %136 {offsets = [0, 34], sizes = [64, 256], strides = [1, 1]} : vector<64x290xf32> to vector<64x256xf32>
    %c14_i32_56 = arith.constant 14 : i32
    %176 = vector.broadcast %c14_i32_56 : i32 to vector<1x256xi32>
    %177 = arith.cmpi sle, %16, %176 : vector<1x256xi32>
    %cst_57 = arith.constant 0.000000e+00 : f32
    %178 = vector.shape_cast %177 : vector<1x256xi1> to vector<1x256xi1>
    %179 = vector.broadcast %178 : vector<1x256xi1> to vector<64x256xi1>
    %180 = vector.broadcast %cst_57 : f32 to vector<64x256xf32>
    %181 = arith.select %179, %175, %180 : vector<64x256xi1>, vector<64x256xf32>
    %182 = tpu.concatenate %143, %144, %151, %158, %159, %166, %173, %174, %181 in 0 : vector<64x256xf32>, vector<64x256xf32>, vector<64x256xf32>, vector<64x256xf32>, vector<64x256xf32>, vector<64x256xf32>, vector<64x256xf32>, vector<64x256xf32>, vector<64x256xf32> -> vector<576x256xf32>
    %183 = arith.truncf %182 : vector<576x256xf32> to vector<576x256xbf16>
    %cst_58 = arith.constant dense<0.000000e+00> : vector<64x256xf32>
    %184 = tpu.matmul %17, %183, %cst_58 {dimension_numbers = #tpu.dot_dimension_numbers<[1], [0], [0], [1], [0, 0, 1, 1], [], []>} : vector<64x576xbf16>, vector<576x256xbf16>, vector<64x256xf32> -> vector<64x256xf32>
    %185 = vector.broadcast %19 : vector<64x1xf32> to vector<64x256xf32>
    %186 = arith.addf %184, %185 : vector<64x256xf32>
    %cst_59 = arith.constant 0.000000e+00 : f32
    %187 = vector.broadcast %cst_59 : f32 to vector<64x256xf32>
    %188 = arith.maximumf %186, %187 : vector<64x256xf32>
    %cst_60 = arith.constant 0.000000e+00 : f32
    %189 = vector.broadcast %cst_60 : f32 to vector<64x17xf32>
    %190 = tpu.concatenate %189, %188, %189 in 1 : vector<64x17xf32>, vector<64x256xf32>, vector<64x17xf32> -> vector<64x290xf32>
    %191 = vector.extract_strided_slice %190 {offsets = [0, 0], sizes = [64, 256], strides = [1, 1]} : vector<64x290xf32> to vector<64x256xf32>
    %c1_i32_61 = arith.constant 1 : i32
    %192 = vector.broadcast %c1_i32_61 : i32 to vector<1x256xi32>
    %193 = arith.cmpi sge, %16, %192 : vector<1x256xi32>
    %cst_62 = arith.constant 0.000000e+00 : f32
    %194 = vector.shape_cast %193 : vector<1x256xi1> to vector<1x256xi1>
    %195 = vector.broadcast %194 : vector<1x256xi1> to vector<64x256xi1>
    %196 = vector.broadcast %cst_62 : f32 to vector<64x256xf32>
    %197 = arith.select %195, %191, %196 : vector<64x256xi1>, vector<64x256xf32>
    %198 = vector.extract_strided_slice %190 {offsets = [0, 1], sizes = [64, 256], strides = [1, 1]} : vector<64x290xf32> to vector<64x256xf32>
    %199 = vector.extract_strided_slice %190 {offsets = [0, 2], sizes = [64, 256], strides = [1, 1]} : vector<64x290xf32> to vector<64x256xf32>
    %c14_i32_63 = arith.constant 14 : i32
    %200 = vector.broadcast %c14_i32_63 : i32 to vector<1x256xi32>
    %201 = arith.cmpi sle, %16, %200 : vector<1x256xi32>
    %cst_64 = arith.constant 0.000000e+00 : f32
    %202 = vector.shape_cast %201 : vector<1x256xi1> to vector<1x256xi1>
    %203 = vector.broadcast %202 : vector<1x256xi1> to vector<64x256xi1>
    %204 = vector.broadcast %cst_64 : f32 to vector<64x256xf32>
    %205 = arith.select %203, %199, %204 : vector<64x256xi1>, vector<64x256xf32>
    %206 = vector.extract_strided_slice %190 {offsets = [0, 16], sizes = [64, 256], strides = [1, 1]} : vector<64x290xf32> to vector<64x256xf32>
    %c1_i32_65 = arith.constant 1 : i32
    %207 = vector.broadcast %c1_i32_65 : i32 to vector<1x256xi32>
    %208 = arith.cmpi sge, %16, %207 : vector<1x256xi32>
    %cst_66 = arith.constant 0.000000e+00 : f32
    %209 = vector.shape_cast %208 : vector<1x256xi1> to vector<1x256xi1>
    %210 = vector.broadcast %209 : vector<1x256xi1> to vector<64x256xi1>
    %211 = vector.broadcast %cst_66 : f32 to vector<64x256xf32>
    %212 = arith.select %210, %206, %211 : vector<64x256xi1>, vector<64x256xf32>
    %213 = vector.extract_strided_slice %190 {offsets = [0, 17], sizes = [64, 256], strides = [1, 1]} : vector<64x290xf32> to vector<64x256xf32>
    %214 = vector.extract_strided_slice %190 {offsets = [0, 18], sizes = [64, 256], strides = [1, 1]} : vector<64x290xf32> to vector<64x256xf32>
    %c14_i32_67 = arith.constant 14 : i32
    %215 = vector.broadcast %c14_i32_67 : i32 to vector<1x256xi32>
    %216 = arith.cmpi sle, %16, %215 : vector<1x256xi32>
    %cst_68 = arith.constant 0.000000e+00 : f32
    %217 = vector.shape_cast %216 : vector<1x256xi1> to vector<1x256xi1>
    %218 = vector.broadcast %217 : vector<1x256xi1> to vector<64x256xi1>
    %219 = vector.broadcast %cst_68 : f32 to vector<64x256xf32>
    %220 = arith.select %218, %214, %219 : vector<64x256xi1>, vector<64x256xf32>
    %221 = vector.extract_strided_slice %190 {offsets = [0, 32], sizes = [64, 256], strides = [1, 1]} : vector<64x290xf32> to vector<64x256xf32>
    %c1_i32_69 = arith.constant 1 : i32
    %222 = vector.broadcast %c1_i32_69 : i32 to vector<1x256xi32>
    %223 = arith.cmpi sge, %16, %222 : vector<1x256xi32>
    %cst_70 = arith.constant 0.000000e+00 : f32
    %224 = vector.shape_cast %223 : vector<1x256xi1> to vector<1x256xi1>
    %225 = vector.broadcast %224 : vector<1x256xi1> to vector<64x256xi1>
    %226 = vector.broadcast %cst_70 : f32 to vector<64x256xf32>
    %227 = arith.select %225, %221, %226 : vector<64x256xi1>, vector<64x256xf32>
    %228 = vector.extract_strided_slice %190 {offsets = [0, 33], sizes = [64, 256], strides = [1, 1]} : vector<64x290xf32> to vector<64x256xf32>
    %229 = vector.extract_strided_slice %190 {offsets = [0, 34], sizes = [64, 256], strides = [1, 1]} : vector<64x290xf32> to vector<64x256xf32>
    %c14_i32_71 = arith.constant 14 : i32
    %230 = vector.broadcast %c14_i32_71 : i32 to vector<1x256xi32>
    %231 = arith.cmpi sle, %16, %230 : vector<1x256xi32>
    %cst_72 = arith.constant 0.000000e+00 : f32
    %232 = vector.shape_cast %231 : vector<1x256xi1> to vector<1x256xi1>
    %233 = vector.broadcast %232 : vector<1x256xi1> to vector<64x256xi1>
    %234 = vector.broadcast %cst_72 : f32 to vector<64x256xf32>
    %235 = arith.select %233, %229, %234 : vector<64x256xi1>, vector<64x256xf32>
    %236 = tpu.concatenate %197, %198, %205, %212, %213, %220, %227, %228, %235 in 0 : vector<64x256xf32>, vector<64x256xf32>, vector<64x256xf32>, vector<64x256xf32>, vector<64x256xf32>, vector<64x256xf32>, vector<64x256xf32>, vector<64x256xf32>, vector<64x256xf32> -> vector<576x256xf32>
    %237 = arith.truncf %236 : vector<576x256xf32> to vector<576x256xbf16>
    %cst_73 = arith.constant dense<0.000000e+00> : vector<64x256xf32>
    %238 = tpu.matmul %18, %237, %cst_73 {dimension_numbers = #tpu.dot_dimension_numbers<[1], [0], [0], [1], [0, 0, 1, 1], [], []>} : vector<64x576xbf16>, vector<576x256xbf16>, vector<64x256xf32> -> vector<64x256xf32>
    %239 = vector.broadcast %20 : vector<64x1xf32> to vector<64x256xf32>
    %240 = arith.addf %238, %239 : vector<64x256xf32>
    %241 = arith.addf %240, %134 : vector<64x256xf32>
    %c1_74 = arith.constant 1 : index
    %c0_75 = arith.constant 0 : index
    %c0_76 = arith.constant 0 : index
    %242 = vector.load %arg6[%c1_74, %c0_75, %c0_76] : memref<2x64x256xf32, #tpu.memory_space<vmem>>, vector<1x64x256xf32>
    %243 = vector.shape_cast %242 : vector<1x64x256xf32> to vector<64x256xf32>
    %244 = vector.shape_cast %241 : vector<64x256xf32> to vector<1x64x256xf32>
    tpu.vector_store %arg6[%c1_74, %c0_75, %c0_76], %244 {strides = array<i32>} : memref<2x64x256xf32, #tpu.memory_space<vmem>>, vector<1x64x256xf32>,
    return
  }
  func.func @transform_0(%arg0: i32) -> (i32, i32, i32) {
    %c0_i32 = arith.constant 0 : i32
    %c0_i32_0 = arith.constant 0 : i32
    %c0_i32_1 = arith.constant 0 : i32
    return %arg0, %c0_i32, %c0_i32_0 : i32, i32, i32
  }
  func.func @transform_1(%arg0: i32) -> (i32, i32) {
    %c0_i32 = arith.constant 0 : i32
    %c0_i32_0 = arith.constant 0 : i32
    %c0_i32_1 = arith.constant 0 : i32
    return %c0_i32, %c0_i32_0 : i32, i32
  }
  func.func @transform_2(%arg0: i32) -> (i32, i32) {
    %c0_i32 = arith.constant 0 : i32
    %c0_i32_0 = arith.constant 0 : i32
    %c0_i32_1 = arith.constant 0 : i32
    return %c0_i32, %c0_i32_0 : i32, i32
  }
  func.func @transform_3(%arg0: i32) -> (i32, i32) {
    %c0_i32 = arith.constant 0 : i32
    %c0_i32_0 = arith.constant 0 : i32
    %c0_i32_1 = arith.constant 0 : i32
    return %c0_i32, %c0_i32_0 : i32, i32
  }
  func.func @transform_4(%arg0: i32) -> (i32, i32) {
    %c0_i32 = arith.constant 0 : i32
    %c0_i32_0 = arith.constant 0 : i32
    %c0_i32_1 = arith.constant 0 : i32
    return %c0_i32, %c0_i32_0 : i32, i32
  }
  func.func @transform_5(%arg0: i32) -> (i32, i32, i32) {
    %c0_i32 = arith.constant 0 : i32
    %c0_i32_0 = arith.constant 0 : i32
    %c0_i32_1 = arith.constant 0 : i32
    return %arg0, %c0_i32, %c0_i32_0 : i32, i32, i32
  }
}

</mosaic_0001>

<llo_original>
// kernel: tpu_custom_call.1
$region0: #{tpu_custom_call.1}
  #allocation0 [shape = 'u32[]', space=smem, size = 0x4, offset = 0x4, fixed_abs, tag = 'smem constant byte address 0x4 - core index']
  #allocation1 [shape = 'u32[144,128]{1,0:T(1,128)}', space=vmem, size = 0x12000, scoped, tag = 'internal scratch']
  %s0 = inlined_call_operand.hbm [shape: f32[2,64,256], index: 0, kind: input, shape index: {}]
  %s1 = inlined_call_operand.hbm [shape: bf16[64,576], index: 1, kind: input, shape index: {}]
  %s2 = inlined_call_operand.hbm [shape: bf16[64,576], index: 2, kind: input, shape index: {}]
  %s3 = inlined_call_operand.vmem [shape: f32[64,1], index: 3, kind: input, shape index: {}]
  %s4 = inlined_call_operand.vmem [shape: f32[64,1], index: 4, kind: input, shape index: {}]
  %s5 = inlined_call_operand.hbm [shape: f32[2,64,256], index: 5, kind: output, shape index: {}]
  %s6 = sld [smem:[#allocation0]]
  $region42: #{tpu_custom_call.1} parent=0
    _
  %s8 = ssub.s32 1, %s6
  %s9 = scalar_select 0, %s8, %s6
  $region1: #{tpu_custom_call.1} parent=0
    #allocation2 [shape = 'u8[131072]{0}', space=vmem, size = 0x20000, scoped, tag = 'input window, operand 0, single buffered']
    #allocation3 [shape = 's32[1]{0}', space=sflag, size = 0x4, scoped, tag = 'scoped memory for tpu_custom_call.1']
    #allocation4 [shape = 's32[1]{0}', space=sflag, size = 0x4, scoped, tag = 'scoped memory for tpu_custom_call.1']
    #allocation5 [shape = 'u8[81920]{0}', space=vmem, size = 0x14000, scoped, tag = 'input window, operand 1, single buffered']
    #allocation6 [shape = 's32[1]{0}', space=sflag, size = 0x4, scoped, tag = 'scoped memory for tpu_custom_call.1']
    #allocation7 [shape = 'u8[81920]{0}', space=vmem, size = 0x14000, scoped, tag = 'input window, operand 2, single buffered']
    #allocation8 [shape = 'u8[131072]{0}', space=vmem, size = 0x20000, scoped, tag = 'output window, operand 0, single buffered']
    %10 = vsyncpa [#allocation3], 0
    %11 = vsyncpa [#allocation6], 0
    %12 = vsyncpa [#allocation4], 0
    // Predicated region
    $region2: #{tpu_custom_call.1} parent=1 // pred_check
      _
    $region3: #{tpu_custom_call.1} parent=1 // pred_check_branch
      %14 = sbr.rel (0) target = $region5
    $region4: #{tpu_custom_call.1} parent=1 // pred_region
      %s16 = ssub.s32 4096, 4096
      %17 = vsyncadd [#allocation3], %s16
      %s18 = sshll.u32 [#allocation2], 4
      %s19 = int_to_ptr.vmem [resolvable:$true] %s18
      %24 = dma.hbm_to_vmem [thread:$0]  %s0, 4096, %s19, [#allocation3], 256, 256, 16
    $region5: #{tpu_custom_call.1} parent=1 // pred_fallthru
      _
    // Predicated region
    $region6: #{tpu_custom_call.1} parent=1 // pred_check
      _
    $region7: #{tpu_custom_call.1} parent=1 // pred_check_branch
      %26 = sbr.rel (0) target = $region9
    $region8: #{tpu_custom_call.1} parent=1 // pred_region
      %s28 = ssub.s32 2560, 2560
      %29 = vsyncadd [#allocation6], %s28
      %s30 = sshll.u32 [#allocation5], 4
      %s31 = int_to_ptr.vmem [resolvable:$true] %s30
      %36 = dma.hbm_to_vmem [thread:$0]  %s1, 2560, %s31, [#allocation6], 320, 320, 20
    $region9: #{tpu_custom_call.1} parent=1 // pred_fallthru
      _
    // Predicated region
    $region10: #{tpu_custom_call.1} parent=1 // pred_check
      _
    $region11: #{tpu_custom_call.1} parent=1 // pred_check_branch
      %38 = sbr.rel (0) target = $region13
    $region12: #{tpu_custom_call.1} parent=1 // pred_region
      %s40 = ssub.s32 2560, 2560
      %41 = vsyncadd [#allocation6], %s40
      %s42 = sshll.u32 [#allocation7], 4
      %s43 = int_to_ptr.vmem [resolvable:$true] %s42
      %48 = dma.hbm_to_vmem [thread:$0]  %s2, 2560, %s43, [#allocation6], 320, 320, 20
    $region13: #{tpu_custom_call.1} parent=1 // pred_fallthru
      _
    // Predicated region
    $region14: #{tpu_custom_call.1} parent=1 // pred_check
      _
    $region15: #{tpu_custom_call.1} parent=1 // pred_check_branch
      %50 = sbr.rel (0) target = $region17
    $region16: #{tpu_custom_call.1} parent=1 // pred_region
      _
    $region17: #{tpu_custom_call.1} parent=1 // pred_fallthru
      _
    // Predicated region
    $region18: #{tpu_custom_call.1} parent=1 // pred_check
      _
    $region19: #{tpu_custom_call.1} parent=1 // pred_check_branch
      %52 = sbr.rel (0) target = $region21
    $region20: #{tpu_custom_call.1} parent=1 // pred_region
      _
    $region21: #{tpu_custom_call.1} parent=1 // pred_fallthru
      _
    // Predicated region
    $region22: #{tpu_custom_call.1} parent=1 // pred_check
      _
    $region23: #{tpu_custom_call.1} parent=1 // pred_check_branch
      %54 = sbr.rel (0) target = $region25
    $region24: #{tpu_custom_call.1} parent=1 // pred_region
      %55 = dma.done [#allocation3], 4096
    $region25: #{tpu_custom_call.1} parent=1 // pred_fallthru
      _
    // Predicated region
    $region26: #{tpu_custom_call.1} parent=1 // pred_check
      _
    $region27: #{tpu_custom_call.1} parent=1 // pred_check_branch
      %57 = sbr.rel (0) target = $region29
    $region28: #{tpu_custom_call.1} parent=1 // pred_region
      %58 = dma.done [#allocation6], 2560
    $region29: #{tpu_custom_call.1} parent=1 // pred_fallthru
      _
    // Predicated region
    $region30: #{tpu_custom_call.1} parent=1 // pred_check
      _
    $region31: #{tpu_custom_call.1} parent=1 // pred_check_branch
      %60 = sbr.rel (0) target = $region33
    $region32: #{tpu_custom_call.1} parent=1 // pred_region
      %61 = dma.done [#allocation6], 2560
    $region33: #{tpu_custom_call.1} parent=1 // pred_fallthru
      _
    %v63 = vlaneseq
    %v64 = vand.u32 %v63, 127
    %v65 = vadd.s32 %v64, 128
    %vm66 = vcmp.lt.s32.totalorder %v64, 0
    %v67 = vsub.s32 0, %v64
    %v68 = vsel %vm66, %v67, %v64
    %v69 = vshrl.u32 %v68, 4
    %v70 = vand.u32 %v68, 15
    %v71 = vsub.s32 0, %v70
    %v72 = vsel %vm66, %v71, %v70
    %vm73 = vcmp.lt.s32.totalorder %v65, 0
    %v74 = vsub.s32 0, %v65
    %v75 = vsel %vm73, %v74, %v65
    %v76 = vshrl.u32 %v75, 4
    %v77 = vand.u32 %v75, 15
    %v78 = vsub.s32 0, %v77
    %v79 = vsel %vm73, %v78, %v77
    %vm80 = vcmp.ne.s32.totalorder %v72, 0
    %vm81 = vcmp.ne.s32.totalorder %v79, 0
    %vm82 = vcmp.lt.s32.totalorder %v72, 0
    %vm83 = vcmp.lt.s32.totalorder %v79, 0
    %vm84 = vmand %vm82, %vm80
    %vm85 = vmand %vm83, %vm81
    %v86 = vadd.s32 %v72, 16
    %v87 = vadd.s32 %v79, 16
    %v88 = vsel %vm84, %v86, %v72
    %v89 = vsel %vm85, %v87, %v79
    %v90 = vld [vmem:[#allocation5] sm:$0xff]
    %v91 = vld [vmem:[#allocation5 + $0x8] sm:$0xff]
    %v92 = vld [vmem:[#allocation5 + $0x10] sm:$0xf]
    %v93 = vld [vmem:[#allocation5 + $0x14] sm:$0xff]
    %v94 = vld [vmem:[#allocation5 + $0x1c] sm:$0xff]
    %v95 = vld [vmem:[#allocation5 + $0x24] sm:$0xf]
    %v96 = vld [vmem:[#allocation5 + $0x28] sm:$0xff]
    %v97 = vld [vmem:[#allocation5 + $0x30] sm:$0xff]
    %v98 = vld [vmem:[#allocation5 + $0x38] sm:$0xf]
    %v99 = vld [vmem:[#allocation5 + $0x3c] sm:$0xff]
    %v100 = vld [vmem:[#allocation5 + $0x44] sm:$0xff]
    %v101 = vld [vmem:[#allocation5 + $0x4c] sm:$0xf]
    %v102 = vld [vmem:[#allocation5 + $0x50] sm:$0xff]
    %v103 = vld [vmem:[#allocation5 + $0x58] sm:$0xff]
    %v104 = vld [vmem:[#allocation5 + $0x60] sm:$0xf]
    %v105 = vld [vmem:[#allocation5 + $0x64] sm:$0xff]
    %v106 = vld [vmem:[#allocation5 + $0x6c] sm:$0xff]
    %v107 = vld [vmem:[#allocation5 + $0x74] sm:$0xf]
    %v108 = vld [vmem:[#allocation5 + $0x78] sm:$0xff]
    %v109 = vld [vmem:[#allocation5 + $0x80] sm:$0xff]
    %v110 = vld [vmem:[#allocation5 + $0x88] sm:$0xf]
    %v111 = vld [vmem:[#allocation5 + $0x8c] sm:$0xff]
    %v112 = vld [vmem:[#allocation5 + $0x94] sm:$0xff]
    %v113 = vld [vmem:[#allocation5 + $0x9c] sm:$0xf]
    %v114 = vld [vmem:[#allocation7] sm:$0xff]
    %v115 = vld [vmem:[#allocation7 + $0x8] sm:$0xff]
    %v116 = vld [vmem:[#allocation7 + $0x10] sm:$0xf]
    %v117 = vld [vmem:[#allocation7 + $0x14] sm:$0xff]
    %v118 = vld [vmem:[#allocation7 + $0x1c] sm:$0xff]
    %v119 = vld [vmem:[#allocation7 + $0x24] sm:$0xf]
    %v120 = vld [vmem:[#allocation7 + $0x28] sm:$0xff]
    %v121 = vld [vmem:[#allocation7 + $0x30] sm:$0xff]
    %v122 = vld [vmem:[#allocation7 + $0x38] sm:$0xf]
    %v123 = vld [vmem:[#allocation7 + $0x3c] sm:$0xff]
    %v124 = vld [vmem:[#allocation7 + $0x44] sm:$0xff]
    %v125 = vld [vmem:[#allocation7 + $0x4c] sm:$0xf]
    %v126 = vld [vmem:[#allocation7 + $0x50] sm:$0xff]
    %v127 = vld [vmem:[#allocation7 + $0x58] sm:$0xff]
    %v128 = vld [vmem:[#allocation7 + $0x60] sm:$0xf]
    %v129 = vld [vmem:[#allocation7 + $0x64] sm:$0xff]
    %v130 = vld [vmem:[#allocation7 + $0x6c] sm:$0xff]
    %v131 = vld [vmem:[#allocation7 + $0x74] sm:$0xf]
    %v132 = vld [vmem:[#allocation7 + $0x78] sm:$0xff]
    %v133 = vld [vmem:[#allocation7 + $0x80] sm:$0xff]
    %v134 = vld [vmem:[#allocation7 + $0x88] sm:$0xf]
    %v135 = vld [vmem:[#allocation7 + $0x8c] sm:$0xff]
    %v136 = vld [vmem:[#allocation7 + $0x94] sm:$0xff]
    %v137 = vld [vmem:[#allocation7 + $0x9c] sm:$0xf]
    %v138 = vld [vmem:[%s3] sm:$0xff]
    %v139 = vld [vmem:[%s3 + $0x8] sm:$0xff]
    %v140 = vld [vmem:[%s3 + $0x10] sm:$0xff]
    %v141 = vld [vmem:[%s3 + $0x18] sm:$0xff]
    %v142 = vld [vmem:[%s3 + $0x20] sm:$0xff]
    %v143 = vld [vmem:[%s3 + $0x28] sm:$0xff]
    %v144 = vld [vmem:[%s3 + $0x30] sm:$0xff]
    %v145 = vld [vmem:[%s3 + $0x38] sm:$0xff]
    %v146 = vld [vmem:[%s4] sm:$0xff]
    %v147 = vld [vmem:[%s4 + $0x8] sm:$0xff]
    %v148 = vld [vmem:[%s4 + $0x10] sm:$0xff]
    %v149 = vld [vmem:[%s4 + $0x18] sm:$0xff]
    %v150 = vld [vmem:[%s4 + $0x20] sm:$0xff]
    %v151 = vld [vmem:[%s4 + $0x28] sm:$0xff]
    %v152 = vld [vmem:[%s4 + $0x30] sm:$0xff]
    %v153 = vld [vmem:[%s4 + $0x38] sm:$0xff]
    %v154 = vld [vmem:[#allocation2] sm:$0xff]
    %v155 = vld [vmem:[#allocation2 + $0x8] sm:$0xff]
    %v156 = vld [vmem:[#allocation2 + $0x10] sm:$0xff]
    %v157 = vld [vmem:[#allocation2 + $0x18] sm:$0xff]
    %v158 = vld [vmem:[#allocation2 + $0x20] sm:$0xff]
    %v159 = vld [vmem:[#allocation2 + $0x28] sm:$0xff]
    %v160 = vld [vmem:[#allocation2 + $0x30] sm:$0xff]
    %v161 = vld [vmem:[#allocation2 + $0x38] sm:$0xff]
    %v162 = vld [vmem:[#allocation2 + $0x40] sm:$0xff]
    %v163 = vld [vmem:[#allocation2 + $0x48] sm:$0xff]
    %v164 = vld [vmem:[#allocation2 + $0x50] sm:$0xff]
    %v165 = vld [vmem:[#allocation2 + $0x58] sm:$0xff]
    %v166 = vld [vmem:[#allocation2 + $0x60] sm:$0xff]
    %v167 = vld [vmem:[#allocation2 + $0x68] sm:$0xff]
    %v168 = vld [vmem:[#allocation2 + $0x70] sm:$0xff]
    %v169 = vld [vmem:[#allocation2 + $0x78] sm:$0xff]
    %186 = vrot.lane.b32.xlu0 %v154, 17
    %v187 = vpop.permute.xlu0 %186
    %188 = vrot.lane.b32.xlu0 %v155, 17
    %v189 = vpop.permute.xlu0 %188
    %190 = vrot.lane.b32.xlu0 %v156, 17
    %v191 = vpop.permute.xlu0 %190
    %192 = vrot.lane.b32.xlu0 %v157, 17
    %v193 = vpop.permute.xlu0 %192
    %194 = vrot.lane.b32.xlu0 %v158, 17
    %v195 = vpop.permute.xlu0 %194
    %196 = vrot.lane.b32.xlu0 %v159, 17
    %v197 = vpop.permute.xlu0 %196
    %198 = vrot.lane.b32.xlu0 %v160, 17
    %v199 = vpop.permute.xlu0 %198
    %200 = vrot.lane.b32.xlu0 %v161, 17
    %v201 = vpop.permute.xlu0 %200
    %202 = vrot.lane.b32.xlu0 %v162, 17
    %v203 = vpop.permute.xlu0 %202
    %204 = vrot.lane.b32.xlu0 %v163, 17
    %v205 = vpop.permute.xlu0 %204
    %206 = vrot.lane.b32.xlu0 %v164, 17
    %v207 = vpop.permute.xlu0 %206
    %208 = vrot.lane.b32.xlu0 %v165, 17
    %v209 = vpop.permute.xlu0 %208
    %210 = vrot.lane.b32.xlu0 %v166, 17
    %v211 = vpop.permute.xlu0 %210
    %212 = vrot.lane.b32.xlu0 %v167, 17
    %v213 = vpop.permute.xlu0 %212
    %214 = vrot.lane.b32.xlu0 %v168, 17
    %v215 = vpop.permute.xlu0 %214
    %216 = vrot.lane.b32.xlu0 %v169, 17
    %v217 = vpop.permute.xlu0 %216
    %vm218 = vcmask 138240
    %v219 = vsel %vm218, %v187, %v189
    %v220 = vsel %vm218, %v191, %v193
    %v221 = vsel %vm218, %v195, %v197
    %v222 = vsel %vm218, %v199, %v201
    %v223 = vsel %vm218, %v203, %v205
    %v224 = vsel %vm218, %v207, %v209
    %v225 = vsel %vm218, %v211, %v213
    %v226 = vsel %vm218, %v215, %v217
    %v251 = vsel %vm218, 0.0, %v187
    %v252 = vsel %vm218, 0.0, %v191
    %v253 = vsel %vm218, 0.0, %v195
    %v254 = vsel %vm218, 0.0, %v199
    %v255 = vsel %vm218, 0.0, %v203
    %v256 = vsel %vm218, 0.0, %v207
    %v257 = vsel %vm218, 0.0, %v211
    %v258 = vsel %vm218, 0.0, %v215
    %v259 = vsel %vm218, %v189, 0.0
    %v260 = vsel %vm218, %v193, 0.0
    %v261 = vsel %vm218, %v197, 0.0
    %v262 = vsel %vm218, %v201, 0.0
    %v263 = vsel %vm218, %v205, 0.0
    %v264 = vsel %vm218, %v209, 0.0
    %v265 = vsel %vm218, %v213, 0.0
    %v266 = vsel %vm218, %v217, 0.0
    %vm267 = vcmp.ge.s32.totalorder %v88, 1
    %vm268 = vcmp.ge.s32.totalorder %v89, 1
    %v269 = vsel %vm267, 1, 0
    %v270 = vsel %vm268, 1, 0
    %vm271 = vcmp.eq.s32.totalorder %v269, 1
    %vm272 = vcmp.eq.s32.totalorder %v270, 1
    %v273 = vsel %vm271, %v251, 0.0
    %v274 = vsel %vm272, %v219, 0.0
    %v275 = vsel %vm271, %v252, 0.0
    %v276 = vsel %vm272, %v220, 0.0
    %v277 = vsel %vm271, %v253, 0.0
    %v278 = vsel %vm272, %v221, 0.0
    %v279 = vsel %vm271, %v254, 0.0
    %v280 = vsel %vm272, %v222, 0.0
    %v281 = vsel %vm271, %v255, 0.0
    %v282 = vsel %vm272, %v223, 0.0
    %v283 = vsel %vm271, %v256, 0.0
    %v284 = vsel %vm272, %v224, 0.0
    %v285 = vsel %vm271, %v257, 0.0
    %v286 = vsel %vm272, %v225, 0.0
    %v287 = vsel %vm271, %v258, 0.0
    %v288 = vsel %vm272, %v226, 0.0
    %vm289 = vcmp.le.s32.totalorder %v88, 14
    %vm290 = vcmp.le.s32.totalorder %v89, 14
    %v291 = vsel %vm289, 1, 0
    %v292 = vsel %vm290, 1, 0
    %vm293 = vcmp.eq.s32.totalorder %v291, 1
    %vm294 = vcmp.eq.s32.totalorder %v292, 1
    %311 = vrot.lane.b32.xlu0 %v251, 126
    %v312 = vpop.permute.xlu0 %311
    %313 = vrot.lane.b32.xlu0 %v219, 126
    %v314 = vpop.permute.xlu0 %313
    %315 = vrot.lane.b32.xlu0 %v259, 126
    %v316 = vpop.permute.xlu0 %315
    %317 = vrot.lane.b32.xlu0 %v252, 126
    %v318 = vpop.permute.xlu0 %317
    %319 = vrot.lane.b32.xlu0 %v220, 126
    %v320 = vpop.permute.xlu0 %319
    %321 = vrot.lane.b32.xlu0 %v260, 126
    %v322 = vpop.permute.xlu0 %321
    %323 = vrot.lane.b32.xlu0 %v253, 126
    %v324 = vpop.permute.xlu0 %323
    %325 = vrot.lane.b32.xlu0 %v221, 126
    %v326 = vpop.permute.xlu0 %325
    %327 = vrot.lane.b32.xlu0 %v261, 126
    %v328 = vpop.permute.xlu0 %327
    %329 = vrot.lane.b32.xlu0 %v254, 126
    %v330 = vpop.permute.xlu0 %329
    %331 = vrot.lane.b32.xlu0 %v222, 126
    %v332 = vpop.permute.xlu0 %331
    %333 = vrot.lane.b32.xlu0 %v262, 126
    %v334 = vpop.permute.xlu0 %333
    %335 = vrot.lane.b32.xlu0 %v255, 126
    %v336 = vpop.permute.xlu0 %335
    %337 = vrot.lane.b32.xlu0 %v223, 126
    %v338 = vpop.permute.xlu0 %337
    %339 = vrot.lane.b32.xlu0 %v263, 126
    %v340 = vpop.permute.xlu0 %339
    %341 = vrot.lane.b32.xlu0 %v256, 126
    %v342 = vpop.permute.xlu0 %341
    %343 = vrot.lane.b32.xlu0 %v224, 126
    %v344 = vpop.permute.xlu0 %343
    %345 = vrot.lane.b32.xlu0 %v264, 126
    %v346 = vpop.permute.xlu0 %345
    %347 = vrot.lane.b32.xlu0 %v257, 126
    %v348 = vpop.permute.xlu0 %347
    %349 = vrot.lane.b32.xlu0 %v225, 126
    %v350 = vpop.permute.xlu0 %349
    %351 = vrot.lane.b32.xlu0 %v265, 126
    %v352 = vpop.permute.xlu0 %351
    %353 = vrot.lane.b32.xlu0 %v258, 126
    %v354 = vpop.permute.xlu0 %353
    %355 = vrot.lane.b32.xlu0 %v226, 126
    %v356 = vpop.permute.xlu0 %355
    %357 = vrot.lane.b32.xlu0 %v266, 126
    %v358 = vpop.permute.xlu0 %357
    %vm359 = vcmask 1031168
    %v360 = vsel %vm359, %v312, %v314
    %v361 = vsel %vm359, %v314, %v316
    %v362 = vsel %vm359, %v318, %v320
    %v363 = vsel %vm359, %v320, %v322
    %v364 = vsel %vm359, %v324, %v326
    %v365 = vsel %vm359, %v326, %v328
    %v366 = vsel %vm359, %v330, %v332
    %v367 = vsel %vm359, %v332, %v334
    %v368 = vsel %vm359, %v336, %v338
    %v369 = vsel %vm359, %v338, %v340
    %v370 = vsel %vm359, %v342, %v344
    %v371 = vsel %vm359, %v344, %v346
    %v372 = vsel %vm359, %v348, %v350
    %v373 = vsel %vm359, %v350, %v352
    %v374 = vsel %vm359, %v354, %v356
    %v375 = vsel %vm359, %v356, %v358
    %v392 = vsel %vm293, %v360, 0.0
    %v393 = vsel %vm294, %v361, 0.0
    %v394 = vsel %vm293, %v362, 0.0
    %v395 = vsel %vm294, %v363, 0.0
    %v396 = vsel %vm293, %v364, 0.0
    %v397 = vsel %vm294, %v365, 0.0
    %v398 = vsel %vm293, %v366, 0.0
    %v399 = vsel %vm294, %v367, 0.0
    %v400 = vsel %vm293, %v368, 0.0
    %v401 = vsel %vm294, %v369, 0.0
    %v402 = vsel %vm293, %v370, 0.0
    %v403 = vsel %vm294, %v371, 0.0
    %v404 = vsel %vm293, %v372, 0.0
    %v405 = vsel %vm294, %v373, 0.0
    %v406 = vsel %vm293, %v374, 0.0
    %v407 = vsel %vm294, %v375, 0.0
    %408 = vrot.lane.b32.xlu0 %v251, 112
    %v409 = vpop.permute.xlu0 %408
    %410 = vrot.lane.b32.xlu0 %v219, 112
    %v411 = vpop.permute.xlu0 %410
    %412 = vrot.lane.b32.xlu0 %v259, 112
    %v413 = vpop.permute.xlu0 %412
    %414 = vrot.lane.b32.xlu0 %v252, 112
    %v415 = vpop.permute.xlu0 %414
    %416 = vrot.lane.b32.xlu0 %v220, 112
    %v417 = vpop.permute.xlu0 %416
    %418 = vrot.lane.b32.xlu0 %v260, 112
    %v419 = vpop.permute.xlu0 %418
    %420 = vrot.lane.b32.xlu0 %v253, 112
    %v421 = vpop.permute.xlu0 %420
    %422 = vrot.lane.b32.xlu0 %v221, 112
    %v423 = vpop.permute.xlu0 %422
    %424 = vrot.lane.b32.xlu0 %v261, 112
    %v425 = vpop.permute.xlu0 %424
    %426 = vrot.lane.b32.xlu0 %v254, 112
    %v427 = vpop.permute.xlu0 %426
    %428 = vrot.lane.b32.xlu0 %v222, 112
    %v429 = vpop.permute.xlu0 %428
    %430 = vrot.lane.b32.xlu0 %v262, 112
    %v431 = vpop.permute.xlu0 %430
    %432 = vrot.lane.b32.xlu0 %v255, 112
    %v433 = vpop.permute.xlu0 %432
    %434 = vrot.lane.b32.xlu0 %v223, 112
    %v435 = vpop.permute.xlu0 %434
    %436 = vrot.lane.b32.xlu0 %v263, 112
    %v437 = vpop.permute.xlu0 %436
    %438 = vrot.lane.b32.xlu0 %v256, 112
    %v439 = vpop.permute.xlu0 %438
    %440 = vrot.lane.b32.xlu0 %v224, 112
    %v441 = vpop.permute.xlu0 %440
    %442 = vrot.lane.b32.xlu0 %v264, 112
    %v443 = vpop.permute.xlu0 %442
    %444 = vrot.lane.b32.xlu0 %v257, 112
    %v445 = vpop.permute.xlu0 %444
    %446 = vrot.lane.b32.xlu0 %v225, 112
    %v447 = vpop.permute.xlu0 %446
    %448 = vrot.lane.b32.xlu0 %v265, 112
    %v449 = vpop.permute.xlu0 %448
    %450 = vrot.lane.b32.xlu0 %v258, 112
    %v451 = vpop.permute.xlu0 %450
    %452 = vrot.lane.b32.xlu0 %v226, 112
    %v453 = vpop.permute.xlu0 %452
    %454 = vrot.lane.b32.xlu0 %v266, 112
    %v455 = vpop.permute.xlu0 %454
    %vm456 = vcmask 916480
    %v457 = vsel %vm456, %v409, %v411
    %v458 = vsel %vm456, %v411, %v413
    %v459 = vsel %vm456, %v415, %v417
    %v460 = vsel %vm456, %v417, %v419
    %v461 = vsel %vm456, %v421, %v423
    %v462 = vsel %vm456, %v423, %v425
    %v463 = vsel %vm456, %v427, %v429
    %v464 = vsel %vm456, %v429, %v431
    %v465 = vsel %vm456, %v433, %v435
    %v466 = vsel %vm456, %v435, %v437
    %v467 = vsel %vm456, %v439, %v441
    %v468 = vsel %vm456, %v441, %v443
    %v469 = vsel %vm456, %v445, %v447
    %v470 = vsel %vm456, %v447, %v449
    %v471 = vsel %vm456, %v451, %v453
    %v472 = vsel %vm456, %v453, %v455
    %v489 = vsel %vm271, %v457, 0.0
    %v490 = vsel %vm272, %v458, 0.0
    %v491 = vsel %vm271, %v459, 0.0
    %v492 = vsel %vm272, %v460, 0.0
    %v493 = vsel %vm271, %v461, 0.0
    %v494 = vsel %vm272, %v462, 0.0
    %v495 = vsel %vm271, %v463, 0.0
    %v496 = vsel %vm272, %v464, 0.0
    %v497 = vsel %vm271, %v465, 0.0
    %v498 = vsel %vm272, %v466, 0.0
    %v499 = vsel %vm271, %v467, 0.0
    %v500 = vsel %vm272, %v468, 0.0
    %v501 = vsel %vm271, %v469, 0.0
    %v502 = vsel %vm272, %v470, 0.0
    %v503 = vsel %vm271, %v471, 0.0
    %v504 = vsel %vm272, %v472, 0.0
    %505 = vrot.lane.b32.xlu0 %v251, 110
    %v506 = vpop.permute.xlu0 %505
    %507 = vrot.lane.b32.xlu0 %v219, 110
    %v508 = vpop.permute.xlu0 %507
    %509 = vrot.lane.b32.xlu0 %v259, 110
    %v510 = vpop.permute.xlu0 %509
    %511 = vrot.lane.b32.xlu0 %v252, 110
    %v512 = vpop.permute.xlu0 %511
    %513 = vrot.lane.b32.xlu0 %v220, 110
    %v514 = vpop.permute.xlu0 %513
    %515 = vrot.lane.b32.xlu0 %v260, 110
    %v516 = vpop.permute.xlu0 %515
    %517 = vrot.lane.b32.xlu0 %v253, 110
    %v518 = vpop.permute.xlu0 %517
    %519 = vrot.lane.b32.xlu0 %v221, 110
    %v520 = vpop.permute.xlu0 %519
    %521 = vrot.lane.b32.xlu0 %v261, 110
    %v522 = vpop.permute.xlu0 %521
    %523 = vrot.lane.b32.xlu0 %v254, 110
    %v524 = vpop.permute.xlu0 %523
    %525 = vrot.lane.b32.xlu0 %v222, 110
    %v526 = vpop.permute.xlu0 %525
    %527 = vrot.lane.b32.xlu0 %v262, 110
    %v528 = vpop.permute.xlu0 %527
    %529 = vrot.lane.b32.xlu0 %v255, 110
    %v530 = vpop.permute.xlu0 %529
    %531 = vrot.lane.b32.xlu0 %v223, 110
    %v532 = vpop.permute.xlu0 %531
    %533 = vrot.lane.b32.xlu0 %v263, 110
    %v534 = vpop.permute.xlu0 %533
    %535 = vrot.lane.b32.xlu0 %v256, 110
    %v536 = vpop.permute.xlu0 %535
    %537 = vrot.lane.b32.xlu0 %v224, 110
    %v538 = vpop.permute.xlu0 %537
    %539 = vrot.lane.b32.xlu0 %v264, 110
    %v540 = vpop.permute.xlu0 %539
    %541 = vrot.lane.b32.xlu0 %v257, 110
    %v542 = vpop.permute.xlu0 %541
    %543 = vrot.lane.b32.xlu0 %v225, 110
    %v544 = vpop.permute.xlu0 %543
    %545 = vrot.lane.b32.xlu0 %v265, 110
    %v546 = vpop.permute.xlu0 %545
    %547 = vrot.lane.b32.xlu0 %v258, 110
    %v548 = vpop.permute.xlu0 %547
    %549 = vrot.lane.b32.xlu0 %v226, 110
    %v550 = vpop.permute.xlu0 %549
    %551 = vrot.lane.b32.xlu0 %v266, 110
    %v552 = vpop.permute.xlu0 %551
    %vm553 = vcmask 900096
    %v554 = vsel %vm553, %v506, %v508
    %v555 = vsel %vm553, %v508, %v510
    %v556 = vsel %vm553, %v512, %v514
    %v557 = vsel %vm553, %v514, %v516
    %v558 = vsel %vm553, %v518, %v520
    %v559 = vsel %vm553, %v520, %v522
    %v560 = vsel %vm553, %v524, %v526
    %v561 = vsel %vm553, %v526, %v528
    %v562 = vsel %vm553, %v530, %v532
    %v563 = vsel %vm553, %v532, %v534
    %v564 = vsel %vm553, %v536, %v538
    %v565 = vsel %vm553, %v538, %v540
    %v566 = vsel %vm553, %v542, %v544
    %v567 = vsel %vm553, %v544, %v546
    %v568 = vsel %vm553, %v548, %v550
    %v569 = vsel %vm553, %v550, %v552
    %v586 = vsel %vm293, %v554, 0.0
    %v587 = vsel %vm294, %v555, 0.0
    %v588 = vsel %vm293, %v556, 0.0
    %v589 = vsel %vm294, %v557, 0.0
    %v590 = vsel %vm293, %v558, 0.0
    %v591 = vsel %vm294, %v559, 0.0
    %v592 = vsel %vm293, %v560, 0.0
    %v593 = vsel %vm294, %v561, 0.0
    %v594 = vsel %vm293, %v562, 0.0
    %v595 = vsel %vm294, %v563, 0.0
    %v596 = vsel %vm293, %v564, 0.0
    %v597 = vsel %vm294, %v565, 0.0
    %v598 = vsel %vm293, %v566, 0.0
    %v599 = vsel %vm294, %v567, 0.0
    %v600 = vsel %vm293, %v568, 0.0
    %v601 = vsel %vm294, %v569, 0.0
    %602 = vrot.lane.b32.xlu0 %v251, 96
    %v603 = vpop.permute.xlu0 %602
    %604 = vrot.lane.b32.xlu0 %v219, 96
    %v605 = vpop.permute.xlu0 %604
    %606 = vrot.lane.b32.xlu0 %v259, 96
    %v607 = vpop.permute.xlu0 %606
    %608 = vrot.lane.b32.xlu0 %v252, 96
    %v609 = vpop.permute.xlu0 %608
    %610 = vrot.lane.b32.xlu0 %v220, 96
    %v611 = vpop.permute.xlu0 %610
    %612 = vrot.lane.b32.xlu0 %v260, 96
    %v613 = vpop.permute.xlu0 %612
    %614 = vrot.lane.b32.xlu0 %v253, 96
    %v615 = vpop.permute.xlu0 %614
    %616 = vrot.lane.b32.xlu0 %v221, 96
    %v617 = vpop.permute.xlu0 %616
    %618 = vrot.lane.b32.xlu0 %v261, 96
    %v619 = vpop.permute.xlu0 %618
    %620 = vrot.lane.b32.xlu0 %v254, 96
    %v621 = vpop.permute.xlu0 %620
    %622 = vrot.lane.b32.xlu0 %v222, 96
    %v623 = vpop.permute.xlu0 %622
    %624 = vrot.lane.b32.xlu0 %v262, 96
    %v625 = vpop.permute.xlu0 %624
    %626 = vrot.lane.b32.xlu0 %v255, 96
    %v627 = vpop.permute.xlu0 %626
    %628 = vrot.lane.b32.xlu0 %v223, 96
    %v629 = vpop.permute.xlu0 %628
    %630 = vrot.lane.b32.xlu0 %v263, 96
    %v631 = vpop.permute.xlu0 %630
    %632 = vrot.lane.b32.xlu0 %v256, 96
    %v633 = vpop.permute.xlu0 %632
    %634 = vrot.lane.b32.xlu0 %v224, 96
    %v635 = vpop.permute.xlu0 %634
    %636 = vrot.lane.b32.xlu0 %v264, 96
    %v637 = vpop.permute.xlu0 %636
    %638 = vrot.lane.b32.xlu0 %v257, 96
    %v639 = vpop.permute.xlu0 %638
    %640 = vrot.lane.b32.xlu0 %v225, 96
    %v641 = vpop.permute.xlu0 %640
    %642 = vrot.lane.b32.xlu0 %v265, 96
    %v643 = vpop.permute.xlu0 %642
    %644 = vrot.lane.b32.xlu0 %v258, 96
    %v645 = vpop.permute.xlu0 %644
    %646 = vrot.lane.b32.xlu0 %v226, 96
    %v647 = vpop.permute.xlu0 %646
    %648 = vrot.lane.b32.xlu0 %v266, 96
    %v649 = vpop.permute.xlu0 %648
    %vm650 = vcmask 785408
    %v651 = vsel %vm650, %v603, %v605
    %v652 = vsel %vm650, %v605, %v607
    %v653 = vsel %vm650, %v609, %v611
    %v654 = vsel %vm650, %v611, %v613
    %v655 = vsel %vm650, %v615, %v617
    %v656 = vsel %vm650, %v617, %v619
    %v657 = vsel %vm650, %v621, %v623
    %v658 = vsel %vm650, %v623, %v625
    %v659 = vsel %vm650, %v627, %v629
    %v660 = vsel %vm650, %v629, %v631
    %v661 = vsel %vm650, %v633, %v635
    %v662 = vsel %vm650, %v635, %v637
    %v663 = vsel %vm650, %v639, %v641
    %v664 = vsel %vm650, %v641, %v643
    %v665 = vsel %vm650, %v645, %v647
    %v666 = vsel %vm650, %v647, %v649
    %v683 = vsel %vm271, %v651, 0.0
    %v684 = vsel %vm272, %v652, 0.0
    %v685 = vsel %vm271, %v653, 0.0
    %v686 = vsel %vm272, %v654, 0.0
    %v687 = vsel %vm271, %v655, 0.0
    %v688 = vsel %vm272, %v656, 0.0
    %v689 = vsel %vm271, %v657, 0.0
    %v690 = vsel %vm272, %v658, 0.0
    %v691 = vsel %vm271, %v659, 0.0
    %v692 = vsel %vm272, %v660, 0.0
    %v693 = vsel %vm271, %v661, 0.0
    %v694 = vsel %vm272, %v662, 0.0
    %v695 = vsel %vm271, %v663, 0.0
    %v696 = vsel %vm272, %v664, 0.0
    %v697 = vsel %vm271, %v665, 0.0
    %v698 = vsel %vm272, %v666, 0.0
    %699 = vrot.lane.b32.xlu0 %v251, 94
    %v700 = vpop.permute.xlu0 %699
    %701 = vrot.lane.b32.xlu0 %v219, 94
    %v702 = vpop.permute.xlu0 %701
    %703 = vrot.lane.b32.xlu0 %v259, 94
    %v704 = vpop.permute.xlu0 %703
    %705 = vrot.lane.b32.xlu0 %v252, 94
    %v706 = vpop.permute.xlu0 %705
    %707 = vrot.lane.b32.xlu0 %v220, 94
    %v708 = vpop.permute.xlu0 %707
    %709 = vrot.lane.b32.xlu0 %v260, 94
    %v710 = vpop.permute.xlu0 %709
    %711 = vrot.lane.b32.xlu0 %v253, 94
    %v712 = vpop.permute.xlu0 %711
    %713 = vrot.lane.b32.xlu0 %v221, 94
    %v714 = vpop.permute.xlu0 %713
    %715 = vrot.lane.b32.xlu0 %v261, 94
    %v716 = vpop.permute.xlu0 %715
    %717 = vrot.lane.b32.xlu0 %v254, 94
    %v718 = vpop.permute.xlu0 %717
    %719 = vrot.lane.b32.xlu0 %v222, 94
    %v720 = vpop.permute.xlu0 %719
    %721 = vrot.lane.b32.xlu0 %v262, 94
    %v722 = vpop.permute.xlu0 %721
    %723 = vrot.lane.b32.xlu0 %v255, 94
    %v724 = vpop.permute.xlu0 %723
    %725 = vrot.lane.b32.xlu0 %v223, 94
    %v726 = vpop.permute.xlu0 %725
    %727 = vrot.lane.b32.xlu0 %v263, 94
    %v728 = vpop.permute.xlu0 %727
    %729 = vrot.lane.b32.xlu0 %v256, 94
    %v730 = vpop.permute.xlu0 %729
    %731 = vrot.lane.b32.xlu0 %v224, 94
    %v732 = vpop.permute.xlu0 %731
    %733 = vrot.lane.b32.xlu0 %v264, 94
    %v734 = vpop.permute.xlu0 %733
    %735 = vrot.lane.b32.xlu0 %v257, 94
    %v736 = vpop.permute.xlu0 %735
    %737 = vrot.lane.b32.xlu0 %v225, 94
    %v738 = vpop.permute.xlu0 %737
    %739 = vrot.lane.b32.xlu0 %v265, 94
    %v740 = vpop.permute.xlu0 %739
    %741 = vrot.lane.b32.xlu0 %v258, 94
    %v742 = vpop.permute.xlu0 %741
    %743 = vrot.lane.b32.xlu0 %v226, 94
    %v744 = vpop.permute.xlu0 %743
    %745 = vrot.lane.b32.xlu0 %v266, 94
    %v746 = vpop.permute.xlu0 %745
    %vm747 = vcmask 769024
    %v748 = vsel %vm747, %v700, %v702
    %v749 = vsel %vm747, %v702, %v704
    %v750 = vsel %vm747, %v706, %v708
    %v751 = vsel %vm747, %v708, %v710
    %v752 = vsel %vm747, %v712, %v714
    %v753 = vsel %vm747, %v714, %v716
    %v754 = vsel %vm747, %v718, %v720
    %v755 = vsel %vm747, %v720, %v722
    %v756 = vsel %vm747, %v724, %v726
    %v757 = vsel %vm747, %v726, %v728
    %v758 = vsel %vm747, %v730, %v732
    %v759 = vsel %vm747, %v732, %v734
    %v760 = vsel %vm747, %v736, %v738
    %v761 = vsel %vm747, %v738, %v740
    %v762 = vsel %vm747, %v742, %v744
    %v763 = vsel %vm747, %v744, %v746
    %v780 = vsel %vm293, %v748, 0.0
    %v781 = vsel %vm294, %v749, 0.0
    %v782 = vsel %vm293, %v750, 0.0
    %v783 = vsel %vm294, %v751, 0.0
    %v784 = vsel %vm293, %v752, 0.0
    %v785 = vsel %vm294, %v753, 0.0
    %v786 = vsel %vm293, %v754, 0.0
    %v787 = vsel %vm294, %v755, 0.0
    %v788 = vsel %vm293, %v756, 0.0
    %v789 = vsel %vm294, %v757, 0.0
    %v790 = vsel %vm293, %v758, 0.0
    %v791 = vsel %vm294, %v759, 0.0
    %v792 = vsel %vm293, %v760, 0.0
    %v793 = vsel %vm294, %v761, 0.0
    %v794 = vsel %vm293, %v762, 0.0
    %v795 = vsel %vm294, %v763, 0.0
    %796 = vrot.lane.b32.xlu0 %v251, 127
    %v797 = vpop.permute.xlu0 %796
    %798 = vrot.lane.b32.xlu0 %v219, 127
    %v799 = vpop.permute.xlu0 %798
    %800 = vrot.lane.b32.xlu0 %v259, 127
    %v801 = vpop.permute.xlu0 %800
    %802 = vrot.lane.b32.xlu0 %v252, 127
    %v803 = vpop.permute.xlu0 %802
    %804 = vrot.lane.b32.xlu0 %v220, 127
    %v805 = vpop.permute.xlu0 %804
    %806 = vrot.lane.b32.xlu0 %v260, 127
    %v807 = vpop.permute.xlu0 %806
    %808 = vrot.lane.b32.xlu0 %v253, 127
    %v809 = vpop.permute.xlu0 %808
    %810 = vrot.lane.b32.xlu0 %v221, 127
    %v811 = vpop.permute.xlu0 %810
    %812 = vrot.lane.b32.xlu0 %v261, 127
    %v813 = vpop.permute.xlu0 %812
    %814 = vrot.lane.b32.xlu0 %v254, 127
    %v815 = vpop.permute.xlu0 %814
    %816 = vrot.lane.b32.xlu0 %v222, 127
    %v817 = vpop.permute.xlu0 %816
    %818 = vrot.lane.b32.xlu0 %v262, 127
    %v819 = vpop.permute.xlu0 %818
    %820 = vrot.lane.b32.xlu0 %v255, 127
    %v821 = vpop.permute.xlu0 %820
    %822 = vrot.lane.b32.xlu0 %v223, 127
    %v823 = vpop.permute.xlu0 %822
    %824 = vrot.lane.b32.xlu0 %v263, 127
    %v825 = vpop.permute.xlu0 %824
    %826 = vrot.lane.b32.xlu0 %v256, 127
    %v827 = vpop.permute.xlu0 %826
    %828 = vrot.lane.b32.xlu0 %v224, 127
    %v829 = vpop.permute.xlu0 %828
    %830 = vrot.lane.b32.xlu0 %v264, 127
    %v831 = vpop.permute.xlu0 %830
    %832 = vrot.lane.b32.xlu0 %v257, 127
    %v833 = vpop.permute.xlu0 %832
    %834 = vrot.lane.b32.xlu0 %v225, 127
    %v835 = vpop.permute.xlu0 %834
    %836 = vrot.lane.b32.xlu0 %v265, 127
    %v837 = vpop.permute.xlu0 %836
    %838 = vrot.lane.b32.xlu0 %v258, 127
    %v839 = vpop.permute.xlu0 %838
    %840 = vrot.lane.b32.xlu0 %v226, 127
    %v841 = vpop.permute.xlu0 %840
    %842 = vrot.lane.b32.xlu0 %v266, 127
    %v843 = vpop.permute.xlu0 %842
    %vm844 = vcmask 1039360
    %v845 = vsel %vm844, %v797, %v799
    %v846 = vsel %vm844, %v799, %v801
    %v847 = vsel %vm844, %v803, %v805
    %v848 = vsel %vm844, %v805, %v807
    %v849 = vsel %vm844, %v809, %v811
    %v850 = vsel %vm844, %v811, %v813
    %v851 = vsel %vm844, %v815, %v817
    %v852 = vsel %vm844, %v817, %v819
    %v853 = vsel %vm844, %v821, %v823
    %v854 = vsel %vm844, %v823, %v825
    %v855 = vsel %vm844, %v827, %v829
    %v856 = vsel %vm844, %v829, %v831
    %v857 = vsel %vm844, %v833, %v835
    %v858 = vsel %vm844, %v835, %v837
    %v859 = vsel %vm844, %v839, %v841
    %v860 = vsel %vm844, %v841, %v843
    %877 = vrot.lane.b32.xlu0 %v251, 111
    %v878 = vpop.permute.xlu0 %877
    %879 = vrot.lane.b32.xlu0 %v219, 111
    %v880 = vpop.permute.xlu0 %879
    %881 = vrot.lane.b32.xlu0 %v259, 111
    %v882 = vpop.permute.xlu0 %881
    %883 = vrot.lane.b32.xlu0 %v252, 111
    %v884 = vpop.permute.xlu0 %883
    %885 = vrot.lane.b32.xlu0 %v220, 111
    %v886 = vpop.permute.xlu0 %885
    %887 = vrot.lane.b32.xlu0 %v260, 111
    %v888 = vpop.permute.xlu0 %887
    %889 = vrot.lane.b32.xlu0 %v253, 111
    %v890 = vpop.permute.xlu0 %889
    %891 = vrot.lane.b32.xlu0 %v221, 111
    %v892 = vpop.permute.xlu0 %891
    %893 = vrot.lane.b32.xlu0 %v261, 111
    %v894 = vpop.permute.xlu0 %893
    %895 = vrot.lane.b32.xlu0 %v254, 111
    %v896 = vpop.permute.xlu0 %895
    %897 = vrot.lane.b32.xlu0 %v222, 111
    %v898 = vpop.permute.xlu0 %897
    %899 = vrot.lane.b32.xlu0 %v262, 111
    %v900 = vpop.permute.xlu0 %899
    %901 = vrot.lane.b32.xlu0 %v255, 111
    %v902 = vpop.permute.xlu0 %901
    %903 = vrot.lane.b32.xlu0 %v223, 111
    %v904 = vpop.permute.xlu0 %903
    %905 = vrot.lane.b32.xlu0 %v263, 111
    %v906 = vpop.permute.xlu0 %905
    %907 = vrot.lane.b32.xlu0 %v256, 111
    %v908 = vpop.permute.xlu0 %907
    %909 = vrot.lane.b32.xlu0 %v224, 111
    %v910 = vpop.permute.xlu0 %909
    %911 = vrot.lane.b32.xlu0 %v264, 111
    %v912 = vpop.permute.xlu0 %911
    %913 = vrot.lane.b32.xlu0 %v257, 111
    %v914 = vpop.permute.xlu0 %913
    %915 = vrot.lane.b32.xlu0 %v225, 111
    %v916 = vpop.permute.xlu0 %915
    %917 = vrot.lane.b32.xlu0 %v265, 111
    %v918 = vpop.permute.xlu0 %917
    %919 = vrot.lane.b32.xlu0 %v258, 111
    %v920 = vpop.permute.xlu0 %919
    %921 = vrot.lane.b32.xlu0 %v226, 111
    %v922 = vpop.permute.xlu0 %921
    %923 = vrot.lane.b32.xlu0 %v266, 111
    %v924 = vpop.permute.xlu0 %923
    %vm925 = vcmask 908288
    %v926 = vsel %vm925, %v878, %v880
    %v927 = vsel %vm925, %v880, %v882
    %v928 = vsel %vm925, %v884, %v886
    %v929 = vsel %vm925, %v886, %v888
    %v930 = vsel %vm925, %v890, %v892
    %v931 = vsel %vm925, %v892, %v894
    %v932 = vsel %vm925, %v896, %v898
    %v933 = vsel %vm925, %v898, %v900
    %v934 = vsel %vm925, %v902, %v904
    %v935 = vsel %vm925, %v904, %v906
    %v936 = vsel %vm925, %v908, %v910
    %v937 = vsel %vm925, %v910, %v912
    %v938 = vsel %vm925, %v914, %v916
    %v939 = vsel %vm925, %v916, %v918
    %v940 = vsel %vm925, %v920, %v922
    %v941 = vsel %vm925, %v922, %v924
    %958 = vrot.lane.b32.xlu0 %v251, 95
    %v959 = vpop.permute.xlu0 %958
    %960 = vrot.lane.b32.xlu0 %v219, 95
    %v961 = vpop.permute.xlu0 %960
    %962 = vrot.lane.b32.xlu0 %v259, 95
    %v963 = vpop.permute.xlu0 %962
    %964 = vrot.lane.b32.xlu0 %v252, 95
    %v965 = vpop.permute.xlu0 %964
    %966 = vrot.lane.b32.xlu0 %v220, 95
    %v967 = vpop.permute.xlu0 %966
    %968 = vrot.lane.b32.xlu0 %v260, 95
    %v969 = vpop.permute.xlu0 %968
    %970 = vrot.lane.b32.xlu0 %v253, 95
    %v971 = vpop.permute.xlu0 %970
    %972 = vrot.lane.b32.xlu0 %v221, 95
    %v973 = vpop.permute.xlu0 %972
    %974 = vrot.lane.b32.xlu0 %v261, 95
    %v975 = vpop.permute.xlu0 %974
    %976 = vrot.lane.b32.xlu0 %v254, 95
    %v977 = vpop.permute.xlu0 %976
    %978 = vrot.lane.b32.xlu0 %v222, 95
    %v979 = vpop.permute.xlu0 %978
    %980 = vrot.lane.b32.xlu0 %v262, 95
    %v981 = vpop.permute.xlu0 %980
    %982 = vrot.lane.b32.xlu0 %v255, 95
    %v983 = vpop.permute.xlu0 %982
    %984 = vrot.lane.b32.xlu0 %v223, 95
    %v985 = vpop.permute.xlu0 %984
    %986 = vrot.lane.b32.xlu0 %v263, 95
    %v987 = vpop.permute.xlu0 %986
    %988 = vrot.lane.b32.xlu0 %v256, 95
    %v989 = vpop.permute.xlu0 %988
    %990 = vrot.lane.b32.xlu0 %v224, 95
    %v991 = vpop.permute.xlu0 %990
    %992 = vrot.lane.b32.xlu0 %v264, 95
    %v993 = vpop.permute.xlu0 %992
    %994 = vrot.lane.b32.xlu0 %v257, 95
    %v995 = vpop.permute.xlu0 %994
    %996 = vrot.lane.b32.xlu0 %v225, 95
    %v997 = vpop.permute.xlu0 %996
    %998 = vrot.lane.b32.xlu0 %v265, 95
    %v999 = vpop.permute.xlu0 %998
    %1000 = vrot.lane.b32.xlu0 %v258, 95
    %v1001 = vpop.permute.xlu0 %1000
    %1002 = vrot.lane.b32.xlu0 %v226, 95
    %v1003 = vpop.permute.xlu0 %1002
    %1004 = vrot.lane.b32.xlu0 %v266, 95
    %v1005 = vpop.permute.xlu0 %1004
    %vm1006 = vcmask 777216
    %v1007 = vsel %vm1006, %v959, %v961
    %v1008 = vsel %vm1006, %v961, %v963
    %v1009 = vsel %vm1006, %v965, %v967
    %v1010 = vsel %vm1006, %v967, %v969
    %v1011 = vsel %vm1006, %v971, %v973
    %v1012 = vsel %vm1006, %v973, %v975
    %v1013 = vsel %vm1006, %v977, %v979
    %v1014 = vsel %vm1006, %v979, %v981
    %v1015 = vsel %vm1006, %v983, %v985
    %v1016 = vsel %vm1006, %v985, %v987
    %v1017 = vsel %vm1006, %v989, %v991
    %v1018 = vsel %vm1006, %v991, %v993
    %v1019 = vsel %vm1006, %v995, %v997
    %v1020 = vsel %vm1006, %v997, %v999
    %v1021 = vsel %vm1006, %v1001, %v1003
    %v1022 = vsel %vm1006, %v1003, %v1005
    %v1039 = vpack.c.bf16 %v275, %v273
    %v1040 = vpack.c.bf16 %v276, %v274
    %v1041 = vpack.c.bf16 %v279, %v277
    %v1042 = vpack.c.bf16 %v280, %v278
    %v1043 = vpack.c.bf16 %v283, %v281
    %v1044 = vpack.c.bf16 %v284, %v282
    %v1045 = vpack.c.bf16 %v287, %v285
    %v1046 = vpack.c.bf16 %v288, %v286
    %v1047 = vpack.c.bf16 %v847, %v845
    %v1048 = vpack.c.bf16 %v848, %v846
    %v1049 = vpack.c.bf16 %v851, %v849
    %v1050 = vpack.c.bf16 %v852, %v850
    %v1051 = vpack.c.bf16 %v855, %v853
    %v1052 = vpack.c.bf16 %v856, %v854
    %v1053 = vpack.c.bf16 %v859, %v857
    %v1054 = vpack.c.bf16 %v860, %v858
    %v1055 = vpack.c.bf16 %v394, %v392
    %v1056 = vpack.c.bf16 %v395, %v393
    %v1057 = vpack.c.bf16 %v398, %v396
    %v1058 = vpack.c.bf16 %v399, %v397
    %v1059 = vpack.c.bf16 %v402, %v400
    %v1060 = vpack.c.bf16 %v403, %v401
    %v1061 = vpack.c.bf16 %v406, %v404
    %v1062 = vpack.c.bf16 %v407, %v405
    %v1063 = vpack.c.bf16 %v491, %v489
    %v1064 = vpack.c.bf16 %v492, %v490
    %v1065 = vpack.c.bf16 %v495, %v493
    %v1066 = vpack.c.bf16 %v496, %v494
    %v1067 = vpack.c.bf16 %v499, %v497
    %v1068 = vpack.c.bf16 %v500, %v498
    %v1069 = vpack.c.bf16 %v503, %v501
    %v1070 = vpack.c.bf16 %v504, %v502
    %v1071 = vpack.c.bf16 %v928, %v926
    %v1072 = vpack.c.bf16 %v929, %v927
    %v1073 = vpack.c.bf16 %v932, %v930
    %v1074 = vpack.c.bf16 %v933, %v931
    %v1075 = vpack.c.bf16 %v936, %v934
    %v1076 = vpack.c.bf16 %v937, %v935
    %v1077 = vpack.c.bf16 %v940, %v938
    %v1078 = vpack.c.bf16 %v941, %v939
    %v1079 = vpack.c.bf16 %v588, %v586
    %v1080 = vpack.c.bf16 %v589, %v587
    %v1081 = vpack.c.bf16 %v592, %v590
    %v1082 = vpack.c.bf16 %v593, %v591
    %v1083 = vpack.c.bf16 %v596, %v594
    %v1084 = vpack.c.bf16 %v597, %v595
    %v1085 = vpack.c.bf16 %v600, %v598
    %v1086 = vpack.c.bf16 %v601, %v599
    %v1087 = vpack.c.bf16 %v685, %v683
    %v1088 = vpack.c.bf16 %v686, %v684
    %v1089 = vpack.c.bf16 %v689, %v687
    %v1090 = vpack.c.bf16 %v690, %v688
    %v1091 = vpack.c.bf16 %v693, %v691
    %v1092 = vpack.c.bf16 %v694, %v692
    %v1093 = vpack.c.bf16 %v697, %v695
    %v1094 = vpack.c.bf16 %v698, %v696
    %v1095 = vpack.c.bf16 %v1009, %v1007
    %v1096 = vpack.c.bf16 %v1010, %v1008
    %v1097 = vpack.c.bf16 %v1013, %v1011
    %v1098 = vpack.c.bf16 %v1014, %v1012
    %v1099 = vpack.c.bf16 %v1017, %v1015
    %v1100 = vpack.c.bf16 %v1018, %v1016
    %v1101 = vpack.c.bf16 %v1021, %v1019
    %v1102 = vpack.c.bf16 %v1022, %v1020
    %v1103 = vpack.c.bf16 %v782, %v780
    %v1104 = vpack.c.bf16 %v783, %v781
    %v1105 = vpack.c.bf16 %v786, %v784
    %v1106 = vpack.c.bf16 %v787, %v785
    %v1107 = vpack.c.bf16 %v790, %v788
    %v1108 = vpack.c.bf16 %v791, %v789
    %v1109 = vpack.c.bf16 %v794, %v792
    %v1110 = vpack.c.bf16 %v795, %v793
    %1112 = vset.pattern.permute.xlu0 0
    %1113 = vperm.xlu0 %1112, %v138
    %v1114 = vpop.permute.xlu0 %1113
    %1117 = vset.pattern.permute.xlu0 0
    %1118 = vperm.xlu0 %1117, %v139
    %v1119 = vpop.permute.xlu0 %1118
    %1122 = vset.pattern.permute.xlu0 0
    %1123 = vperm.xlu0 %1122, %v140
    %v1124 = vpop.permute.xlu0 %1123
    %1127 = vset.pattern.permute.xlu0 0
    %1128 = vperm.xlu0 %1127, %v141
    %v1129 = vpop.permute.xlu0 %1128
    %1132 = vset.pattern.permute.xlu0 0
    %1133 = vperm.xlu0 %1132, %v142
    %v1134 = vpop.permute.xlu0 %1133
    %1137 = vset.pattern.permute.xlu0 0
    %1138 = vperm.xlu0 %1137, %v143
    %v1139 = vpop.permute.xlu0 %1138
    %1142 = vset.pattern.permute.xlu0 0
    %1143 = vperm.xlu0 %1142, %v144
    %v1144 = vpop.permute.xlu0 %1143
    %1147 = vset.pattern.permute.xlu0 0
    %1148 = vperm.xlu0 %1147, %v145
    %v1149 = vpop.permute.xlu0 %1148
    %v1175 = vunpack.c.l.b16 %v90
    %v1176 = vunpack.c.h.b16 %v90
    %v1177 = vunpack.c.l.b16 %v91
    %v1178 = vunpack.c.h.b16 %v91
    %v1179 = vunpack.c.l.b16 %v92
    %v1180 = vunpack.c.l.b16 %v93
    %v1181 = vunpack.c.h.b16 %v93
    %v1182 = vunpack.c.l.b16 %v94
    %v1183 = vunpack.c.h.b16 %v94
    %v1184 = vunpack.c.l.b16 %v95
    %v1185 = vunpack.c.l.b16 %v96
    %v1186 = vunpack.c.h.b16 %v96
    %v1187 = vunpack.c.l.b16 %v97
    %v1188 = vunpack.c.h.b16 %v97
    %v1189 = vunpack.c.l.b16 %v98
    %v1190 = vunpack.c.l.b16 %v99
    %v1191 = vunpack.c.h.b16 %v99
    %v1192 = vunpack.c.l.b16 %v100
    %v1193 = vunpack.c.h.b16 %v100
    %v1194 = vunpack.c.l.b16 %v101
    %v1195 = vunpack.c.l.b16 %v102
    %v1196 = vunpack.c.h.b16 %v102
    %v1197 = vunpack.c.l.b16 %v103
    %v1198 = vunpack.c.h.b16 %v103
    %v1199 = vunpack.c.l.b16 %v104
    %v1200 = vunpack.c.l.b16 %v105
    %v1201 = vunpack.c.h.b16 %v105
    %v1202 = vunpack.c.l.b16 %v106
    %v1203 = vunpack.c.h.b16 %v106
    %v1204 = vunpack.c.l.b16 %v107
    %v1205 = vunpack.c.l.b16 %v108
    %v1206 = vunpack.c.h.b16 %v108
    %v1207 = vunpack.c.l.b16 %v109
    %v1208 = vunpack.c.h.b16 %v109
    %v1209 = vunpack.c.l.b16 %v110
    %v1210 = vunpack.c.l.b16 %v111
    %v1211 = vunpack.c.h.b16 %v111
    %v1212 = vunpack.c.l.b16 %v112
    %v1213 = vunpack.c.h.b16 %v112
    %v1214 = vunpack.c.l.b16 %v113
    %v1215 = vpack.c.b16 %v1180, %v1175
    %v1216 = vpack.c.b16 %v1181, %v1176
    %v1217 = vpack.c.b16 %v1182, %v1177
    %v1218 = vpack.c.b16 %v1183, %v1178
    %v1219 = vpack.c.b16 %v1184, %v1179
    %v1220 = vpack.c.b16 %v1190, %v1185
    %v1221 = vpack.c.b16 %v1191, %v1186
    %v1222 = vpack.c.b16 %v1192, %v1187
    %v1223 = vpack.c.b16 %v1193, %v1188
    %v1224 = vpack.c.b16 %v1194, %v1189
    %v1225 = vpack.c.b16 %v1200, %v1195
    %v1226 = vpack.c.b16 %v1201, %v1196
    %v1227 = vpack.c.b16 %v1202, %v1197
    %v1228 = vpack.c.b16 %v1203, %v1198
    %v1229 = vpack.c.b16 %v1204, %v1199
    %v1230 = vpack.c.b16 %v1210, %v1205
    %v1231 = vpack.c.b16 %v1211, %v1206
    %v1232 = vpack.c.b16 %v1212, %v1207
    %v1233 = vpack.c.b16 %v1213, %v1208
    %v1234 = vpack.c.b16 %v1214, %v1209
    %vm1251 = vcmask 523264
    %v1253 = vsel %vm1251, %v1219, 0
    %v1256 = vsel %vm1251, %v1224, 0
    %v1259 = vsel %vm1251, %v1229, 0
    %v1262 = vsel %vm1251, %v1234, 0
    %1264 = vmatprep.subr.bf16.mxu0 %v1040
    %1265 = vmatpush1.bf16.msra.mxu0 %v1039
    %1266 = vmatprep.subr.bf16.mxu0 %v1042
    %1267 = vmatpush1.bf16.msra.mxu0 %v1041
    %1268 = vmatprep.subr.bf16.mxu0 %v1044
    %1269 = vmatpush1.bf16.msra.mxu0 %v1043
    %1270 = vmatprep.subr.bf16.mxu0 %v1046
    %1271 = vmatpush1.bf16.msra.mxu0 %v1045
    %1272 = vmatprep.subr.bf16.mxu0 %v1048
    %1273 = vmatpush1.bf16.msra.mxu0 %v1047
    %1274 = vmatprep.subr.bf16.mxu0 %v1050
    %1275 = vmatpush1.bf16.msra.mxu0 %v1049
    %1276 = vmatprep.subr.bf16.mxu0 %v1052
    %1277 = vmatpush1.bf16.msra.mxu0 %v1051
    %1278 = vmatprep.subr.bf16.mxu0 %v1054
    %1279 = vmatpush1.bf16.msra.mxu0 %v1053
    %1280 = vmatprep.subr.bf16.mxu0 %v1056
    %1281 = vmatpush1.bf16.msra.mxu0 %v1055
    %1282 = vmatprep.subr.bf16.mxu0 %v1058
    %1283 = vmatpush1.bf16.msra.mxu0 %v1057
    %1284 = vmatprep.subr.bf16.mxu0 %v1060
    %1285 = vmatpush1.bf16.msra.mxu0 %v1059
    %1286 = vmatprep.subr.bf16.mxu0 %v1062
    %1287 = vmatpush1.bf16.msra.mxu0 %v1061
    %1288 = vmatprep.subr.bf16.mxu0 %v1064
    %1289 = vmatpush1.bf16.msra.mxu0 %v1063
    %1290 = vmatprep.subr.bf16.mxu0 %v1066
    %1291 = vmatpush1.bf16.msra.mxu0 %v1065
    %1292 = vmatprep.subr.bf16.mxu0 %v1068
    %1293 = vmatpush1.bf16.msra.mxu0 %v1067
    %1294 = vmatprep.subr.bf16.mxu0 %v1070
    %1295 = vmatpush1.bf16.msra.mxu0 %v1069
    %1296 = vmatprep.mubr.bf16.mxu0 %v1216
    %1297 = vmatmul.mubr.bf16.gmra.mrb[0].mxu0 %v1215
    %v1298 = vpop.f32.mrb[0].mxu0
    %v1299 = vadd.f32 %v1114, %v1298
    %v1300 = vpop.f32.mrb[0].mxu0
    %v1301 = vadd.f32 %v1114, %v1300
    %v1302 = vpop.f32.mrb[0].mxu0
    %v1303 = vadd.f32 %v1119, %v1302
    %v1304 = vpop.f32.mrb[0].mxu0
    %v1305 = vadd.f32 %v1119, %v1304
    %1306 = vmatprep.mubr.bf16.mxu0 %v1221
    %1307 = vmatmul.mubr.bf16.gmra.mrb[0].mxu0 %v1220
    %v1308 = vpop.f32.mrb[0].mxu0
    %v1309 = vadd.f32 %v1124, %v1308
    %v1310 = vpop.f32.mrb[0].mxu0
    %v1311 = vadd.f32 %v1124, %v1310
    %v1312 = vpop.f32.mrb[0].mxu0
    %v1313 = vadd.f32 %v1129, %v1312
    %v1314 = vpop.f32.mrb[0].mxu0
    %v1315 = vadd.f32 %v1129, %v1314
    %1316 = vmatprep.mubr.bf16.mxu0 %v1226
    %1317 = vmatmul.mubr.bf16.gmra.mrb[0].mxu0 %v1225
    %v1318 = vpop.f32.mrb[0].mxu0
    %v1319 = vadd.f32 %v1134, %v1318
    %v1320 = vpop.f32.mrb[0].mxu0
    %v1321 = vadd.f32 %v1134, %v1320
    %v1322 = vpop.f32.mrb[0].mxu0
    %v1323 = vadd.f32 %v1139, %v1322
    %v1324 = vpop.f32.mrb[0].mxu0
    %v1325 = vadd.f32 %v1139, %v1324
    %1326 = vmatprep.mubr.bf16.mxu0 %v1231
    %1327 = vmatmul.mubr.bf16.gmra.mrb[0].mxu0 %v1230
    %v1328 = vpop.f32.mrb[0].mxu0
    %v1329 = vadd.f32 %v1144, %v1328
    %v1330 = vpop.f32.mrb[0].mxu0
    %v1331 = vadd.f32 %v1144, %v1330
    %v1332 = vpop.f32.mrb[0].mxu0
    %v1333 = vadd.f32 %v1149, %v1332
    %v1334 = vpop.f32.mrb[0].mxu0
    %v1335 = vadd.f32 %v1149, %v1334
    %1336 = vdwg.mxu0
    %1337 = vmatprep.subr.bf16.mxu0 %v1072
    %1338 = vmatpush1.bf16.msra.mxu0 %v1071
    %1339 = vmatprep.subr.bf16.mxu0 %v1074
    %1340 = vmatpush1.bf16.msra.mxu0 %v1073
    %1341 = vmatprep.subr.bf16.mxu0 %v1076
    %1342 = vmatpush1.bf16.msra.mxu0 %v1075
    %1343 = vmatprep.subr.bf16.mxu0 %v1078
    %1344 = vmatpush1.bf16.msra.mxu0 %v1077
    %1345 = vmatprep.subr.bf16.mxu0 %v1080
    %1346 = vmatpush1.bf16.msra.mxu0 %v1079
    %1347 = vmatprep.subr.bf16.mxu0 %v1082
    %1348 = vmatpush1.bf16.msra.mxu0 %v1081
    %1349 = vmatprep.subr.bf16.mxu0 %v1084
    %1350 = vmatpush1.bf16.msra.mxu0 %v1083
    %1351 = vmatprep.subr.bf16.mxu0 %v1086
    %1352 = vmatpush1.bf16.msra.mxu0 %v1085
    %1353 = vmatprep.subr.bf16.mxu0 %v1088
    %1354 = vmatpush1.bf16.msra.mxu0 %v1087
    %1355 = vmatprep.subr.bf16.mxu0 %v1090
    %1356 = vmatpush1.bf16.msra.mxu0 %v1089
    %1357 = vmatprep.subr.bf16.mxu0 %v1092
    %1358 = vmatpush1.bf16.msra.mxu0 %v1091
    %1359 = vmatprep.subr.bf16.mxu0 %v1094
    %1360 = vmatpush1.bf16.msra.mxu0 %v1093
    %1361 = vmatprep.subr.bf16.mxu0 %v1096
    %1362 = vmatpush1.bf16.msra.mxu0 %v1095
    %1363 = vmatprep.subr.bf16.mxu0 %v1098
    %1364 = vmatpush1.bf16.msra.mxu0 %v1097
    %1365 = vmatprep.subr.bf16.mxu0 %v1100
    %1366 = vmatpush1.bf16.msra.mxu0 %v1099
    %1367 = vmatprep.subr.bf16.mxu0 %v1102
    %1368 = vmatpush1.bf16.msra.mxu0 %v1101
    %1369 = vmatprep.mubr.bf16.mxu0 %v1218
    %1370 = vmatmul.mubr.bf16.gmra.mrb[0].mxu0 %v1217
    %v1371 = vpop.f32.mrb[0].mxu0
    %v1372 = vadd.f32 %v1299, %v1371
    %v1373 = vpop.f32.mrb[0].mxu0
    %v1374 = vadd.f32 %v1301, %v1373
    %v1375 = vpop.f32.mrb[0].mxu0
    %v1376 = vadd.f32 %v1303, %v1375
    %v1377 = vpop.f32.mrb[0].mxu0
    %v1378 = vadd.f32 %v1305, %v1377
    %1379 = vmatprep.mubr.bf16.mxu0 %v1223
    %1380 = vmatmul.mubr.bf16.gmra.mrb[0].mxu0 %v1222
    %v1381 = vpop.f32.mrb[0].mxu0
    %v1382 = vadd.f32 %v1309, %v1381
    %v1383 = vpop.f32.mrb[0].mxu0
    %v1384 = vadd.f32 %v1311, %v1383
    %v1385 = vpop.f32.mrb[0].mxu0
    %v1386 = vadd.f32 %v1313, %v1385
    %v1387 = vpop.f32.mrb[0].mxu0
    %v1388 = vadd.f32 %v1315, %v1387
    %1389 = vmatprep.mubr.bf16.mxu0 %v1228
    %1390 = vmatmul.mubr.bf16.gmra.mrb[0].mxu0 %v1227
    %v1391 = vpop.f32.mrb[0].mxu0
    %v1392 = vadd.f32 %v1319, %v1391
    %v1393 = vpop.f32.mrb[0].mxu0
    %v1394 = vadd.f32 %v1321, %v1393
    %v1395 = vpop.f32.mrb[0].mxu0
    %v1396 = vadd.f32 %v1323, %v1395
    %v1397 = vpop.f32.mrb[0].mxu0
    %v1398 = vadd.f32 %v1325, %v1397
    %1399 = vmatprep.mubr.bf16.mxu0 %v1233
    %1400 = vmatmul.mubr.bf16.gmra.mrb[0].mxu0 %v1232
    %v1401 = vpop.f32.mrb[0].mxu0
    %v1402 = vadd.f32 %v1329, %v1401
    %v1403 = vpop.f32.mrb[0].mxu0
    %v1404 = vadd.f32 %v1331, %v1403
    %v1405 = vpop.f32.mrb[0].mxu0
    %v1406 = vadd.f32 %v1333, %v1405
    %v1407 = vpop.f32.mrb[0].mxu0
    %v1408 = vadd.f32 %v1335, %v1407
    %1409 = vdwg.mxu0
    %1410 = vmatprep.subr.bf16.mxu0 %v1104
    %1411 = vmatpush1.bf16.msra.mxu0 %v1103
    %1412 = vmatprep.subr.bf16.mxu0 %v1106
    %1413 = vmatpush1.bf16.msra.mxu0 %v1105
    %1414 = vmatprep.subr.bf16.mxu0 %v1108
    %1415 = vmatpush1.bf16.msra.mxu0 %v1107
    %1416 = vmatprep.subr.bf16.mxu0 %v1110
    %1417 = vmatpush1.bf16.msra.mxu0 %v1109
    %1418 = vmatprep.subr.bf16.mxu0 0
    %1419 = vmatpush1.bf16.msra.mxu0 0
    %1420 = vmatprep.subr.bf16.mxu0 0
    %1421 = vmatpush1.bf16.msra.mxu0 0
    %1422 = vmatprep.subr.bf16.mxu0 0
    %1423 = vmatpush1.bf16.msra.mxu0 0
    %1424 = vmatprep.subr.bf16.mxu0 0
    %1425 = vmatpush1.bf16.msra.mxu0 0
    %1426 = vmatprep.subr.bf16.mxu0 0
    %1427 = vmatpush1.bf16.msra.mxu0 0
    %1428 = vmatprep.subr.bf16.mxu0 0
    %1429 = vmatpush1.bf16.msra.mxu0 0
    %1430 = vmatprep.subr.bf16.mxu0 0
    %1431 = vmatpush1.bf16.msra.mxu0 0
    %1432 = vmatprep.subr.bf16.mxu0 0
    %1433 = vmatpush1.bf16.msra.mxu0 0
    %1434 = vmatprep.subr.bf16.mxu0 0
    %1435 = vmatpush1.bf16.msra.mxu0 0
    %1436 = vmatprep.subr.bf16.mxu0 0
    %1437 = vmatpush1.bf16.msra.mxu0 0
    %1438 = vmatprep.subr.bf16.mxu0 0
    %1439 = vmatpush1.bf16.msra.mxu0 0
    %1440 = vmatprep.subr.bf16.mxu0 0
    %1441 = vmatpush1.bf16.msra.mxu0 0
    %1442 = vmatprep.mubr.bf16.mxu0 0
    %1443 = vmatmul.mubr.bf16.gmra.mrb[0].mxu0 %v1253
    %v1444 = vpop.f32.mrb[0].mxu0
    %v1445 = vadd.f32 %v1372, %v1444
    %v1446 = vpop.f32.mrb[0].mxu0
    %v1447 = vadd.f32 %v1374, %v1446
    %v1448 = vpop.f32.mrb[0].mxu0
    %v1449 = vadd.f32 %v1376, %v1448
    %v1450 = vpop.f32.mrb[0].mxu0
    %v1451 = vadd.f32 %v1378, %v1450
    %1452 = vmatprep.mubr.bf16.mxu0 0
    %1453 = vmatmul.mubr.bf16.gmra.mrb[0].mxu0 %v1256
    %v1454 = vpop.f32.mrb[0].mxu0
    %v1455 = vadd.f32 %v1382, %v1454
    %v1456 = vpop.f32.mrb[0].mxu0
    %v1457 = vadd.f32 %v1384, %v1456
    %v1458 = vpop.f32.mrb[0].mxu0
    %v1459 = vadd.f32 %v1386, %v1458
    %v1460 = vpop.f32.mrb[0].mxu0
    %v1461 = vadd.f32 %v1388, %v1460
    %1462 = vmatprep.mubr.bf16.mxu0 0
    %1463 = vmatmul.mubr.bf16.gmra.mrb[0].mxu0 %v1259
    %v1464 = vpop.f32.mrb[0].mxu0
    %v1465 = vadd.f32 %v1392, %v1464
    %v1466 = vpop.f32.mrb[0].mxu0
    %v1467 = vadd.f32 %v1394, %v1466
    %v1468 = vpop.f32.mrb[0].mxu0
    %v1469 = vadd.f32 %v1396, %v1468
    %v1470 = vpop.f32.mrb[0].mxu0
    %v1471 = vadd.f32 %v1398, %v1470
    %1472 = vmatprep.mubr.bf16.mxu0 0
    %1473 = vmatmul.mubr.bf16.gmra.mrb[0].mxu0 %v1262
    %v1474 = vpop.f32.mrb[0].mxu0
    %v1475 = vadd.f32 %v1402, %v1474
    %v1476 = vpop.f32.mrb[0].mxu0
    %v1477 = vadd.f32 %v1404, %v1476
    %v1478 = vpop.f32.mrb[0].mxu0
    %v1479 = vadd.f32 %v1406, %v1478
    %v1480 = vpop.f32.mrb[0].mxu0
    %v1481 = vadd.f32 %v1408, %v1480
    %1482 = vdwg.mxu0
    %v1483 = vmax.f32 %v1445, 0.0
    %v1484 = vmax.f32 %v1447, 0.0
    %v1485 = vmax.f32 %v1449, 0.0
    %v1486 = vmax.f32 %v1451, 0.0
    %v1487 = vmax.f32 %v1455, 0.0
    %v1488 = vmax.f32 %v1457, 0.0
    %v1489 = vmax.f32 %v1459, 0.0
    %v1490 = vmax.f32 %v1461, 0.0
    %v1491 = vmax.f32 %v1465, 0.0
    %v1492 = vmax.f32 %v1467, 0.0
    %v1493 = vmax.f32 %v1469, 0.0
    %v1494 = vmax.f32 %v1471, 0.0
    %v1495 = vmax.f32 %v1475, 0.0
    %v1496 = vmax.f32 %v1477, 0.0
    %v1497 = vmax.f32 %v1479, 0.0
    %v1498 = vmax.f32 %v1481, 0.0
    %1515 = vrot.lane.b32.xlu0 %v1483, 17
    %v1516 = vpop.permute.xlu0 %1515
    %1517 = vrot.lane.b32.xlu0 %v1484, 17
    %v1518 = vpop.permute.xlu0 %1517
    %1519 = vrot.lane.b32.xlu0 %v1485, 17
    %v1520 = vpop.permute.xlu0 %1519
    %1521 = vrot.lane.b32.xlu0 %v1486, 17
    %v1522 = vpop.permute.xlu0 %1521
    %1523 = vrot.lane.b32.xlu0 %v1487, 17
    %v1524 = vpop.permute.xlu0 %1523
    %1525 = vrot.lane.b32.xlu0 %v1488, 17
    %v1526 = vpop.permute.xlu0 %1525
    %1527 = vrot.lane.b32.xlu0 %v1489, 17
    %v1528 = vpop.permute.xlu0 %1527
    %1529 = vrot.lane.b32.xlu0 %v1490, 17
    %v1530 = vpop.permute.xlu0 %1529
    %1531 = vrot.lane.b32.xlu0 %v1491, 17
    %v1532 = vpop.permute.xlu0 %1531
    %1533 = vrot.lane.b32.xlu0 %v1492, 17
    %v1534 = vpop.permute.xlu0 %1533
    %1535 = vrot.lane.b32.xlu0 %v1493, 17
    %v1536 = vpop.permute.xlu0 %1535
    %1537 = vrot.lane.b32.xlu0 %v1494, 17
    %v1538 = vpop.permute.xlu0 %1537
    %1539 = vrot.lane.b32.xlu0 %v1495, 17
    %v1540 = vpop.permute.xlu0 %1539
    %1541 = vrot.lane.b32.xlu0 %v1496, 17
    %v1542 = vpop.permute.xlu0 %1541
    %1543 = vrot.lane.b32.xlu0 %v1497, 17
    %v1544 = vpop.permute.xlu0 %1543
    %1545 = vrot.lane.b32.xlu0 %v1498, 17
    %v1546 = vpop.permute.xlu0 %1545
    %v1547 = vsel %vm218, %v1516, %v1518
    %v1548 = vsel %vm218, %v1520, %v1522
    %v1549 = vsel %vm218, %v1524, %v1526
    %v1550 = vsel %vm218, %v1528, %v1530
    %v1551 = vsel %vm218, %v1532, %v1534
    %v1552 = vsel %vm218, %v1536, %v1538
    %v1553 = vsel %vm218, %v1540, %v1542
    %v1554 = vsel %vm218, %v1544, %v1546
    %v1579 = vsel %vm218, 0.0, %v1516
    %v1580 = vsel %vm218, 0.0, %v1520
    %v1581 = vsel %vm218, 0.0, %v1524
    %v1582 = vsel %vm218, 0.0, %v1528
    %v1583 = vsel %vm218, 0.0, %v1532
    %v1584 = vsel %vm218, 0.0, %v1536
    %v1585 = vsel %vm218, 0.0, %v1540
    %v1586 = vsel %vm218, 0.0, %v1544
    %v1587 = vsel %vm218, %v1518, 0.0
    %v1588 = vsel %vm218, %v1522, 0.0
    %v1589 = vsel %vm218, %v1526, 0.0
    %v1590 = vsel %vm218, %v1530, 0.0
    %v1591 = vsel %vm218, %v1534, 0.0
    %v1592 = vsel %vm218, %v1538, 0.0
    %v1593 = vsel %vm218, %v1542, 0.0
    %v1594 = vsel %vm218, %v1546, 0.0
    %v1595 = vsel %vm271, %v1579, 0.0
    %v1596 = vsel %vm272, %v1547, 0.0
    %v1597 = vsel %vm271, %v1580, 0.0
    %v1598 = vsel %vm272, %v1548, 0.0
    %v1599 = vsel %vm271, %v1581, 0.0
    %v1600 = vsel %vm272, %v1549, 0.0
    %v1601 = vsel %vm271, %v1582, 0.0
    %v1602 = vsel %vm272, %v1550, 0.0
    %v1603 = vsel %vm271, %v1583, 0.0
    %v1604 = vsel %vm272, %v1551, 0.0
    %v1605 = vsel %vm271, %v1584, 0.0
    %v1606 = vsel %vm272, %v1552, 0.0
    %v1607 = vsel %vm271, %v1585, 0.0
    %v1608 = vsel %vm272, %v1553, 0.0
    %v1609 = vsel %vm271, %v1586, 0.0
    %v1610 = vsel %vm272, %v1554, 0.0
    %1627 = vrot.lane.b32.xlu0 %v1579, 126
    %v1628 = vpop.permute.xlu0 %1627
    %1629 = vrot.lane.b32.xlu0 %v1547, 126
    %v1630 = vpop.permute.xlu0 %1629
    %1631 = vrot.lane.b32.xlu0 %v1587, 126
    %v1632 = vpop.permute.xlu0 %1631
    %1633 = vrot.lane.b32.xlu0 %v1580, 126
    %v1634 = vpop.permute.xlu0 %1633
    %1635 = vrot.lane.b32.xlu0 %v1548, 126
    %v1636 = vpop.permute.xlu0 %1635
    %1637 = vrot.lane.b32.xlu0 %v1588, 126
    %v1638 = vpop.permute.xlu0 %1637
    %1639 = vrot.lane.b32.xlu0 %v1581, 126
    %v1640 = vpop.permute.xlu0 %1639
    %1641 = vrot.lane.b32.xlu0 %v1549, 126
    %v1642 = vpop.permute.xlu0 %1641
    %1643 = vrot.lane.b32.xlu0 %v1589, 126
    %v1644 = vpop.permute.xlu0 %1643
    %1645 = vrot.lane.b32.xlu0 %v1582, 126
    %v1646 = vpop.permute.xlu0 %1645
    %1647 = vrot.lane.b32.xlu0 %v1550, 126
    %v1648 = vpop.permute.xlu0 %1647
    %1649 = vrot.lane.b32.xlu0 %v1590, 126
    %v1650 = vpop.permute.xlu0 %1649
    %1651 = vrot.lane.b32.xlu0 %v1583, 126
    %v1652 = vpop.permute.xlu0 %1651
    %1653 = vrot.lane.b32.xlu0 %v1551, 126
    %v1654 = vpop.permute.xlu0 %1653
    %1655 = vrot.lane.b32.xlu0 %v1591, 126
    %v1656 = vpop.permute.xlu0 %1655
    %1657 = vrot.lane.b32.xlu0 %v1584, 126
    %v1658 = vpop.permute.xlu0 %1657
    %1659 = vrot.lane.b32.xlu0 %v1552, 126
    %v1660 = vpop.permute.xlu0 %1659
    %1661 = vrot.lane.b32.xlu0 %v1592, 126
    %v1662 = vpop.permute.xlu0 %1661
    %1663 = vrot.lane.b32.xlu0 %v1585, 126
    %v1664 = vpop.permute.xlu0 %1663
    %1665 = vrot.lane.b32.xlu0 %v1553, 126
    %v1666 = vpop.permute.xlu0 %1665
    %1667 = vrot.lane.b32.xlu0 %v1593, 126
    %v1668 = vpop.permute.xlu0 %1667
    %1669 = vrot.lane.b32.xlu0 %v1586, 126
    %v1670 = vpop.permute.xlu0 %1669
    %1671 = vrot.lane.b32.xlu0 %v1554, 126
    %v1672 = vpop.permute.xlu0 %1671
    %1673 = vrot.lane.b32.xlu0 %v1594, 126
    %v1674 = vpop.permute.xlu0 %1673
    %v1675 = vsel %vm359, %v1628, %v1630
    %v1676 = vsel %vm359, %v1630, %v1632
    %v1677 = vsel %vm359, %v1634, %v1636
    %v1678 = vsel %vm359, %v1636, %v1638
    %v1679 = vsel %vm359, %v1640, %v1642
    %v1680 = vsel %vm359, %v1642, %v1644
    %v1681 = vsel %vm359, %v1646, %v1648
    %v1682 = vsel %vm359, %v1648, %v1650
    %v1683 = vsel %vm359, %v1652, %v1654
    %v1684 = vsel %vm359, %v1654, %v1656
    %v1685 = vsel %vm359, %v1658, %v1660
    %v1686 = vsel %vm359, %v1660, %v1662
    %v1687 = vsel %vm359, %v1664, %v1666
    %v1688 = vsel %vm359, %v1666, %v1668
    %v1689 = vsel %vm359, %v1670, %v1672
    %v1690 = vsel %vm359, %v1672, %v1674
    %v1707 = vsel %vm293, %v1675, 0.0
    %v1708 = vsel %vm294, %v1676, 0.0
    %v1709 = vsel %vm293, %v1677, 0.0
    %v1710 = vsel %vm294, %v1678, 0.0
    %v1711 = vsel %vm293, %v1679, 0.0
    %v1712 = vsel %vm294, %v1680, 0.0
    %v1713 = vsel %vm293, %v1681, 0.0
    %v1714 = vsel %vm294, %v1682, 0.0
    %v1715 = vsel %vm293, %v1683, 0.0
    %v1716 = vsel %vm294, %v1684, 0.0
    %v1717 = vsel %vm293, %v1685, 0.0
    %v1718 = vsel %vm294, %v1686, 0.0
    %v1719 = vsel %vm293, %v1687, 0.0
    %v1720 = vsel %vm294, %v1688, 0.0
    %v1721 = vsel %vm293, %v1689, 0.0
    %v1722 = vsel %vm294, %v1690, 0.0
    %1723 = vrot.lane.b32.xlu0 %v1579, 112
    %v1724 = vpop.permute.xlu0 %1723
    %1725 = vrot.lane.b32.xlu0 %v1547, 112
    %v1726 = vpop.permute.xlu0 %1725
    %1727 = vrot.lane.b32.xlu0 %v1587, 112
    %v1728 = vpop.permute.xlu0 %1727
    %1729 = vrot.lane.b32.xlu0 %v1580, 112
    %v1730 = vpop.permute.xlu0 %1729
    %1731 = vrot.lane.b32.xlu0 %v1548, 112
    %v1732 = vpop.permute.xlu0 %1731
    %1733 = vrot.lane.b32.xlu0 %v1588, 112
    %v1734 = vpop.permute.xlu0 %1733
    %1735 = vrot.lane.b32.xlu0 %v1581, 112
    %v1736 = vpop.permute.xlu0 %1735
    %1737 = vrot.lane.b32.xlu0 %v1549, 112
    %v1738 = vpop.permute.xlu0 %1737
    %1739 = vrot.lane.b32.xlu0 %v1589, 112
    %v1740 = vpop.permute.xlu0 %1739
    %1741 = vrot.lane.b32.xlu0 %v1582, 112
    %v1742 = vpop.permute.xlu0 %1741
    %1743 = vrot.lane.b32.xlu0 %v1550, 112
    %v1744 = vpop.permute.xlu0 %1743
    %1745 = vrot.lane.b32.xlu0 %v1590, 112
    %v1746 = vpop.permute.xlu0 %1745
    %1747 = vrot.lane.b32.xlu0 %v1583, 112
    %v1748 = vpop.permute.xlu0 %1747
    %1749 = vrot.lane.b32.xlu0 %v1551, 112
    %v1750 = vpop.permute.xlu0 %1749
    %1751 = vrot.lane.b32.xlu0 %v1591, 112
    %v1752 = vpop.permute.xlu0 %1751
    %1753 = vrot.lane.b32.xlu0 %v1584, 112
    %v1754 = vpop.permute.xlu0 %1753
    %1755 = vrot.lane.b32.xlu0 %v1552, 112
    %v1756 = vpop.permute.xlu0 %1755
    %1757 = vrot.lane.b32.xlu0 %v1592, 112
    %v1758 = vpop.permute.xlu0 %1757
    %1759 = vrot.lane.b32.xlu0 %v1585, 112
    %v1760 = vpop.permute.xlu0 %1759
    %1761 = vrot.lane.b32.xlu0 %v1553, 112
    %v1762 = vpop.permute.xlu0 %1761
    %1763 = vrot.lane.b32.xlu0 %v1593, 112
    %v1764 = vpop.permute.xlu0 %1763
    %1765 = vrot.lane.b32.xlu0 %v1586, 112
    %v1766 = vpop.permute.xlu0 %1765
    %1767 = vrot.lane.b32.xlu0 %v1554, 112
    %v1768 = vpop.permute.xlu0 %1767
    %1769 = vrot.lane.b32.xlu0 %v1594, 112
    %v1770 = vpop.permute.xlu0 %1769
    %v1771 = vsel %vm456, %v1724, %v1726
    %v1772 = vsel %vm456, %v1726, %v1728
    %v1773 = vsel %vm456, %v1730, %v1732
    %v1774 = vsel %vm456, %v1732, %v1734
    %v1775 = vsel %vm456, %v1736, %v1738
    %v1776 = vsel %vm456, %v1738, %v1740
    %v1777 = vsel %vm456, %v1742, %v1744
    %v1778 = vsel %vm456, %v1744, %v1746
    %v1779 = vsel %vm456, %v1748, %v1750
    %v1780 = vsel %vm456, %v1750, %v1752
    %v1781 = vsel %vm456, %v1754, %v1756
    %v1782 = vsel %vm456, %v1756, %v1758
    %v1783 = vsel %vm456, %v1760, %v1762
    %v1784 = vsel %vm456, %v1762, %v1764
    %v1785 = vsel %vm456, %v1766, %v1768
    %v1786 = vsel %vm456, %v1768, %v1770
    %v1803 = vsel %vm271, %v1771, 0.0
    %v1804 = vsel %vm272, %v1772, 0.0
    %v1805 = vsel %vm271, %v1773, 0.0
    %v1806 = vsel %vm272, %v1774, 0.0
    %v1807 = vsel %vm271, %v1775, 0.0
    %v1808 = vsel %vm272, %v1776, 0.0
    %v1809 = vsel %vm271, %v1777, 0.0
    %v1810 = vsel %vm272, %v1778, 0.0
    %v1811 = vsel %vm271, %v1779, 0.0
    %v1812 = vsel %vm272, %v1780, 0.0
    %v1813 = vsel %vm271, %v1781, 0.0
    %v1814 = vsel %vm272, %v1782, 0.0
    %v1815 = vsel %vm271, %v1783, 0.0
    %v1816 = vsel %vm272, %v1784, 0.0
    %v1817 = vsel %vm271, %v1785, 0.0
    %v1818 = vsel %vm272, %v1786, 0.0
    %1819 = vrot.lane.b32.xlu0 %v1579, 110
    %v1820 = vpop.permute.xlu0 %1819
    %1821 = vrot.lane.b32.xlu0 %v1547, 110
    %v1822 = vpop.permute.xlu0 %1821
    %1823 = vrot.lane.b32.xlu0 %v1587, 110
    %v1824 = vpop.permute.xlu0 %1823
    %1825 = vrot.lane.b32.xlu0 %v1580, 110
    %v1826 = vpop.permute.xlu0 %1825
    %1827 = vrot.lane.b32.xlu0 %v1548, 110
    %v1828 = vpop.permute.xlu0 %1827
    %1829 = vrot.lane.b32.xlu0 %v1588, 110
    %v1830 = vpop.permute.xlu0 %1829
    %1831 = vrot.lane.b32.xlu0 %v1581, 110
    %v1832 = vpop.permute.xlu0 %1831
    %1833 = vrot.lane.b32.xlu0 %v1549, 110
    %v1834 = vpop.permute.xlu0 %1833
    %1835 = vrot.lane.b32.xlu0 %v1589, 110
    %v1836 = vpop.permute.xlu0 %1835
    %1837 = vrot.lane.b32.xlu0 %v1582, 110
    %v1838 = vpop.permute.xlu0 %1837
    %1839 = vrot.lane.b32.xlu0 %v1550, 110
    %v1840 = vpop.permute.xlu0 %1839
    %1841 = vrot.lane.b32.xlu0 %v1590, 110
    %v1842 = vpop.permute.xlu0 %1841
    %1843 = vrot.lane.b32.xlu0 %v1583, 110
    %v1844 = vpop.permute.xlu0 %1843
    %1845 = vrot.lane.b32.xlu0 %v1551, 110
    %v1846 = vpop.permute.xlu0 %1845
    %1847 = vrot.lane.b32.xlu0 %v1591, 110
    %v1848 = vpop.permute.xlu0 %1847
    %1849 = vrot.lane.b32.xlu0 %v1584, 110
    %v1850 = vpop.permute.xlu0 %1849
    %1851 = vrot.lane.b32.xlu0 %v1552, 110
    %v1852 = vpop.permute.xlu0 %1851
    %1853 = vrot.lane.b32.xlu0 %v1592, 110
    %v1854 = vpop.permute.xlu0 %1853
    %1855 = vrot.lane.b32.xlu0 %v1585, 110
    %v1856 = vpop.permute.xlu0 %1855
    %1857 = vrot.lane.b32.xlu0 %v1553, 110
    %v1858 = vpop.permute.xlu0 %1857
    %1859 = vrot.lane.b32.xlu0 %v1593, 110
    %v1860 = vpop.permute.xlu0 %1859
    %1861 = vrot.lane.b32.xlu0 %v1586, 110
    %v1862 = vpop.permute.xlu0 %1861
    %1863 = vrot.lane.b32.xlu0 %v1554, 110
    %v1864 = vpop.permute.xlu0 %1863
    %1865 = vrot.lane.b32.xlu0 %v1594, 110
    %v1866 = vpop.permute.xlu0 %1865
    %v1867 = vsel %vm553, %v1820, %v1822
    %v1868 = vsel %vm553, %v1822, %v1824
    %v1869 = vsel %vm553, %v1826, %v1828
    %v1870 = vsel %vm553, %v1828, %v1830
    %v1871 = vsel %vm553, %v1832, %v1834
    %v1872 = vsel %vm553, %v1834, %v1836
    %v1873 = vsel %vm553, %v1838, %v1840
    %v1874 = vsel %vm553, %v1840, %v1842
    %v1875 = vsel %vm553, %v1844, %v1846
    %v1876 = vsel %vm553, %v1846, %v1848
    %v1877 = vsel %vm553, %v1850, %v1852
    %v1878 = vsel %vm553, %v1852, %v1854
    %v1879 = vsel %vm553, %v1856, %v1858
    %v1880 = vsel %vm553, %v1858, %v1860
    %v1881 = vsel %vm553, %v1862, %v1864
    %v1882 = vsel %vm553, %v1864, %v1866
    %v1899 = vsel %vm293, %v1867, 0.0
    %v1900 = vsel %vm294, %v1868, 0.0
    %v1901 = vsel %vm293, %v1869, 0.0
    %v1902 = vsel %vm294, %v1870, 0.0
    %v1903 = vsel %vm293, %v1871, 0.0
    %v1904 = vsel %vm294, %v1872, 0.0
    %v1905 = vsel %vm293, %v1873, 0.0
    %v1906 = vsel %vm294, %v1874, 0.0
    %v1907 = vsel %vm293, %v1875, 0.0
    %v1908 = vsel %vm294, %v1876, 0.0
    %v1909 = vsel %vm293, %v1877, 0.0
    %v1910 = vsel %vm294, %v1878, 0.0
    %v1911 = vsel %vm293, %v1879, 0.0
    %v1912 = vsel %vm294, %v1880, 0.0
    %v1913 = vsel %vm293, %v1881, 0.0
    %v1914 = vsel %vm294, %v1882, 0.0
    %1915 = vrot.lane.b32.xlu0 %v1579, 96
    %v1916 = vpop.permute.xlu0 %1915
    %1917 = vrot.lane.b32.xlu0 %v1547, 96
    %v1918 = vpop.permute.xlu0 %1917
    %1919 = vrot.lane.b32.xlu0 %v1587, 96
    %v1920 = vpop.permute.xlu0 %1919
    %1921 = vrot.lane.b32.xlu0 %v1580, 96
    %v1922 = vpop.permute.xlu0 %1921
    %1923 = vrot.lane.b32.xlu0 %v1548, 96
    %v1924 = vpop.permute.xlu0 %1923
    %1925 = vrot.lane.b32.xlu0 %v1588, 96
    %v1926 = vpop.permute.xlu0 %1925
    %1927 = vrot.lane.b32.xlu0 %v1581, 96
    %v1928 = vpop.permute.xlu0 %1927
    %1929 = vrot.lane.b32.xlu0 %v1549, 96
    %v1930 = vpop.permute.xlu0 %1929
    %1931 = vrot.lane.b32.xlu0 %v1589, 96
    %v1932 = vpop.permute.xlu0 %1931
    %1933 = vrot.lane.b32.xlu0 %v1582, 96
    %v1934 = vpop.permute.xlu0 %1933
    %1935 = vrot.lane.b32.xlu0 %v1550, 96
    %v1936 = vpop.permute.xlu0 %1935
    %1937 = vrot.lane.b32.xlu0 %v1590, 96
    %v1938 = vpop.permute.xlu0 %1937
    %1939 = vrot.lane.b32.xlu0 %v1583, 96
    %v1940 = vpop.permute.xlu0 %1939
    %1941 = vrot.lane.b32.xlu0 %v1551, 96
    %v1942 = vpop.permute.xlu0 %1941
    %1943 = vrot.lane.b32.xlu0 %v1591, 96
    %v1944 = vpop.permute.xlu0 %1943
    %1945 = vrot.lane.b32.xlu0 %v1584, 96
    %v1946 = vpop.permute.xlu0 %1945
    %1947 = vrot.lane.b32.xlu0 %v1552, 96
    %v1948 = vpop.permute.xlu0 %1947
    %1949 = vrot.lane.b32.xlu0 %v1592, 96
    %v1950 = vpop.permute.xlu0 %1949
    %1951 = vrot.lane.b32.xlu0 %v1585, 96
    %v1952 = vpop.permute.xlu0 %1951
    %1953 = vrot.lane.b32.xlu0 %v1553, 96
    %v1954 = vpop.permute.xlu0 %1953
    %1955 = vrot.lane.b32.xlu0 %v1593, 96
    %v1956 = vpop.permute.xlu0 %1955
    %1957 = vrot.lane.b32.xlu0 %v1586, 96
    %v1958 = vpop.permute.xlu0 %1957
    %1959 = vrot.lane.b32.xlu0 %v1554, 96
    %v1960 = vpop.permute.xlu0 %1959
    %1961 = vrot.lane.b32.xlu0 %v1594, 96
    %v1962 = vpop.permute.xlu0 %1961
    %v1963 = vsel %vm650, %v1916, %v1918
    %v1964 = vsel %vm650, %v1918, %v1920
    %v1965 = vsel %vm650, %v1922, %v1924
    %v1966 = vsel %vm650, %v1924, %v1926
    %v1967 = vsel %vm650, %v1928, %v1930
    %v1968 = vsel %vm650, %v1930, %v1932
    %v1969 = vsel %vm650, %v1934, %v1936
    %v1970 = vsel %vm650, %v1936, %v1938
    %v1971 = vsel %vm650, %v1940, %v1942
    %v1972 = vsel %vm650, %v1942, %v1944
    %v1973 = vsel %vm650, %v1946, %v1948
    %v1974 = vsel %vm650, %v1948, %v1950
    %v1975 = vsel %vm650, %v1952, %v1954
    %v1976 = vsel %vm650, %v1954, %v1956
    %v1977 = vsel %vm650, %v1958, %v1960
    %v1978 = vsel %vm650, %v1960, %v1962
    %v1995 = vsel %vm271, %v1963, 0.0
    %v1996 = vsel %vm272, %v1964, 0.0
    %v1997 = vsel %vm271, %v1965, 0.0
    %v1998 = vsel %vm272, %v1966, 0.0
    %v1999 = vsel %vm271, %v1967, 0.0
    %v2000 = vsel %vm272, %v1968, 0.0
    %v2001 = vsel %vm271, %v1969, 0.0
    %v2002 = vsel %vm272, %v1970, 0.0
    %v2003 = vsel %vm271, %v1971, 0.0
    %v2004 = vsel %vm272, %v1972, 0.0
    %v2005 = vsel %vm271, %v1973, 0.0
    %v2006 = vsel %vm272, %v1974, 0.0
    %v2007 = vsel %vm271, %v1975, 0.0
    %v2008 = vsel %vm272, %v1976, 0.0
    %v2009 = vsel %vm271, %v1977, 0.0
    %v2010 = vsel %vm272, %v1978, 0.0
    %2011 = vrot.lane.b32.xlu0 %v1579, 94
    %v2012 = vpop.permute.xlu0 %2011
    %2013 = vrot.lane.b32.xlu0 %v1547, 94
    %v2014 = vpop.permute.xlu0 %2013
    %2015 = vrot.lane.b32.xlu0 %v1587, 94
    %v2016 = vpop.permute.xlu0 %2015
    %2017 = vrot.lane.b32.xlu0 %v1580, 94
    %v2018 = vpop.permute.xlu0 %2017
    %2019 = vrot.lane.b32.xlu0 %v1548, 94
    %v2020 = vpop.permute.xlu0 %2019
    %2021 = vrot.lane.b32.xlu0 %v1588, 94
    %v2022 = vpop.permute.xlu0 %2021
    %2023 = vrot.lane.b32.xlu0 %v1581, 94
    %v2024 = vpop.permute.xlu0 %2023
    %2025 = vrot.lane.b32.xlu0 %v1549, 94
    %v2026 = vpop.permute.xlu0 %2025
    %2027 = vrot.lane.b32.xlu0 %v1589, 94
    %v2028 = vpop.permute.xlu0 %2027
    %2029 = vrot.lane.b32.xlu0 %v1582, 94
    %v2030 = vpop.permute.xlu0 %2029
    %2031 = vrot.lane.b32.xlu0 %v1550, 94
    %v2032 = vpop.permute.xlu0 %2031
    %2033 = vrot.lane.b32.xlu0 %v1590, 94
    %v2034 = vpop.permute.xlu0 %2033
    %2035 = vrot.lane.b32.xlu0 %v1583, 94
    %v2036 = vpop.permute.xlu0 %2035
    %2037 = vrot.lane.b32.xlu0 %v1551, 94
    %v2038 = vpop.permute.xlu0 %2037
    %2039 = vrot.lane.b32.xlu0 %v1591, 94
    %v2040 = vpop.permute.xlu0 %2039
    %2041 = vrot.lane.b32.xlu0 %v1584, 94
    %v2042 = vpop.permute.xlu0 %2041
    %2043 = vrot.lane.b32.xlu0 %v1552, 94
    %v2044 = vpop.permute.xlu0 %2043
    %2045 = vrot.lane.b32.xlu0 %v1592, 94
    %v2046 = vpop.permute.xlu0 %2045
    %2047 = vrot.lane.b32.xlu0 %v1585, 94
    %v2048 = vpop.permute.xlu0 %2047
    %2049 = vrot.lane.b32.xlu0 %v1553, 94
    %v2050 = vpop.permute.xlu0 %2049
    %2051 = vrot.lane.b32.xlu0 %v1593, 94
    %v2052 = vpop.permute.xlu0 %2051
    %2053 = vrot.lane.b32.xlu0 %v1586, 94
    %v2054 = vpop.permute.xlu0 %2053
    %2055 = vrot.lane.b32.xlu0 %v1554, 94
    %v2056 = vpop.permute.xlu0 %2055
    %2057 = vrot.lane.b32.xlu0 %v1594, 94
    %v2058 = vpop.permute.xlu0 %2057
    %v2059 = vsel %vm747, %v2012, %v2014
    %v2060 = vsel %vm747, %v2014, %v2016
    %v2061 = vsel %vm747, %v2018, %v2020
    %v2062 = vsel %vm747, %v2020, %v2022
    %v2063 = vsel %vm747, %v2024, %v2026
    %v2064 = vsel %vm747, %v2026, %v2028
    %v2065 = vsel %vm747, %v2030, %v2032
    %v2066 = vsel %vm747, %v2032, %v2034
    %v2067 = vsel %vm747, %v2036, %v2038
    %v2068 = vsel %vm747, %v2038, %v2040
    %v2069 = vsel %vm747, %v2042, %v2044
    %v2070 = vsel %vm747, %v2044, %v2046
    %v2071 = vsel %vm747, %v2048, %v2050
    %v2072 = vsel %vm747, %v2050, %v2052
    %v2073 = vsel %vm747, %v2054, %v2056
    %v2074 = vsel %vm747, %v2056, %v2058
    %v2091 = vsel %vm293, %v2059, 0.0
    %v2092 = vsel %vm294, %v2060, 0.0
    %v2093 = vsel %vm293, %v2061, 0.0
    %v2094 = vsel %vm294, %v2062, 0.0
    %v2095 = vsel %vm293, %v2063, 0.0
    %v2096 = vsel %vm294, %v2064, 0.0
    %v2097 = vsel %vm293, %v2065, 0.0
    %v2098 = vsel %vm294, %v2066, 0.0
    %v2099 = vsel %vm293, %v2067, 0.0
    %v2100 = vsel %vm294, %v2068, 0.0
    %v2101 = vsel %vm293, %v2069, 0.0
    %v2102 = vsel %vm294, %v2070, 0.0
    %v2103 = vsel %vm293, %v2071, 0.0
    %v2104 = vsel %vm294, %v2072, 0.0
    %v2105 = vsel %vm293, %v2073, 0.0
    %v2106 = vsel %vm294, %v2074, 0.0
    %2107 = vrot.lane.b32.xlu0 %v1579, 127
    %v2108 = vpop.permute.xlu0 %2107
    %2109 = vrot.lane.b32.xlu0 %v1547, 127
    %v2110 = vpop.permute.xlu0 %2109
    %2111 = vrot.lane.b32.xlu0 %v1587, 127
    %v2112 = vpop.permute.xlu0 %2111
    %2113 = vrot.lane.b32.xlu0 %v1580, 127
    %v2114 = vpop.permute.xlu0 %2113
    %2115 = vrot.lane.b32.xlu0 %v1548, 127
    %v2116 = vpop.permute.xlu0 %2115
    %2117 = vrot.lane.b32.xlu0 %v1588, 127
    %v2118 = vpop.permute.xlu0 %2117
    %2119 = vrot.lane.b32.xlu0 %v1581, 127
    %v2120 = vpop.permute.xlu0 %2119
    %2121 = vrot.lane.b32.xlu0 %v1549, 127
    %v2122 = vpop.permute.xlu0 %2121
    %2123 = vrot.lane.b32.xlu0 %v1589, 127
    %v2124 = vpop.permute.xlu0 %2123
    %2125 = vrot.lane.b32.xlu0 %v1582, 127
    %v2126 = vpop.permute.xlu0 %2125
    %2127 = vrot.lane.b32.xlu0 %v1550, 127
    %v2128 = vpop.permute.xlu0 %2127
    %2129 = vrot.lane.b32.xlu0 %v1590, 127
    %v2130 = vpop.permute.xlu0 %2129
    %2131 = vrot.lane.b32.xlu0 %v1583, 127
    %v2132 = vpop.permute.xlu0 %2131
    %2133 = vrot.lane.b32.xlu0 %v1551, 127
    %v2134 = vpop.permute.xlu0 %2133
    %2135 = vrot.lane.b32.xlu0 %v1591, 127
    %v2136 = vpop.permute.xlu0 %2135
    %2137 = vrot.lane.b32.xlu0 %v1584, 127
    %v2138 = vpop.permute.xlu0 %2137
    %2139 = vrot.lane.b32.xlu0 %v1552, 127
    %v2140 = vpop.permute.xlu0 %2139
    %2141 = vrot.lane.b32.xlu0 %v1592, 127
    %v2142 = vpop.permute.xlu0 %2141
    %2143 = vrot.lane.b32.xlu0 %v1585, 127
    %v2144 = vpop.permute.xlu0 %2143
    %2145 = vrot.lane.b32.xlu0 %v1553, 127
    %v2146 = vpop.permute.xlu0 %2145
    %2147 = vrot.lane.b32.xlu0 %v1593, 127
    %v2148 = vpop.permute.xlu0 %2147
    %2149 = vrot.lane.b32.xlu0 %v1586, 127
    %v2150 = vpop.permute.xlu0 %2149
    %2151 = vrot.lane.b32.xlu0 %v1554, 127
    %v2152 = vpop.permute.xlu0 %2151
    %2153 = vrot.lane.b32.xlu0 %v1594, 127
    %v2154 = vpop.permute.xlu0 %2153
    %v2155 = vsel %vm844, %v2108, %v2110
    %v2156 = vsel %vm844, %v2110, %v2112
    %v2157 = vsel %vm844, %v2114, %v2116
    %v2158 = vsel %vm844, %v2116, %v2118
    %v2159 = vsel %vm844, %v2120, %v2122
    %v2160 = vsel %vm844, %v2122, %v2124
    %v2161 = vsel %vm844, %v2126, %v2128
    %v2162 = vsel %vm844, %v2128, %v2130
    %v2163 = vsel %vm844, %v2132, %v2134
    %v2164 = vsel %vm844, %v2134, %v2136
    %v2165 = vsel %vm844, %v2138, %v2140
    %v2166 = vsel %vm844, %v2140, %v2142
    %v2167 = vsel %vm844, %v2144, %v2146
    %v2168 = vsel %vm844, %v2146, %v2148
    %v2169 = vsel %vm844, %v2150, %v2152
    %v2170 = vsel %vm844, %v2152, %v2154
    %2187 = vrot.lane.b32.xlu0 %v1579, 111
    %v2188 = vpop.permute.xlu0 %2187
    %2189 = vrot.lane.b32.xlu0 %v1547, 111
    %v2190 = vpop.permute.xlu0 %2189
    %2191 = vrot.lane.b32.xlu0 %v1587, 111
    %v2192 = vpop.permute.xlu0 %2191
    %2193 = vrot.lane.b32.xlu0 %v1580, 111
    %v2194 = vpop.permute.xlu0 %2193
    %2195 = vrot.lane.b32.xlu0 %v1548, 111
    %v2196 = vpop.permute.xlu0 %2195
    %2197 = vrot.lane.b32.xlu0 %v1588, 111
    %v2198 = vpop.permute.xlu0 %2197
    %2199 = vrot.lane.b32.xlu0 %v1581, 111
    %v2200 = vpop.permute.xlu0 %2199
    %2201 = vrot.lane.b32.xlu0 %v1549, 111
    %v2202 = vpop.permute.xlu0 %2201
    %2203 = vrot.lane.b32.xlu0 %v1589, 111
    %v2204 = vpop.permute.xlu0 %2203
    %2205 = vrot.lane.b32.xlu0 %v1582, 111
    %v2206 = vpop.permute.xlu0 %2205
    %2207 = vrot.lane.b32.xlu0 %v1550, 111
    %v2208 = vpop.permute.xlu0 %2207
    %2209 = vrot.lane.b32.xlu0 %v1590, 111
    %v2210 = vpop.permute.xlu0 %2209
    %2211 = vrot.lane.b32.xlu0 %v1583, 111
    %v2212 = vpop.permute.xlu0 %2211
    %2213 = vrot.lane.b32.xlu0 %v1551, 111
    %v2214 = vpop.permute.xlu0 %2213
    %2215 = vrot.lane.b32.xlu0 %v1591, 111
    %v2216 = vpop.permute.xlu0 %2215
    %2217 = vrot.lane.b32.xlu0 %v1584, 111
    %v2218 = vpop.permute.xlu0 %2217
    %2219 = vrot.lane.b32.xlu0 %v1552, 111
    %v2220 = vpop.permute.xlu0 %2219
    %2221 = vrot.lane.b32.xlu0 %v1592, 111
    %v2222 = vpop.permute.xlu0 %2221
    %2223 = vrot.lane.b32.xlu0 %v1585, 111
    %v2224 = vpop.permute.xlu0 %2223
    %2225 = vrot.lane.b32.xlu0 %v1553, 111
    %v2226 = vpop.permute.xlu0 %2225
    %2227 = vrot.lane.b32.xlu0 %v1593, 111
    %v2228 = vpop.permute.xlu0 %2227
    %2229 = vrot.lane.b32.xlu0 %v1586, 111
    %v2230 = vpop.permute.xlu0 %2229
    %2231 = vrot.lane.b32.xlu0 %v1554, 111
    %v2232 = vpop.permute.xlu0 %2231
    %2233 = vrot.lane.b32.xlu0 %v1594, 111
    %v2234 = vpop.permute.xlu0 %2233
    %v2235 = vsel %vm925, %v2188, %v2190
    %v2236 = vsel %vm925, %v2190, %v2192
    %v2237 = vsel %vm925, %v2194, %v2196
    %v2238 = vsel %vm925, %v2196, %v2198
    %v2239 = vsel %vm925, %v2200, %v2202
    %v2240 = vsel %vm925, %v2202, %v2204
    %v2241 = vsel %vm925, %v2206, %v2208
    %v2242 = vsel %vm925, %v2208, %v2210
    %v2243 = vsel %vm925, %v2212, %v2214
    %v2244 = vsel %vm925, %v2214, %v2216
    %v2245 = vsel %vm925, %v2218, %v2220
    %v2246 = vsel %vm925, %v2220, %v2222
    %v2247 = vsel %vm925, %v2224, %v2226
    %v2248 = vsel %vm925, %v2226, %v2228
    %v2249 = vsel %vm925, %v2230, %v2232
    %v2250 = vsel %vm925, %v2232, %v2234
    %2267 = vrot.lane.b32.xlu0 %v1579, 95
    %v2268 = vpop.permute.xlu0 %2267
    %2269 = vrot.lane.b32.xlu0 %v1547, 95
    %v2270 = vpop.permute.xlu0 %2269
    %2271 = vrot.lane.b32.xlu0 %v1587, 95
    %v2272 = vpop.permute.xlu0 %2271
    %2273 = vrot.lane.b32.xlu0 %v1580, 95
    %v2274 = vpop.permute.xlu0 %2273
    %2275 = vrot.lane.b32.xlu0 %v1548, 95
    %v2276 = vpop.permute.xlu0 %2275
    %2277 = vrot.lane.b32.xlu0 %v1588, 95
    %v2278 = vpop.permute.xlu0 %2277
    %2279 = vrot.lane.b32.xlu0 %v1581, 95
    %v2280 = vpop.permute.xlu0 %2279
    %2281 = vrot.lane.b32.xlu0 %v1549, 95
    %v2282 = vpop.permute.xlu0 %2281
    %2283 = vrot.lane.b32.xlu0 %v1589, 95
    %v2284 = vpop.permute.xlu0 %2283
    %2285 = vrot.lane.b32.xlu0 %v1582, 95
    %v2286 = vpop.permute.xlu0 %2285
    %2287 = vrot.lane.b32.xlu0 %v1550, 95
    %v2288 = vpop.permute.xlu0 %2287
    %2289 = vrot.lane.b32.xlu0 %v1590, 95
    %v2290 = vpop.permute.xlu0 %2289
    %2291 = vrot.lane.b32.xlu0 %v1583, 95
    %v2292 = vpop.permute.xlu0 %2291
    %2293 = vrot.lane.b32.xlu0 %v1551, 95
    %v2294 = vpop.permute.xlu0 %2293
    %2295 = vrot.lane.b32.xlu0 %v1591, 95
    %v2296 = vpop.permute.xlu0 %2295
    %2297 = vrot.lane.b32.xlu0 %v1584, 95
    %v2298 = vpop.permute.xlu0 %2297
    %2299 = vrot.lane.b32.xlu0 %v1552, 95
    %v2300 = vpop.permute.xlu0 %2299
    %2301 = vrot.lane.b32.xlu0 %v1592, 95
    %v2302 = vpop.permute.xlu0 %2301
    %2303 = vrot.lane.b32.xlu0 %v1585, 95
    %v2304 = vpop.permute.xlu0 %2303
    %2305 = vrot.lane.b32.xlu0 %v1553, 95
    %v2306 = vpop.permute.xlu0 %2305
    %2307 = vrot.lane.b32.xlu0 %v1593, 95
    %v2308 = vpop.permute.xlu0 %2307
    %2309 = vrot.lane.b32.xlu0 %v1586, 95
    %v2310 = vpop.permute.xlu0 %2309
    %2311 = vrot.lane.b32.xlu0 %v1554, 95
    %v2312 = vpop.permute.xlu0 %2311
    %2313 = vrot.lane.b32.xlu0 %v1594, 95
    %v2314 = vpop.permute.xlu0 %2313
    %v2315 = vsel %vm1006, %v2268, %v2270
    %v2316 = vsel %vm1006, %v2270, %v2272
    %v2317 = vsel %vm1006, %v2274, %v2276
    %v2318 = vsel %vm1006, %v2276, %v2278
    %v2319 = vsel %vm1006, %v2280, %v2282
    %v2320 = vsel %vm1006, %v2282, %v2284
    %v2321 = vsel %vm1006, %v2286, %v2288
    %v2322 = vsel %vm1006, %v2288, %v2290
    %v2323 = vsel %vm1006, %v2292, %v2294
    %v2324 = vsel %vm1006, %v2294, %v2296
    %v2325 = vsel %vm1006, %v2298, %v2300
    %v2326 = vsel %vm1006, %v2300, %v2302
    %v2327 = vsel %vm1006, %v2304, %v2306
    %v2328 = vsel %vm1006, %v2306, %v2308
    %v2329 = vsel %vm1006, %v2310, %v2312
    %v2330 = vsel %vm1006, %v2312, %v2314
    %v2347 = vpack.c.bf16 %v1597, %v1595
    %v2348 = vpack.c.bf16 %v1598, %v1596
    %v2349 = vpack.c.bf16 %v1601, %v1599
    %v2350 = vpack.c.bf16 %v1602, %v1600
    %v2351 = vpack.c.bf16 %v1605, %v1603
    %v2352 = vpack.c.bf16 %v1606, %v1604
    %v2353 = vpack.c.bf16 %v1609, %v1607
    %v2354 = vpack.c.bf16 %v1610, %v1608
    %v2355 = vpack.c.bf16 %v2157, %v2155
    %v2356 = vpack.c.bf16 %v2158, %v2156
    %v2357 = vpack.c.bf16 %v2161, %v2159
    %v2358 = vpack.c.bf16 %v2162, %v2160
    %v2359 = vpack.c.bf16 %v2165, %v2163
    %v2360 = vpack.c.bf16 %v2166, %v2164
    %v2361 = vpack.c.bf16 %v2169, %v2167
    %v2362 = vpack.c.bf16 %v2170, %v2168
    %v2363 = vpack.c.bf16 %v1709, %v1707
    %v2364 = vpack.c.bf16 %v1710, %v1708
    %v2365 = vpack.c.bf16 %v1713, %v1711
    %v2366 = vpack.c.bf16 %v1714, %v1712
    %v2367 = vpack.c.bf16 %v1717, %v1715
    %v2368 = vpack.c.bf16 %v1718, %v1716
    %v2369 = vpack.c.bf16 %v1721, %v1719
    %v2370 = vpack.c.bf16 %v1722, %v1720
    %v2371 = vpack.c.bf16 %v1805, %v1803
    %v2372 = vpack.c.bf16 %v1806, %v1804
    %v2373 = vpack.c.bf16 %v1809, %v1807
    %v2374 = vpack.c.bf16 %v1810, %v1808
    %v2375 = vpack.c.bf16 %v1813, %v1811
    %v2376 = vpack.c.bf16 %v1814, %v1812
    %v2377 = vpack.c.bf16 %v1817, %v1815
    %v2378 = vpack.c.bf16 %v1818, %v1816
    %v2379 = vpack.c.bf16 %v2237, %v2235
    %v2380 = vpack.c.bf16 %v2238, %v2236
    %v2381 = vpack.c.bf16 %v2241, %v2239
    %v2382 = vpack.c.bf16 %v2242, %v2240
    %v2383 = vpack.c.bf16 %v2245, %v2243
    %v2384 = vpack.c.bf16 %v2246, %v2244
    %v2385 = vpack.c.bf16 %v2249, %v2247
    %v2386 = vpack.c.bf16 %v2250, %v2248
    %v2387 = vpack.c.bf16 %v1901, %v1899
    %v2388 = vpack.c.bf16 %v1902, %v1900
    %v2389 = vpack.c.bf16 %v1905, %v1903
    %v2390 = vpack.c.bf16 %v1906, %v1904
    %v2391 = vpack.c.bf16 %v1909, %v1907
    %v2392 = vpack.c.bf16 %v1910, %v1908
    %v2393 = vpack.c.bf16 %v1913, %v1911
    %v2394 = vpack.c.bf16 %v1914, %v1912
    %v2395 = vpack.c.bf16 %v1997, %v1995
    %v2396 = vpack.c.bf16 %v1998, %v1996
    %v2397 = vpack.c.bf16 %v2001, %v1999
    %v2398 = vpack.c.bf16 %v2002, %v2000
    %v2399 = vpack.c.bf16 %v2005, %v2003
    %v2400 = vpack.c.bf16 %v2006, %v2004
    %v2401 = vpack.c.bf16 %v2009, %v2007
    %v2402 = vpack.c.bf16 %v2010, %v2008
    %v2403 = vpack.c.bf16 %v2317, %v2315
    %v2404 = vpack.c.bf16 %v2318, %v2316
    %v2405 = vpack.c.bf16 %v2321, %v2319
    %v2406 = vpack.c.bf16 %v2322, %v2320
    %v2407 = vpack.c.bf16 %v2325, %v2323
    %v2408 = vpack.c.bf16 %v2326, %v2324
    %v2409 = vpack.c.bf16 %v2329, %v2327
    %v2410 = vpack.c.bf16 %v2330, %v2328
    %v2411 = vpack.c.bf16 %v2093, %v2091
    %v2412 = vpack.c.bf16 %v2094, %v2092
    %v2413 = vpack.c.bf16 %v2097, %v2095
    %v2414 = vpack.c.bf16 %v2098, %v2096
    %v2415 = vpack.c.bf16 %v2101, %v2099
    %v2416 = vpack.c.bf16 %v2102, %v2100
    %v2417 = vpack.c.bf16 %v2105, %v2103
    %v2418 = vpack.c.bf16 %v2106, %v2104
    %2420 = vset.pattern.permute.xlu0 0
    %2421 = vperm.xlu0 %2420, %v146
    %v2422 = vpop.permute.xlu0 %2421
    %2425 = vset.pattern.permute.xlu0 0
    %2426 = vperm.xlu0 %2425, %v147
    %v2427 = vpop.permute.xlu0 %2426
    %2430 = vset.pattern.permute.xlu0 0
    %2431 = vperm.xlu0 %2430, %v148
    %v2432 = vpop.permute.xlu0 %2431
    %2435 = vset.pattern.permute.xlu0 0
    %2436 = vperm.xlu0 %2435, %v149
    %v2437 = vpop.permute.xlu0 %2436
    %2440 = vset.pattern.permute.xlu0 0
    %2441 = vperm.xlu0 %2440, %v150
    %v2442 = vpop.permute.xlu0 %2441
    %2445 = vset.pattern.permute.xlu0 0
    %2446 = vperm.xlu0 %2445, %v151
    %v2447 = vpop.permute.xlu0 %2446
    %2450 = vset.pattern.permute.xlu0 0
    %2451 = vperm.xlu0 %2450, %v152
    %v2452 = vpop.permute.xlu0 %2451
    %2455 = vset.pattern.permute.xlu0 0
    %2456 = vperm.xlu0 %2455, %v153
    %v2457 = vpop.permute.xlu0 %2456
    %v2483 = vunpack.c.l.b16 %v114
    %v2484 = vunpack.c.h.b16 %v114
    %v2485 = vunpack.c.l.b16 %v115
    %v2486 = vunpack.c.h.b16 %v115
    %v2487 = vunpack.c.l.b16 %v116
    %v2488 = vunpack.c.l.b16 %v117
    %v2489 = vunpack.c.h.b16 %v117
    %v2490 = vunpack.c.l.b16 %v118
    %v2491 = vunpack.c.h.b16 %v118
    %v2492 = vunpack.c.l.b16 %v119
    %v2493 = vunpack.c.l.b16 %v120
    %v2494 = vunpack.c.h.b16 %v120
    %v2495 = vunpack.c.l.b16 %v121
    %v2496 = vunpack.c.h.b16 %v121
    %v2497 = vunpack.c.l.b16 %v122
    %v2498 = vunpack.c.l.b16 %v123
    %v2499 = vunpack.c.h.b16 %v123
    %v2500 = vunpack.c.l.b16 %v124
    %v2501 = vunpack.c.h.b16 %v124
    %v2502 = vunpack.c.l.b16 %v125
    %v2503 = vunpack.c.l.b16 %v126
    %v2504 = vunpack.c.h.b16 %v126
    %v2505 = vunpack.c.l.b16 %v127
    %v2506 = vunpack.c.h.b16 %v127
    %v2507 = vunpack.c.l.b16 %v128
    %v2508 = vunpack.c.l.b16 %v129
    %v2509 = vunpack.c.h.b16 %v129
    %v2510 = vunpack.c.l.b16 %v130
    %v2511 = vunpack.c.h.b16 %v130
    %v2512 = vunpack.c.l.b16 %v131
    %v2513 = vunpack.c.l.b16 %v132
    %v2514 = vunpack.c.h.b16 %v132
    %v2515 = vunpack.c.l.b16 %v133
    %v2516 = vunpack.c.h.b16 %v133
    %v2517 = vunpack.c.l.b16 %v134
    %v2518 = vunpack.c.l.b16 %v135
    %v2519 = vunpack.c.h.b16 %v135
    %v2520 = vunpack.c.l.b16 %v136
    %v2521 = vunpack.c.h.b16 %v136
    %v2522 = vunpack.c.l.b16 %v137
    %v2523 = vpack.c.b16 %v2488, %v2483
    %v2524 = vpack.c.b16 %v2489, %v2484
    %v2525 = vpack.c.b16 %v2490, %v2485
    %v2526 = vpack.c.b16 %v2491, %v2486
    %v2527 = vpack.c.b16 %v2492, %v2487
    %v2528 = vpack.c.b16 %v2498, %v2493
    %v2529 = vpack.c.b16 %v2499, %v2494
    %v2530 = vpack.c.b16 %v2500, %v2495
    %v2531 = vpack.c.b16 %v2501, %v2496
    %v2532 = vpack.c.b16 %v2502, %v2497
    %v2533 = vpack.c.b16 %v2508, %v2503
    %v2534 = vpack.c.b16 %v2509, %v2504
    %v2535 = vpack.c.b16 %v2510, %v2505
    %v2536 = vpack.c.b16 %v2511, %v2506
    %v2537 = vpack.c.b16 %v2512, %v2507
    %v2538 = vpack.c.b16 %v2518, %v2513
    %v2539 = vpack.c.b16 %v2519, %v2514
    %v2540 = vpack.c.b16 %v2520, %v2515
    %v2541 = vpack.c.b16 %v2521, %v2516
    %v2542 = vpack.c.b16 %v2522, %v2517
    %v2560 = vsel %vm1251, %v2527, 0
    %v2563 = vsel %vm1251, %v2532, 0
    %v2566 = vsel %vm1251, %v2537, 0
    %v2569 = vsel %vm1251, %v2542, 0
    %2571 = vmatprep.subr.bf16.mxu0 %v2348
    %2572 = vmatpush1.bf16.msra.mxu0 %v2347
    %2573 = vmatprep.subr.bf16.mxu0 %v2350
    %2574 = vmatpush1.bf16.msra.mxu0 %v2349
    %2575 = vmatprep.subr.bf16.mxu0 %v2352
    %2576 = vmatpush1.bf16.msra.mxu0 %v2351
    %2577 = vmatprep.subr.bf16.mxu0 %v2354
    %2578 = vmatpush1.bf16.msra.mxu0 %v2353
    %2579 = vmatprep.subr.bf16.mxu0 %v2356
    %2580 = vmatpush1.bf16.msra.mxu0 %v2355
    %2581 = vmatprep.subr.bf16.mxu0 %v2358
    %2582 = vmatpush1.bf16.msra.mxu0 %v2357
    %2583 = vmatprep.subr.bf16.mxu0 %v2360
    %2584 = vmatpush1.bf16.msra.mxu0 %v2359
    %2585 = vmatprep.subr.bf16.mxu0 %v2362
    %2586 = vmatpush1.bf16.msra.mxu0 %v2361
    %2587 = vmatprep.subr.bf16.mxu0 %v2364
    %2588 = vmatpush1.bf16.msra.mxu0 %v2363
    %2589 = vmatprep.subr.bf16.mxu0 %v2366
    %2590 = vmatpush1.bf16.msra.mxu0 %v2365
    %2591 = vmatprep.subr.bf16.mxu0 %v2368
    %2592 = vmatpush1.bf16.msra.mxu0 %v2367
    %2593 = vmatprep.subr.bf16.mxu0 %v2370
    %2594 = vmatpush1.bf16.msra.mxu0 %v2369
    %2595 = vmatprep.subr.bf16.mxu0 %v2372
    %2596 = vmatpush1.bf16.msra.mxu0 %v2371
    %2597 = vmatprep.subr.bf16.mxu0 %v2374
    %2598 = vmatpush1.bf16.msra.mxu0 %v2373
    %2599 = vmatprep.subr.bf16.mxu0 %v2376
    %2600 = vmatpush1.bf16.msra.mxu0 %v2375
    %2601 = vmatprep.subr.bf16.mxu0 %v2378
    %2602 = vmatpush1.bf16.msra.mxu0 %v2377
    %2603 = vmatprep.mubr.bf16.mxu0 %v2524
    %2604 = vmatmul.mubr.bf16.gmra.mrb[0].mxu0 %v2523
    %v2605 = vpop.f32.mrb[0].mxu0
    %v2606 = vadd.f32 %v2422, %v2605
    %v2607 = vpop.f32.mrb[0].mxu0
    %v2608 = vadd.f32 %v2422, %v2607
    %v2609 = vpop.f32.mrb[0].mxu0
    %v2610 = vadd.f32 %v2427, %v2609
    %v2611 = vpop.f32.mrb[0].mxu0
    %v2612 = vadd.f32 %v2427, %v2611
    %2613 = vmatprep.mubr.bf16.mxu0 %v2529
    %2614 = vmatmul.mubr.bf16.gmra.mrb[0].mxu0 %v2528
    %v2615 = vpop.f32.mrb[0].mxu0
    %v2616 = vadd.f32 %v2432, %v2615
    %v2617 = vpop.f32.mrb[0].mxu0
    %v2618 = vadd.f32 %v2432, %v2617
    %v2619 = vpop.f32.mrb[0].mxu0
    %v2620 = vadd.f32 %v2437, %v2619
    %v2621 = vpop.f32.mrb[0].mxu0
    %v2622 = vadd.f32 %v2437, %v2621
    %2623 = vmatprep.mubr.bf16.mxu0 %v2534
    %2624 = vmatmul.mubr.bf16.gmra.mrb[0].mxu0 %v2533
    %v2625 = vpop.f32.mrb[0].mxu0
    %v2626 = vadd.f32 %v2442, %v2625
    %v2627 = vpop.f32.mrb[0].mxu0
    %v2628 = vadd.f32 %v2442, %v2627
    %v2629 = vpop.f32.mrb[0].mxu0
    %v2630 = vadd.f32 %v2447, %v2629
    %v2631 = vpop.f32.mrb[0].mxu0
    %v2632 = vadd.f32 %v2447, %v2631
    %2633 = vmatprep.mubr.bf16.mxu0 %v2539
    %2634 = vmatmul.mubr.bf16.gmra.mrb[0].mxu0 %v2538
    %v2635 = vpop.f32.mrb[0].mxu0
    %v2636 = vadd.f32 %v2452, %v2635
    %v2637 = vpop.f32.mrb[0].mxu0
    %v2638 = vadd.f32 %v2452, %v2637
    %v2639 = vpop.f32.mrb[0].mxu0
    %v2640 = vadd.f32 %v2457, %v2639
    %v2641 = vpop.f32.mrb[0].mxu0
    %v2642 = vadd.f32 %v2457, %v2641
    %2643 = vdwg.mxu0
    %2644 = vmatprep.subr.bf16.mxu0 %v2380
    %2645 = vmatpush1.bf16.msra.mxu0 %v2379
    %2646 = vmatprep.subr.bf16.mxu0 %v2382
    %2647 = vmatpush1.bf16.msra.mxu0 %v2381
    %2648 = vmatprep.subr.bf16.mxu0 %v2384
    %2649 = vmatpush1.bf16.msra.mxu0 %v2383
    %2650 = vmatprep.subr.bf16.mxu0 %v2386
    %2651 = vmatpush1.bf16.msra.mxu0 %v2385
    %2652 = vmatprep.subr.bf16.mxu0 %v2388
    %2653 = vmatpush1.bf16.msra.mxu0 %v2387
    %2654 = vmatprep.subr.bf16.mxu0 %v2390
    %2655 = vmatpush1.bf16.msra.mxu0 %v2389
    %2656 = vmatprep.subr.bf16.mxu0 %v2392
    %2657 = vmatpush1.bf16.msra.mxu0 %v2391
    %2658 = vmatprep.subr.bf16.mxu0 %v2394
    %2659 = vmatpush1.bf16.msra.mxu0 %v2393
    %2660 = vmatprep.subr.bf16.mxu0 %v2396
    %2661 = vmatpush1.bf16.msra.mxu0 %v2395
    %2662 = vmatprep.subr.bf16.mxu0 %v2398
    %2663 = vmatpush1.bf16.msra.mxu0 %v2397
    %2664 = vmatprep.subr.bf16.mxu0 %v2400
    %2665 = vmatpush1.bf16.msra.mxu0 %v2399
    %2666 = vmatprep.subr.bf16.mxu0 %v2402
    %2667 = vmatpush1.bf16.msra.mxu0 %v2401
    %2668 = vmatprep.subr.bf16.mxu0 %v2404
    %2669 = vmatpush1.bf16.msra.mxu0 %v2403
    %2670 = vmatprep.subr.bf16.mxu0 %v2406
    %2671 = vmatpush1.bf16.msra.mxu0 %v2405
    %2672 = vmatprep.subr.bf16.mxu0 %v2408
    %2673 = vmatpush1.bf16.msra.mxu0 %v2407
    %2674 = vmatprep.subr.bf16.mxu0 %v2410
    %2675 = vmatpush1.bf16.msra.mxu0 %v2409
    %2676 = vmatprep.mubr.bf16.mxu0 %v2526
    %2677 = vmatmul.mubr.bf16.gmra.mrb[0].mxu0 %v2525
    %v2678 = vpop.f32.mrb[0].mxu0
    %v2679 = vadd.f32 %v2606, %v2678
    %v2680 = vpop.f32.mrb[0].mxu0
    %v2681 = vadd.f32 %v2608, %v2680
    %v2682 = vpop.f32.mrb[0].mxu0
    %v2683 = vadd.f32 %v2610, %v2682
    %v2684 = vpop.f32.mrb[0].mxu0
    %v2685 = vadd.f32 %v2612, %v2684
    %2686 = vmatprep.mubr.bf16.mxu0 %v2531
    %2687 = vmatmul.mubr.bf16.gmra.mrb[0].mxu0 %v2530
    %v2688 = vpop.f32.mrb[0].mxu0
    %v2689 = vadd.f32 %v2616, %v2688
    %v2690 = vpop.f32.mrb[0].mxu0
    %v2691 = vadd.f32 %v2618, %v2690
    %v2692 = vpop.f32.mrb[0].mxu0
    %v2693 = vadd.f32 %v2620, %v2692
    %v2694 = vpop.f32.mrb[0].mxu0
    %v2695 = vadd.f32 %v2622, %v2694
    %2696 = vmatprep.mubr.bf16.mxu0 %v2536
    %2697 = vmatmul.mubr.bf16.gmra.mrb[0].mxu0 %v2535
    %v2698 = vpop.f32.mrb[0].mxu0
    %v2699 = vadd.f32 %v2626, %v2698
    %v2700 = vpop.f32.mrb[0].mxu0
    %v2701 = vadd.f32 %v2628, %v2700
    %v2702 = vpop.f32.mrb[0].mxu0
    %v2703 = vadd.f32 %v2630, %v2702
    %v2704 = vpop.f32.mrb[0].mxu0
    %v2705 = vadd.f32 %v2632, %v2704
    %2706 = vmatprep.mubr.bf16.mxu0 %v2541
    %2707 = vmatmul.mubr.bf16.gmra.mrb[0].mxu0 %v2540
    %v2708 = vpop.f32.mrb[0].mxu0
    %v2709 = vadd.f32 %v2636, %v2708
    %v2710 = vpop.f32.mrb[0].mxu0
    %v2711 = vadd.f32 %v2638, %v2710
    %v2712 = vpop.f32.mrb[0].mxu0
    %v2713 = vadd.f32 %v2640, %v2712
    %v2714 = vpop.f32.mrb[0].mxu0
    %v2715 = vadd.f32 %v2642, %v2714
    %2716 = vdwg.mxu0
    %2717 = vmatprep.subr.bf16.mxu0 %v2412
    %2718 = vmatpush1.bf16.msra.mxu0 %v2411
    %2719 = vmatprep.subr.bf16.mxu0 %v2414
    %2720 = vmatpush1.bf16.msra.mxu0 %v2413
    %2721 = vmatprep.subr.bf16.mxu0 %v2416
    %2722 = vmatpush1.bf16.msra.mxu0 %v2415
    %2723 = vmatprep.subr.bf16.mxu0 %v2418
    %2724 = vmatpush1.bf16.msra.mxu0 %v2417
    %2725 = vmatprep.subr.bf16.mxu0 0
    %2726 = vmatpush1.bf16.msra.mxu0 0
    %2727 = vmatprep.subr.bf16.mxu0 0
    %2728 = vmatpush1.bf16.msra.mxu0 0
    %2729 = vmatprep.subr.bf16.mxu0 0
    %2730 = vmatpush1.bf16.msra.mxu0 0
    %2731 = vmatprep.subr.bf16.mxu0 0
    %2732 = vmatpush1.bf16.msra.mxu0 0
    %2733 = vmatprep.subr.bf16.mxu0 0
    %2734 = vmatpush1.bf16.msra.mxu0 0
    %2735 = vmatprep.subr.bf16.mxu0 0
    %2736 = vmatpush1.bf16.msra.mxu0 0
    %2737 = vmatprep.subr.bf16.mxu0 0
    %2738 = vmatpush1.bf16.msra.mxu0 0
    %2739 = vmatprep.subr.bf16.mxu0 0
    %2740 = vmatpush1.bf16.msra.mxu0 0
    %2741 = vmatprep.subr.bf16.mxu0 0
    %2742 = vmatpush1.bf16.msra.mxu0 0
    %2743 = vmatprep.subr.bf16.mxu0 0
    %2744 = vmatpush1.bf16.msra.mxu0 0
    %2745 = vmatprep.subr.bf16.mxu0 0
    %2746 = vmatpush1.bf16.msra.mxu0 0
    %2747 = vmatprep.subr.bf16.mxu0 0
    %2748 = vmatpush1.bf16.msra.mxu0 0
    %2749 = vmatprep.mubr.bf16.mxu0 0
    %2750 = vmatmul.mubr.bf16.gmra.mrb[0].mxu0 %v2560
    %v2751 = vpop.f32.mrb[0].mxu0
    %v2752 = vadd.f32 %v2679, %v2751
    %v2753 = vpop.f32.mrb[0].mxu0
    %v2754 = vadd.f32 %v2681, %v2753
    %v2755 = vpop.f32.mrb[0].mxu0
    %v2756 = vadd.f32 %v2683, %v2755
    %v2757 = vpop.f32.mrb[0].mxu0
    %v2758 = vadd.f32 %v2685, %v2757
    %2759 = vmatprep.mubr.bf16.mxu0 0
    %2760 = vmatmul.mubr.bf16.gmra.mrb[0].mxu0 %v2563
    %v2761 = vpop.f32.mrb[0].mxu0
    %v2762 = vadd.f32 %v2689, %v2761
    %v2763 = vpop.f32.mrb[0].mxu0
    %v2764 = vadd.f32 %v2691, %v2763
    %v2765 = vpop.f32.mrb[0].mxu0
    %v2766 = vadd.f32 %v2693, %v2765
    %v2767 = vpop.f32.mrb[0].mxu0
    %v2768 = vadd.f32 %v2695, %v2767
    %2769 = vmatprep.mubr.bf16.mxu0 0
    %2770 = vmatmul.mubr.bf16.gmra.mrb[0].mxu0 %v2566
    %v2771 = vpop.f32.mrb[0].mxu0
    %v2772 = vadd.f32 %v2699, %v2771
    %v2773 = vpop.f32.mrb[0].mxu0
    %v2774 = vadd.f32 %v2701, %v2773
    %v2775 = vpop.f32.mrb[0].mxu0
    %v2776 = vadd.f32 %v2703, %v2775
    %v2777 = vpop.f32.mrb[0].mxu0
    %v2778 = vadd.f32 %v2705, %v2777
    %2779 = vmatprep.mubr.bf16.mxu0 0
    %2780 = vmatmul.mubr.bf16.gmra.mrb[0].mxu0 %v2569
    %v2781 = vpop.f32.mrb[0].mxu0
    %v2782 = vadd.f32 %v2709, %v2781
    %v2783 = vpop.f32.mrb[0].mxu0
    %v2784 = vadd.f32 %v2711, %v2783
    %v2785 = vpop.f32.mrb[0].mxu0
    %v2786 = vadd.f32 %v2713, %v2785
    %v2787 = vpop.f32.mrb[0].mxu0
    %v2788 = vadd.f32 %v2715, %v2787
    %2789 = vdwg.mxu0
    %v2790 = vadd.f32 %v2752, %v154
    %v2791 = vadd.f32 %v2754, %v155
    %v2792 = vadd.f32 %v2756, %v156
    %v2793 = vadd.f32 %v2758, %v157
    %v2794 = vadd.f32 %v2762, %v158
    %v2795 = vadd.f32 %v2764, %v159
    %v2796 = vadd.f32 %v2766, %v160
    %v2797 = vadd.f32 %v2768, %v161
    %v2798 = vadd.f32 %v2772, %v162
    %v2799 = vadd.f32 %v2774, %v163
    %v2800 = vadd.f32 %v2776, %v164
    %v2801 = vadd.f32 %v2778, %v165
    %v2802 = vadd.f32 %v2782, %v166
    %v2803 = vadd.f32 %v2784, %v167
    %v2804 = vadd.f32 %v2786, %v168
    %v2805 = vadd.f32 %v2788, %v169
    %2806 = vst [vmem:[#allocation8] sm:$0xff] %v2790
    %2807 = vst [vmem:[#allocation8 + $0x8] sm:$0xff] %v2791
    %2808 = vst [vmem:[#allocation8 + $0x10] sm:$0xff] %v2792
    %2809 = vst [vmem:[#allocation8 + $0x18] sm:$0xff] %v2793
    %2810 = vst [vmem:[#allocation8 + $0x20] sm:$0xff] %v2794
    %2811 = vst [vmem:[#allocation8 + $0x28] sm:$0xff] %v2795
    %2812 = vst [vmem:[#allocation8 + $0x30] sm:$0xff] %v2796
    %2813 = vst [vmem:[#allocation8 + $0x38] sm:$0xff] %v2797
    %2814 = vst [vmem:[#allocation8 + $0x40] sm:$0xff] %v2798
    %2815 = vst [vmem:[#allocation8 + $0x48] sm:$0xff] %v2799
    %2816 = vst [vmem:[#allocation8 + $0x50] sm:$0xff] %v2800
    %2817 = vst [vmem:[#allocation8 + $0x58] sm:$0xff] %v2801
    %2818 = vst [vmem:[#allocation8 + $0x60] sm:$0xff] %v2802
    %2819 = vst [vmem:[#allocation8 + $0x68] sm:$0xff] %v2803
    %2820 = vst [vmem:[#allocation8 + $0x70] sm:$0xff] %v2804
    %2821 = vst [vmem:[#allocation8 + $0x78] sm:$0xff] %v2805
    %s2822 = scalar_lea.vmem [#allocation2], 128
    %v2823 = vld [vmem:[%s2822] sm:$0xff]
    %v2824 = vld [vmem:[%s2822 + $0x8] sm:$0xff]
    %v2825 = vld [vmem:[%s2822 + $0x10] sm:$0xff]
    %v2826 = vld [vmem:[%s2822 + $0x18] sm:$0xff]
    %v2827 = vld [vmem:[%s2822 + $0x20] sm:$0xff]
    %v2828 = vld [vmem:[%s2822 + $0x28] sm:$0xff]
    %v2829 = vld [vmem:[%s2822 + $0x30] sm:$0xff]
    %v2830 = vld [vmem:[%s2822 + $0x38] sm:$0xff]
    %v2831 = vld [vmem:[%s2822 + $0x40] sm:$0xff]
    %v2832 = vld [vmem:[%s2822 + $0x48] sm:$0xff]
    %v2833 = vld [vmem:[%s2822 + $0x50] sm:$0xff]
    %v2834 = vld [vmem:[%s2822 + $0x58] sm:$0xff]
    %v2835 = vld [vmem:[%s2822 + $0x60] sm:$0xff]
    %v2836 = vld [vmem:[%s2822 + $0x68] sm:$0xff]
    %v2837 = vld [vmem:[%s2822 + $0x70] sm:$0xff]
    %v2838 = vld [vmem:[%s2822 + $0x78] sm:$0xff]
    %2855 = vrot.lane.b32.xlu0 %v2823, 17
    %v2856 = vpop.permute.xlu0 %2855
    %2857 = vrot.lane.b32.xlu0 %v2824, 17
    %v2858 = vpop.permute.xlu0 %2857
    %2859 = vrot.lane.b32.xlu0 %v2825, 17
    %v2860 = vpop.permute.xlu0 %2859
    %2861 = vrot.lane.b32.xlu0 %v2826, 17
    %v2862 = vpop.permute.xlu0 %2861
    %2863 = vrot.lane.b32.xlu0 %v2827, 17
    %v2864 = vpop.permute.xlu0 %2863
    %2865 = vrot.lane.b32.xlu0 %v2828, 17
    %v2866 = vpop.permute.xlu0 %2865
    %2867 = vrot.lane.b32.xlu0 %v2829, 17
    %v2868 = vpop.permute.xlu0 %2867
    %2869 = vrot.lane.b32.xlu0 %v2830, 17
    %v2870 = vpop.permute.xlu0 %2869
    %2871 = vrot.lane.b32.xlu0 %v2831, 17
    %v2872 = vpop.permute.xlu0 %2871
    %2873 = vrot.lane.b32.xlu0 %v2832, 17
    %v2874 = vpop.permute.xlu0 %2873
    %2875 = vrot.lane.b32.xlu0 %v2833, 17
    %v2876 = vpop.permute.xlu0 %2875
    %2877 = vrot.lane.b32.xlu0 %v2834, 17
    %v2878 = vpop.permute.xlu0 %2877
    %2879 = vrot.lane.b32.xlu0 %v2835, 17
    %v2880 = vpop.permute.xlu0 %2879
    %2881 = vrot.lane.b32.xlu0 %v2836, 17
    %v2882 = vpop.permute.xlu0 %2881
    %2883 = vrot.lane.b32.xlu0 %v2837, 17
    %v2884 = vpop.permute.xlu0 %2883
    %2885 = vrot.lane.b32.xlu0 %v2838, 17
    %v2886 = vpop.permute.xlu0 %2885
    %v2887 = vsel %vm218, %v2856, %v2858
    %v2888 = vsel %vm218, %v2860, %v2862
    %v2889 = vsel %vm218, %v2864, %v2866
    %v2890 = vsel %vm218, %v2868, %v2870
    %v2891 = vsel %vm218, %v2872, %v2874
    %v2892 = vsel %vm218, %v2876, %v2878
    %v2893 = vsel %vm218, %v2880, %v2882
    %v2894 = vsel %vm218, %v2884, %v2886
    %v2919 = vsel %vm218, 0.0, %v2856
    %v2920 = vsel %vm218, 0.0, %v2860
    %v2921 = vsel %vm218, 0.0, %v2864
    %v2922 = vsel %vm218, 0.0, %v2868
    %v2923 = vsel %vm218, 0.0, %v2872
    %v2924 = vsel %vm218, 0.0, %v2876
    %v2925 = vsel %vm218, 0.0, %v2880
    %v2926 = vsel %vm218, 0.0, %v2884
    %v2927 = vsel %vm218, %v2858, 0.0
    %v2928 = vsel %vm218, %v2862, 0.0
    %v2929 = vsel %vm218, %v2866, 0.0
    %v2930 = vsel %vm218, %v2870, 0.0
    %v2931 = vsel %vm218, %v2874, 0.0
    %v2932 = vsel %vm218, %v2878, 0.0
    %v2933 = vsel %vm218, %v2882, 0.0
    %v2934 = vsel %vm218, %v2886, 0.0
    %v2935 = vsel %vm271, %v2919, 0.0
    %v2936 = vsel %vm272, %v2887, 0.0
    %v2937 = vsel %vm271, %v2920, 0.0
    %v2938 = vsel %vm272, %v2888, 0.0
    %v2939 = vsel %vm271, %v2921, 0.0
    %v2940 = vsel %vm272, %v2889, 0.0
    %v2941 = vsel %vm271, %v2922, 0.0
    %v2942 = vsel %vm272, %v2890, 0.0
    %v2943 = vsel %vm271, %v2923, 0.0
    %v2944 = vsel %vm272, %v2891, 0.0
    %v2945 = vsel %vm271, %v2924, 0.0
    %v2946 = vsel %vm272, %v2892, 0.0
    %v2947 = vsel %vm271, %v2925, 0.0
    %v2948 = vsel %vm272, %v2893, 0.0
    %v2949 = vsel %vm271, %v2926, 0.0
    %v2950 = vsel %vm272, %v2894, 0.0
    %2967 = vrot.lane.b32.xlu0 %v2919, 126
    %v2968 = vpop.permute.xlu0 %2967
    %2969 = vrot.lane.b32.xlu0 %v2887, 126
    %v2970 = vpop.permute.xlu0 %2969
    %2971 = vrot.lane.b32.xlu0 %v2927, 126
    %v2972 = vpop.permute.xlu0 %2971
    %2973 = vrot.lane.b32.xlu0 %v2920, 126
    %v2974 = vpop.permute.xlu0 %2973
    %2975 = vrot.lane.b32.xlu0 %v2888, 126
    %v2976 = vpop.permute.xlu0 %2975
    %2977 = vrot.lane.b32.xlu0 %v2928, 126
    %v2978 = vpop.permute.xlu0 %2977
    %2979 = vrot.lane.b32.xlu0 %v2921, 126
    %v2980 = vpop.permute.xlu0 %2979
    %2981 = vrot.lane.b32.xlu0 %v2889, 126
    %v2982 = vpop.permute.xlu0 %2981
    %2983 = vrot.lane.b32.xlu0 %v2929, 126
    %v2984 = vpop.permute.xlu0 %2983
    %2985 = vrot.lane.b32.xlu0 %v2922, 126
    %v2986 = vpop.permute.xlu0 %2985
    %2987 = vrot.lane.b32.xlu0 %v2890, 126
    %v2988 = vpop.permute.xlu0 %2987
    %2989 = vrot.lane.b32.xlu0 %v2930, 126
    %v2990 = vpop.permute.xlu0 %2989
    %2991 = vrot.lane.b32.xlu0 %v2923, 126
    %v2992 = vpop.permute.xlu0 %2991
    %2993 = vrot.lane.b32.xlu0 %v2891, 126
    %v2994 = vpop.permute.xlu0 %2993
    %2995 = vrot.lane.b32.xlu0 %v2931, 126
    %v2996 = vpop.permute.xlu0 %2995
    %2997 = vrot.lane.b32.xlu0 %v2924, 126
    %v2998 = vpop.permute.xlu0 %2997
    %2999 = vrot.lane.b32.xlu0 %v2892, 126
    %v3000 = vpop.permute.xlu0 %2999
    %3001 = vrot.lane.b32.xlu0 %v2932, 126
    %v3002 = vpop.permute.xlu0 %3001
    %3003 = vrot.lane.b32.xlu0 %v2925, 126
    %v3004 = vpop.permute.xlu0 %3003
    %3005 = vrot.lane.b32.xlu0 %v2893, 126
    %v3006 = vpop.permute.xlu0 %3005
    %3007 = vrot.lane.b32.xlu0 %v2933, 126
    %v3008 = vpop.permute.xlu0 %3007
    %3009 = vrot.lane.b32.xlu0 %v2926, 126
    %v3010 = vpop.permute.xlu0 %3009
    %3011 = vrot.lane.b32.xlu0 %v2894, 126
    %v3012 = vpop.permute.xlu0 %3011
    %3013 = vrot.lane.b32.xlu0 %v2934, 126
    %v3014 = vpop.permute.xlu0 %3013
    %v3015 = vsel %vm359, %v2968, %v2970
    %v3016 = vsel %vm359, %v2970, %v2972
    %v3017 = vsel %vm359, %v2974, %v2976
    %v3018 = vsel %vm359, %v2976, %v2978
    %v3019 = vsel %vm359, %v2980, %v2982
    %v3020 = vsel %vm359, %v2982, %v2984
    %v3021 = vsel %vm359, %v2986, %v2988
    %v3022 = vsel %vm359, %v2988, %v2990
    %v3023 = vsel %vm359, %v2992, %v2994
    %v3024 = vsel %vm359, %v2994, %v2996
    %v3025 = vsel %vm359, %v2998, %v3000
    %v3026 = vsel %vm359, %v3000, %v3002
    %v3027 = vsel %vm359, %v3004, %v3006
    %v3028 = vsel %vm359, %v3006, %v3008
    %v3029 = vsel %vm359, %v3010, %v3012
    %v3030 = vsel %vm359, %v3012, %v3014
    %v3047 = vsel %vm293, %v3015, 0.0
    %v3048 = vsel %vm294, %v3016, 0.0
    %v3049 = vsel %vm293, %v3017, 0.0
    %v3050 = vsel %vm294, %v3018, 0.0
    %v3051 = vsel %vm293, %v3019, 0.0
    %v3052 = vsel %vm294, %v3020, 0.0
    %v3053 = vsel %vm293, %v3021, 0.0
    %v3054 = vsel %vm294, %v3022, 0.0
    %v3055 = vsel %vm293, %v3023, 0.0
    %v3056 = vsel %vm294, %v3024, 0.0
    %v3057 = vsel %vm293, %v3025, 0.0
    %v3058 = vsel %vm294, %v3026, 0.0
    %v3059 = vsel %vm293, %v3027, 0.0
    %v3060 = vsel %vm294, %v3028, 0.0
    %v3061 = vsel %vm293, %v3029, 0.0
    %v3062 = vsel %vm294, %v3030, 0.0
    %3063 = vrot.lane.b32.xlu0 %v2919, 112
    %v3064 = vpop.permute.xlu0 %3063
    %3065 = vrot.lane.b32.xlu0 %v2887, 112
    %v3066 = vpop.permute.xlu0 %3065
    %3067 = vrot.lane.b32.xlu0 %v2927, 112
    %v3068 = vpop.permute.xlu0 %3067
    %3069 = vrot.lane.b32.xlu0 %v2920, 112
    %v3070 = vpop.permute.xlu0 %3069
    %3071 = vrot.lane.b32.xlu0 %v2888, 112
    %v3072 = vpop.permute.xlu0 %3071
    %3073 = vrot.lane.b32.xlu0 %v2928, 112
    %v3074 = vpop.permute.xlu0 %3073
    %3075 = vrot.lane.b32.xlu0 %v2921, 112
    %v3076 = vpop.permute.xlu0 %3075
    %3077 = vrot.lane.b32.xlu0 %v2889, 112
    %v3078 = vpop.permute.xlu0 %3077
    %3079 = vrot.lane.b32.xlu0 %v2929, 112
    %v3080 = vpop.permute.xlu0 %3079
    %3081 = vrot.lane.b32.xlu0 %v2922, 112
    %v3082 = vpop.permute.xlu0 %3081
    %3083 = vrot.lane.b32.xlu0 %v2890, 112
    %v3084 = vpop.permute.xlu0 %3083
    %3085 = vrot.lane.b32.xlu0 %v2930, 112
    %v3086 = vpop.permute.xlu0 %3085
    %3087 = vrot.lane.b32.xlu0 %v2923, 112
    %v3088 = vpop.permute.xlu0 %3087
    %3089 = vrot.lane.b32.xlu0 %v2891, 112
    %v3090 = vpop.permute.xlu0 %3089
    %3091 = vrot.lane.b32.xlu0 %v2931, 112
    %v3092 = vpop.permute.xlu0 %3091
    %3093 = vrot.lane.b32.xlu0 %v2924, 112
    %v3094 = vpop.permute.xlu0 %3093
    %3095 = vrot.lane.b32.xlu0 %v2892, 112
    %v3096 = vpop.permute.xlu0 %3095
    %3097 = vrot.lane.b32.xlu0 %v2932, 112
    %v3098 = vpop.permute.xlu0 %3097
    %3099 = vrot.lane.b32.xlu0 %v2925, 112
    %v3100 = vpop.permute.xlu0 %3099
    %3101 = vrot.lane.b32.xlu0 %v2893, 112
    %v3102 = vpop.permute.xlu0 %3101
    %3103 = vrot.lane.b32.xlu0 %v2933, 112
    %v3104 = vpop.permute.xlu0 %3103
    %3105 = vrot.lane.b32.xlu0 %v2926, 112
    %v3106 = vpop.permute.xlu0 %3105
    %3107 = vrot.lane.b32.xlu0 %v2894, 112
    %v3108 = vpop.permute.xlu0 %3107
    %3109 = vrot.lane.b32.xlu0 %v2934, 112
    %v3110 = vpop.permute.xlu0 %3109
    %v3111 = vsel %vm456, %v3064, %v3066
    %v3112 = vsel %vm456, %v3066, %v3068
    %v3113 = vsel %vm456, %v3070, %v3072
    %v3114 = vsel %vm456, %v3072, %v3074
    %v3115 = vsel %vm456, %v3076, %v3078
    %v3116 = vsel %vm456, %v3078, %v3080
    %v3117 = vsel %vm456, %v3082, %v3084
    %v3118 = vsel %vm456, %v3084, %v3086
    %v3119 = vsel %vm456, %v3088, %v3090
    %v3120 = vsel %vm456, %v3090, %v3092
    %v3121 = vsel %vm456, %v3094, %v3096
    %v3122 = vsel %vm456, %v3096, %v3098
    %v3123 = vsel %vm456, %v3100, %v3102
    %v3124 = vsel %vm456, %v3102, %v3104
    %v3125 = vsel %vm456, %v3106, %v3108
    %v3126 = vsel %vm456, %v3108, %v3110
    %v3143 = vsel %vm271, %v3111, 0.0
    %v3144 = vsel %vm272, %v3112, 0.0
    %v3145 = vsel %vm271, %v3113, 0.0
    %v3146 = vsel %vm272, %v3114, 0.0
    %v3147 = vsel %vm271, %v3115, 0.0
    %v3148 = vsel %vm272, %v3116, 0.0
    %v3149 = vsel %vm271, %v3117, 0.0
    %v3150 = vsel %vm272, %v3118, 0.0
    %v3151 = vsel %vm271, %v3119, 0.0
    %v3152 = vsel %vm272, %v3120, 0.0
    %v3153 = vsel %vm271, %v3121, 0.0
    %v3154 = vsel %vm272, %v3122, 0.0
    %v3155 = vsel %vm271, %v3123, 0.0
    %v3156 = vsel %vm272, %v3124, 0.0
    %v3157 = vsel %vm271, %v3125, 0.0
    %v3158 = vsel %vm272, %v3126, 0.0
    %3159 = vrot.lane.b32.xlu0 %v2919, 110
    %v3160 = vpop.permute.xlu0 %3159
    %3161 = vrot.lane.b32.xlu0 %v2887, 110
    %v3162 = vpop.permute.xlu0 %3161
    %3163 = vrot.lane.b32.xlu0 %v2927, 110
    %v3164 = vpop.permute.xlu0 %3163
    %3165 = vrot.lane.b32.xlu0 %v2920, 110
    %v3166 = vpop.permute.xlu0 %3165
    %3167 = vrot.lane.b32.xlu0 %v2888, 110
    %v3168 = vpop.permute.xlu0 %3167
    %3169 = vrot.lane.b32.xlu0 %v2928, 110
    %v3170 = vpop.permute.xlu0 %3169
    %3171 = vrot.lane.b32.xlu0 %v2921, 110
    %v3172 = vpop.permute.xlu0 %3171
    %3173 = vrot.lane.b32.xlu0 %v2889, 110
    %v3174 = vpop.permute.xlu0 %3173
    %3175 = vrot.lane.b32.xlu0 %v2929, 110
    %v3176 = vpop.permute.xlu0 %3175
    %3177 = vrot.lane.b32.xlu0 %v2922, 110
    %v3178 = vpop.permute.xlu0 %3177
    %3179 = vrot.lane.b32.xlu0 %v2890, 110
    %v3180 = vpop.permute.xlu0 %3179
    %3181 = vrot.lane.b32.xlu0 %v2930, 110
    %v3182 = vpop.permute.xlu0 %3181
    %3183 = vrot.lane.b32.xlu0 %v2923, 110
    %v3184 = vpop.permute.xlu0 %3183
    %3185 = vrot.lane.b32.xlu0 %v2891, 110
    %v3186 = vpop.permute.xlu0 %3185
    %3187 = vrot.lane.b32.xlu0 %v2931, 110
    %v3188 = vpop.permute.xlu0 %3187
    %3189 = vrot.lane.b32.xlu0 %v2924, 110
    %v3190 = vpop.permute.xlu0 %3189
    %3191 = vrot.lane.b32.xlu0 %v2892, 110
    %v3192 = vpop.permute.xlu0 %3191
    %3193 = vrot.lane.b32.xlu0 %v2932, 110
    %v3194 = vpop.permute.xlu0 %3193
    %3195 = vrot.lane.b32.xlu0 %v2925, 110
    %v3196 = vpop.permute.xlu0 %3195
    %3197 = vrot.lane.b32.xlu0 %v2893, 110
    %v3198 = vpop.permute.xlu0 %3197
    %3199 = vrot.lane.b32.xlu0 %v2933, 110
    %v3200 = vpop.permute.xlu0 %3199
    %3201 = vrot.lane.b32.xlu0 %v2926, 110
    %v3202 = vpop.permute.xlu0 %3201
    %3203 = vrot.lane.b32.xlu0 %v2894, 110
    %v3204 = vpop.permute.xlu0 %3203
    %3205 = vrot.lane.b32.xlu0 %v2934, 110
    %v3206 = vpop.permute.xlu0 %3205
    %v3207 = vsel %vm553, %v3160, %v3162
    %v3208 = vsel %vm553, %v3162, %v3164
    %v3209 = vsel %vm553, %v3166, %v3168
    %v3210 = vsel %vm553, %v3168, %v3170
    %v3211 = vsel %vm553, %v3172, %v3174
    %v3212 = vsel %vm553, %v3174, %v3176
    %v3213 = vsel %vm553, %v3178, %v3180
    %v3214 = vsel %vm553, %v3180, %v3182
    %v3215 = vsel %vm553, %v3184, %v3186
    %v3216 = vsel %vm553, %v3186, %v3188
    %v3217 = vsel %vm553, %v3190, %v3192
    %v3218 = vsel %vm553, %v3192, %v3194
    %v3219 = vsel %vm553, %v3196, %v3198
    %v3220 = vsel %vm553, %v3198, %v3200
    %v3221 = vsel %vm553, %v3202, %v3204
    %v3222 = vsel %vm553, %v3204, %v3206
    %v3239 = vsel %vm293, %v3207, 0.0
    %v3240 = vsel %vm294, %v3208, 0.0
    %v3241 = vsel %vm293, %v3209, 0.0
    %v3242 = vsel %vm294, %v3210, 0.0
    %v3243 = vsel %vm293, %v3211, 0.0
    %v3244 = vsel %vm294, %v3212, 0.0
    %v3245 = vsel %vm293, %v3213, 0.0
    %v3246 = vsel %vm294, %v3214, 0.0
    %v3247 = vsel %vm293, %v3215, 0.0
    %v3248 = vsel %vm294, %v3216, 0.0
    %v3249 = vsel %vm293, %v3217, 0.0
    %v3250 = vsel %vm294, %v3218, 0.0
    %v3251 = vsel %vm293, %v3219, 0.0
    %v3252 = vsel %vm294, %v3220, 0.0
    %v3253 = vsel %vm293, %v3221, 0.0
    %v3254 = vsel %vm294, %v3222, 0.0
    %3255 = vrot.lane.b32.xlu0 %v2919, 96
    %v3256 = vpop.permute.xlu0 %3255
    %3257 = vrot.lane.b32.xlu0 %v2887, 96
    %v3258 = vpop.permute.xlu0 %3257
    %3259 = vrot.lane.b32.xlu0 %v2927, 96
    %v3260 = vpop.permute.xlu0 %3259
    %3261 = vrot.lane.b32.xlu0 %v2920, 96
    %v3262 = vpop.permute.xlu0 %3261
    %3263 = vrot.lane.b32.xlu0 %v2888, 96
    %v3264 = vpop.permute.xlu0 %3263
    %3265 = vrot.lane.b32.xlu0 %v2928, 96
    %v3266 = vpop.permute.xlu0 %3265
    %3267 = vrot.lane.b32.xlu0 %v2921, 96
    %v3268 = vpop.permute.xlu0 %3267
    %3269 = vrot.lane.b32.xlu0 %v2889, 96
    %v3270 = vpop.permute.xlu0 %3269
    %3271 = vrot.lane.b32.xlu0 %v2929, 96
    %v3272 = vpop.permute.xlu0 %3271
    %3273 = vrot.lane.b32.xlu0 %v2922, 96
    %v3274 = vpop.permute.xlu0 %3273
    %3275 = vrot.lane.b32.xlu0 %v2890, 96
    %v3276 = vpop.permute.xlu0 %3275
    %3277 = vrot.lane.b32.xlu0 %v2930, 96
    %v3278 = vpop.permute.xlu0 %3277
    %3279 = vrot.lane.b32.xlu0 %v2923, 96
    %v3280 = vpop.permute.xlu0 %3279
    %3281 = vrot.lane.b32.xlu0 %v2891, 96
    %v3282 = vpop.permute.xlu0 %3281
    %3283 = vrot.lane.b32.xlu0 %v2931, 96
    %v3284 = vpop.permute.xlu0 %3283
    %3285 = vrot.lane.b32.xlu0 %v2924, 96
    %v3286 = vpop.permute.xlu0 %3285
    %3287 = vrot.lane.b32.xlu0 %v2892, 96
    %v3288 = vpop.permute.xlu0 %3287
    %3289 = vrot.lane.b32.xlu0 %v2932, 96
    %v3290 = vpop.permute.xlu0 %3289
    %3291 = vrot.lane.b32.xlu0 %v2925, 96
    %v3292 = vpop.permute.xlu0 %3291
    %3293 = vrot.lane.b32.xlu0 %v2893, 96
    %v3294 = vpop.permute.xlu0 %3293
    %3295 = vrot.lane.b32.xlu0 %v2933, 96
    %v3296 = vpop.permute.xlu0 %3295
    %3297 = vrot.lane.b32.xlu0 %v2926, 96
    %v3298 = vpop.permute.xlu0 %3297
    %3299 = vrot.lane.b32.xlu0 %v2894, 96
    %v3300 = vpop.permute.xlu0 %3299
    %3301 = vrot.lane.b32.xlu0 %v2934, 96
    %v3302 = vpop.permute.xlu0 %3301
    %v3303 = vsel %vm650, %v3256, %v3258
    %v3304 = vsel %vm650, %v3258, %v3260
    %v3305 = vsel %vm650, %v3262, %v3264
    %v3306 = vsel %vm650, %v3264, %v3266
    %v3307 = vsel %vm650, %v3268, %v3270
    %v3308 = vsel %vm650, %v3270, %v3272
    %v3309 = vsel %vm650, %v3274, %v3276
    %v3310 = vsel %vm650, %v3276, %v3278
    %v3311 = vsel %vm650, %v3280, %v3282
    %v3312 = vsel %vm650, %v3282, %v3284
    %v3313 = vsel %vm650, %v3286, %v3288
    %v3314 = vsel %vm650, %v3288, %v3290
    %v3315 = vsel %vm650, %v3292, %v3294
    %v3316 = vsel %vm650, %v3294, %v3296
    %v3317 = vsel %vm650, %v3298, %v3300
    %v3318 = vsel %vm650, %v3300, %v3302
    %v3335 = vsel %vm271, %v3303, 0.0
    %v3336 = vsel %vm272, %v3304, 0.0
    %v3337 = vsel %vm271, %v3305, 0.0
    %v3338 = vsel %vm272, %v3306, 0.0
    %v3339 = vsel %vm271, %v3307, 0.0
    %v3340 = vsel %vm272, %v3308, 0.0
    %v3341 = vsel %vm271, %v3309, 0.0
    %v3342 = vsel %vm272, %v3310, 0.0
    %v3343 = vsel %vm271, %v3311, 0.0
    %v3344 = vsel %vm272, %v3312, 0.0
    %v3345 = vsel %vm271, %v3313, 0.0
    %v3346 = vsel %vm272, %v3314, 0.0
    %v3347 = vsel %vm271, %v3315, 0.0
    %v3348 = vsel %vm272, %v3316, 0.0
    %v3349 = vsel %vm271, %v3317, 0.0
    %v3350 = vsel %vm272, %v3318, 0.0
    %3351 = vrot.lane.b32.xlu0 %v2919, 94
    %v3352 = vpop.permute.xlu0 %3351
    %3353 = vrot.lane.b32.xlu0 %v2887, 94
    %v3354 = vpop.permute.xlu0 %3353
    %3355 = vrot.lane.b32.xlu0 %v2927, 94
    %v3356 = vpop.permute.xlu0 %3355
    %3357 = vrot.lane.b32.xlu0 %v2920, 94
    %v3358 = vpop.permute.xlu0 %3357
    %3359 = vrot.lane.b32.xlu0 %v2888, 94
    %v3360 = vpop.permute.xlu0 %3359
    %3361 = vrot.lane.b32.xlu0 %v2928, 94
    %v3362 = vpop.permute.xlu0 %3361
    %3363 = vrot.lane.b32.xlu0 %v2921, 94
    %v3364 = vpop.permute.xlu0 %3363
    %3365 = vrot.lane.b32.xlu0 %v2889, 94
    %v3366 = vpop.permute.xlu0 %3365
    %3367 = vrot.lane.b32.xlu0 %v2929, 94
    %v3368 = vpop.permute.xlu0 %3367
    %3369 = vrot.lane.b32.xlu0 %v2922, 94
    %v3370 = vpop.permute.xlu0 %3369
    %3371 = vrot.lane.b32.xlu0 %v2890, 94
    %v3372 = vpop.permute.xlu0 %3371
    %3373 = vrot.lane.b32.xlu0 %v2930, 94
    %v3374 = vpop.permute.xlu0 %3373
    %3375 = vrot.lane.b32.xlu0 %v2923, 94
    %v3376 = vpop.permute.xlu0 %3375
    %3377 = vrot.lane.b32.xlu0 %v2891, 94
    %v3378 = vpop.permute.xlu0 %3377
    %3379 = vrot.lane.b32.xlu0 %v2931, 94
    %v3380 = vpop.permute.xlu0 %3379
    %3381 = vrot.lane.b32.xlu0 %v2924, 94
    %v3382 = vpop.permute.xlu0 %3381
    %3383 = vrot.lane.b32.xlu0 %v2892, 94
    %v3384 = vpop.permute.xlu0 %3383
    %3385 = vrot.lane.b32.xlu0 %v2932, 94
    %v3386 = vpop.permute.xlu0 %3385
    %3387 = vrot.lane.b32.xlu0 %v2925, 94
    %v3388 = vpop.permute.xlu0 %3387
    %3389 = vrot.lane.b32.xlu0 %v2893, 94
    %v3390 = vpop.permute.xlu0 %3389
    %3391 = vrot.lane.b32.xlu0 %v2933, 94
    %v3392 = vpop.permute.xlu0 %3391
    %3393 = vrot.lane.b32.xlu0 %v2926, 94
    %v3394 = vpop.permute.xlu0 %3393
    %3395 = vrot.lane.b32.xlu0 %v2894, 94
    %v3396 = vpop.permute.xlu0 %3395
    %3397 = vrot.lane.b32.xlu0 %v2934, 94
    %v3398 = vpop.permute.xlu0 %3397
    %v3399 = vsel %vm747, %v3352, %v3354
    %v3400 = vsel %vm747, %v3354, %v3356
    %v3401 = vsel %vm747, %v3358, %v3360
    %v3402 = vsel %vm747, %v3360, %v3362
    %v3403 = vsel %vm747, %v3364, %v3366
    %v3404 = vsel %vm747, %v3366, %v3368
    %v3405 = vsel %vm747, %v3370, %v3372
    %v3406 = vsel %vm747, %v3372, %v3374
    %v3407 = vsel %vm747, %v3376, %v3378
    %v3408 = vsel %vm747, %v3378, %v3380
    %v3409 = vsel %vm747, %v3382, %v3384
    %v3410 = vsel %vm747, %v3384, %v3386
    %v3411 = vsel %vm747, %v3388, %v3390
    %v3412 = vsel %vm747, %v3390, %v3392
    %v3413 = vsel %vm747, %v3394, %v3396
    %v3414 = vsel %vm747, %v3396, %v3398
    %v3431 = vsel %vm293, %v3399, 0.0
    %v3432 = vsel %vm294, %v3400, 0.0
    %v3433 = vsel %vm293, %v3401, 0.0
    %v3434 = vsel %vm294, %v3402, 0.0
    %v3435 = vsel %vm293, %v3403, 0.0
    %v3436 = vsel %vm294, %v3404, 0.0
    %v3437 = vsel %vm293, %v3405, 0.0
    %v3438 = vsel %vm294, %v3406, 0.0
    %v3439 = vsel %vm293, %v3407, 0.0
    %v3440 = vsel %vm294, %v3408, 0.0
    %v3441 = vsel %vm293, %v3409, 0.0
    %v3442 = vsel %vm294, %v3410, 0.0
    %v3443 = vsel %vm293, %v3411, 0.0
    %v3444 = vsel %vm294, %v3412, 0.0
    %v3445 = vsel %vm293, %v3413, 0.0
    %v3446 = vsel %vm294, %v3414, 0.0
    %3447 = vrot.lane.b32.xlu0 %v2919, 127
    %v3448 = vpop.permute.xlu0 %3447
    %3449 = vrot.lane.b32.xlu0 %v2887, 127
    %v3450 = vpop.permute.xlu0 %3449
    %3451 = vrot.lane.b32.xlu0 %v2927, 127
    %v3452 = vpop.permute.xlu0 %3451
    %3453 = vrot.lane.b32.xlu0 %v2920, 127
    %v3454 = vpop.permute.xlu0 %3453
    %3455 = vrot.lane.b32.xlu0 %v2888, 127
    %v3456 = vpop.permute.xlu0 %3455
    %3457 = vrot.lane.b32.xlu0 %v2928, 127
    %v3458 = vpop.permute.xlu0 %3457
    %3459 = vrot.lane.b32.xlu0 %v2921, 127
    %v3460 = vpop.permute.xlu0 %3459
    %3461 = vrot.lane.b32.xlu0 %v2889, 127
    %v3462 = vpop.permute.xlu0 %3461
    %3463 = vrot.lane.b32.xlu0 %v2929, 127
    %v3464 = vpop.permute.xlu0 %3463
    %3465 = vrot.lane.b32.xlu0 %v2922, 127
    %v3466 = vpop.permute.xlu0 %3465
    %3467 = vrot.lane.b32.xlu0 %v2890, 127
    %v3468 = vpop.permute.xlu0 %3467
    %3469 = vrot.lane.b32.xlu0 %v2930, 127
    %v3470 = vpop.permute.xlu0 %3469
    %3471 = vrot.lane.b32.xlu0 %v2923, 127
    %v3472 = vpop.permute.xlu0 %3471
    %3473 = vrot.lane.b32.xlu0 %v2891, 127
    %v3474 = vpop.permute.xlu0 %3473
    %3475 = vrot.lane.b32.xlu0 %v2931, 127
    %v3476 = vpop.permute.xlu0 %3475
    %3477 = vrot.lane.b32.xlu0 %v2924, 127
    %v3478 = vpop.permute.xlu0 %3477
    %3479 = vrot.lane.b32.xlu0 %v2892, 127
    %v3480 = vpop.permute.xlu0 %3479
    %3481 = vrot.lane.b32.xlu0 %v2932, 127
    %v3482 = vpop.permute.xlu0 %3481
    %3483 = vrot.lane.b32.xlu0 %v2925, 127
    %v3484 = vpop.permute.xlu0 %3483
    %3485 = vrot.lane.b32.xlu0 %v2893, 127
    %v3486 = vpop.permute.xlu0 %3485
    %3487 = vrot.lane.b32.xlu0 %v2933, 127
    %v3488 = vpop.permute.xlu0 %3487
    %3489 = vrot.lane.b32.xlu0 %v2926, 127
    %v3490 = vpop.permute.xlu0 %3489
    %3491 = vrot.lane.b32.xlu0 %v2894, 127
    %v3492 = vpop.permute.xlu0 %3491
    %3493 = vrot.lane.b32.xlu0 %v2934, 127
    %v3494 = vpop.permute.xlu0 %3493
    %v3495 = vsel %vm844, %v3448, %v3450
    %v3496 = vsel %vm844, %v3450, %v3452
    %v3497 = vsel %vm844, %v3454, %v3456
    %v3498 = vsel %vm844, %v3456, %v3458
    %v3499 = vsel %vm844, %v3460, %v3462
    %v3500 = vsel %vm844, %v3462, %v3464
    %v3501 = vsel %vm844, %v3466, %v3468
    %v3502 = vsel %vm844, %v3468, %v3470
    %v3503 = vsel %vm844, %v3472, %v3474
    %v3504 = vsel %vm844, %v3474, %v3476
    %v3505 = vsel %vm844, %v3478, %v3480
    %v3506 = vsel %vm844, %v3480, %v3482
    %v3507 = vsel %vm844, %v3484, %v3486
    %v3508 = vsel %vm844, %v3486, %v3488
    %v3509 = vsel %vm844, %v3490, %v3492
    %v3510 = vsel %vm844, %v3492, %v3494
    %3527 = vrot.lane.b32.xlu0 %v2919, 111
    %v3528 = vpop.permute.xlu0 %3527
    %3529 = vrot.lane.b32.xlu0 %v2887, 111
    %v3530 = vpop.permute.xlu0 %3529
    %3531 = vrot.lane.b32.xlu0 %v2927, 111
    %v3532 = vpop.permute.xlu0 %3531
    %3533 = vrot.lane.b32.xlu0 %v2920, 111
    %v3534 = vpop.permute.xlu0 %3533
    %3535 = vrot.lane.b32.xlu0 %v2888, 111
    %v3536 = vpop.permute.xlu0 %3535
    %3537 = vrot.lane.b32.xlu0 %v2928, 111
    %v3538 = vpop.permute.xlu0 %3537
    %3539 = vrot.lane.b32.xlu0 %v2921, 111
    %v3540 = vpop.permute.xlu0 %3539
    %3541 = vrot.lane.b32.xlu0 %v2889, 111
    %v3542 = vpop.permute.xlu0 %3541
    %3543 = vrot.lane.b32.xlu0 %v2929, 111
    %v3544 = vpop.permute.xlu0 %3543
    %3545 = vrot.lane.b32.xlu0 %v2922, 111
    %v3546 = vpop.permute.xlu0 %3545
    %3547 = vrot.lane.b32.xlu0 %v2890, 111
    %v3548 = vpop.permute.xlu0 %3547
    %3549 = vrot.lane.b32.xlu0 %v2930, 111
    %v3550 = vpop.permute.xlu0 %3549
    %3551 = vrot.lane.b32.xlu0 %v2923, 111
    %v3552 = vpop.permute.xlu0 %3551
    %3553 = vrot.lane.b32.xlu0 %v2891, 111
    %v3554 = vpop.permute.xlu0 %3553
    %3555 = vrot.lane.b32.xlu0 %v2931, 111
    %v3556 = vpop.permute.xlu0 %3555
    %3557 = vrot.lane.b32.xlu0 %v2924, 111
    %v3558 = vpop.permute.xlu0 %3557
    %3559 = vrot.lane.b32.xlu0 %v2892, 111
    %v3560 = vpop.permute.xlu0 %3559
    %3561 = vrot.lane.b32.xlu0 %v2932, 111
    %v3562 = vpop.permute.xlu0 %3561
    %3563 = vrot.lane.b32.xlu0 %v2925, 111
    %v3564 = vpop.permute.xlu0 %3563
    %3565 = vrot.lane.b32.xlu0 %v2893, 111
    %v3566 = vpop.permute.xlu0 %3565
    %3567 = vrot.lane.b32.xlu0 %v2933, 111
    %v3568 = vpop.permute.xlu0 %3567
    %3569 = vrot.lane.b32.xlu0 %v2926, 111
    %v3570 = vpop.permute.xlu0 %3569
    %3571 = vrot.lane.b32.xlu0 %v2894, 111
    %v3572 = vpop.permute.xlu0 %3571
    %3573 = vrot.lane.b32.xlu0 %v2934, 111
    %v3574 = vpop.permute.xlu0 %3573
    %v3575 = vsel %vm925, %v3528, %v3530
    %v3576 = vsel %vm925, %v3530, %v3532
    %v3577 = vsel %vm925, %v3534, %v3536
    %v3578 = vsel %vm925, %v3536, %v3538
    %v3579 = vsel %vm925, %v3540, %v3542
    %v3580 = vsel %vm925, %v3542, %v3544
    %v3581 = vsel %vm925, %v3546, %v3548
    %v3582 = vsel %vm925, %v3548, %v3550
    %v3583 = vsel %vm925, %v3552, %v3554
    %v3584 = vsel %vm925, %v3554, %v3556
    %v3585 = vsel %vm925, %v3558, %v3560
    %v3586 = vsel %vm925, %v3560, %v3562
    %v3587 = vsel %vm925, %v3564, %v3566
    %v3588 = vsel %vm925, %v3566, %v3568
    %v3589 = vsel %vm925, %v3570, %v3572
    %v3590 = vsel %vm925, %v3572, %v3574
    %3607 = vrot.lane.b32.xlu0 %v2919, 95
    %v3608 = vpop.permute.xlu0 %3607
    %3609 = vrot.lane.b32.xlu0 %v2887, 95
    %v3610 = vpop.permute.xlu0 %3609
    %3611 = vrot.lane.b32.xlu0 %v2927, 95
    %v3612 = vpop.permute.xlu0 %3611
    %3613 = vrot.lane.b32.xlu0 %v2920, 95
    %v3614 = vpop.permute.xlu0 %3613
    %3615 = vrot.lane.b32.xlu0 %v2888, 95
    %v3616 = vpop.permute.xlu0 %3615
    %3617 = vrot.lane.b32.xlu0 %v2928, 95
    %v3618 = vpop.permute.xlu0 %3617
    %3619 = vrot.lane.b32.xlu0 %v2921, 95
    %v3620 = vpop.permute.xlu0 %3619
    %3621 = vrot.lane.b32.xlu0 %v2889, 95
    %v3622 = vpop.permute.xlu0 %3621
    %3623 = vrot.lane.b32.xlu0 %v2929, 95
    %v3624 = vpop.permute.xlu0 %3623
    %3625 = vrot.lane.b32.xlu0 %v2922, 95
    %v3626 = vpop.permute.xlu0 %3625
    %3627 = vrot.lane.b32.xlu0 %v2890, 95
    %v3628 = vpop.permute.xlu0 %3627
    %3629 = vrot.lane.b32.xlu0 %v2930, 95
    %v3630 = vpop.permute.xlu0 %3629
    %3631 = vrot.lane.b32.xlu0 %v2923, 95
    %v3632 = vpop.permute.xlu0 %3631
    %3633 = vrot.lane.b32.xlu0 %v2891, 95
    %v3634 = vpop.permute.xlu0 %3633
    %3635 = vrot.lane.b32.xlu0 %v2931, 95
    %v3636 = vpop.permute.xlu0 %3635
    %3637 = vrot.lane.b32.xlu0 %v2924, 95
    %v3638 = vpop.permute.xlu0 %3637
    %3639 = vrot.lane.b32.xlu0 %v2892, 95
    %v3640 = vpop.permute.xlu0 %3639
    %3641 = vrot.lane.b32.xlu0 %v2932, 95
    %v3642 = vpop.permute.xlu0 %3641
    %3643 = vrot.lane.b32.xlu0 %v2925, 95
    %v3644 = vpop.permute.xlu0 %3643
    %3645 = vrot.lane.b32.xlu0 %v2893, 95
    %v3646 = vpop.permute.xlu0 %3645
    %3647 = vrot.lane.b32.xlu0 %v2933, 95
    %v3648 = vpop.permute.xlu0 %3647
    %3649 = vrot.lane.b32.xlu0 %v2926, 95
    %v3650 = vpop.permute.xlu0 %3649
    %3651 = vrot.lane.b32.xlu0 %v2894, 95
    %v3652 = vpop.permute.xlu0 %3651
    %3653 = vrot.lane.b32.xlu0 %v2934, 95
    %v3654 = vpop.permute.xlu0 %3653
    %v3655 = vsel %vm1006, %v3608, %v3610
    %v3656 = vsel %vm1006, %v3610, %v3612
    %v3657 = vsel %vm1006, %v3614, %v3616
    %v3658 = vsel %vm1006, %v3616, %v3618
    %v3659 = vsel %vm1006, %v3620, %v3622
    %v3660 = vsel %vm1006, %v3622, %v3624
    %v3661 = vsel %vm1006, %v3626, %v3628
    %v3662 = vsel %vm1006, %v3628, %v3630
    %v3663 = vsel %vm1006, %v3632, %v3634
    %v3664 = vsel %vm1006, %v3634, %v3636
    %v3665 = vsel %vm1006, %v3638, %v3640
    %v3666 = vsel %vm1006, %v3640, %v3642
    %v3667 = vsel %vm1006, %v3644, %v3646
    %v3668 = vsel %vm1006, %v3646, %v3648
    %v3669 = vsel %vm1006, %v3650, %v3652
    %v3670 = vsel %vm1006, %v3652, %v3654
    %v3687 = vpack.c.bf16 %v2937, %v2935
    %v3688 = vpack.c.bf16 %v2938, %v2936
    %v3689 = vpack.c.bf16 %v2941, %v2939
    %v3690 = vpack.c.bf16 %v2942, %v2940
    %v3691 = vpack.c.bf16 %v2945, %v2943
    %v3692 = vpack.c.bf16 %v2946, %v2944
    %v3693 = vpack.c.bf16 %v2949, %v2947
    %v3694 = vpack.c.bf16 %v2950, %v2948
    %v3695 = vpack.c.bf16 %v3497, %v3495
    %v3696 = vpack.c.bf16 %v3498, %v3496
    %v3697 = vpack.c.bf16 %v3501, %v3499
    %v3698 = vpack.c.bf16 %v3502, %v3500
    %v3699 = vpack.c.bf16 %v3505, %v3503
    %v3700 = vpack.c.bf16 %v3506, %v3504
    %v3701 = vpack.c.bf16 %v3509, %v3507
    %v3702 = vpack.c.bf16 %v3510, %v3508
    %v3703 = vpack.c.bf16 %v3049, %v3047
    %v3704 = vpack.c.bf16 %v3050, %v3048
    %v3705 = vpack.c.bf16 %v3053, %v3051
    %v3706 = vpack.c.bf16 %v3054, %v3052
    %v3707 = vpack.c.bf16 %v3057, %v3055
    %v3708 = vpack.c.bf16 %v3058, %v3056
    %v3709 = vpack.c.bf16 %v3061, %v3059
    %v3710 = vpack.c.bf16 %v3062, %v3060
    %v3711 = vpack.c.bf16 %v3145, %v3143
    %v3712 = vpack.c.bf16 %v3146, %v3144
    %v3713 = vpack.c.bf16 %v3149, %v3147
    %v3714 = vpack.c.bf16 %v3150, %v3148
    %v3715 = vpack.c.bf16 %v3153, %v3151
    %v3716 = vpack.c.bf16 %v3154, %v3152
    %v3717 = vpack.c.bf16 %v3157, %v3155
    %v3718 = vpack.c.bf16 %v3158, %v3156
    %v3719 = vpack.c.bf16 %v3577, %v3575
    %v3720 = vpack.c.bf16 %v3578, %v3576
    %v3721 = vpack.c.bf16 %v3581, %v3579
    %v3722 = vpack.c.bf16 %v3582, %v3580
    %v3723 = vpack.c.bf16 %v3585, %v3583
    %v3724 = vpack.c.bf16 %v3586, %v3584
    %v3725 = vpack.c.bf16 %v3589, %v3587
    %v3726 = vpack.c.bf16 %v3590, %v3588
    %v3727 = vpack.c.bf16 %v3241, %v3239
    %v3728 = vpack.c.bf16 %v3242, %v3240
    %v3729 = vpack.c.bf16 %v3245, %v3243
    %v3730 = vpack.c.bf16 %v3246, %v3244
    %v3731 = vpack.c.bf16 %v3249, %v3247
    %v3732 = vpack.c.bf16 %v3250, %v3248
    %v3733 = vpack.c.bf16 %v3253, %v3251
    %v3734 = vpack.c.bf16 %v3254, %v3252
    %v3735 = vpack.c.bf16 %v3337, %v3335
    %v3736 = vpack.c.bf16 %v3338, %v3336
    %v3737 = vpack.c.bf16 %v3341, %v3339
    %v3738 = vpack.c.bf16 %v3342, %v3340
    %v3739 = vpack.c.bf16 %v3345, %v3343
    %v3740 = vpack.c.bf16 %v3346, %v3344
    %v3741 = vpack.c.bf16 %v3349, %v3347
    %v3742 = vpack.c.bf16 %v3350, %v3348
    %v3743 = vpack.c.bf16 %v3657, %v3655
    %v3744 = vpack.c.bf16 %v3658, %v3656
    %v3745 = vpack.c.bf16 %v3661, %v3659
    %v3746 = vpack.c.bf16 %v3662, %v3660
    %v3747 = vpack.c.bf16 %v3665, %v3663
    %v3748 = vpack.c.bf16 %v3666, %v3664
    %v3749 = vpack.c.bf16 %v3669, %v3667
    %v3750 = vpack.c.bf16 %v3670, %v3668
    %v3751 = vpack.c.bf16 %v3433, %v3431
    %v3752 = vpack.c.bf16 %v3434, %v3432
    %v3753 = vpack.c.bf16 %v3437, %v3435
    %v3754 = vpack.c.bf16 %v3438, %v3436
    %v3755 = vpack.c.bf16 %v3441, %v3439
    %v3756 = vpack.c.bf16 %v3442, %v3440
    %v3757 = vpack.c.bf16 %v3445, %v3443
    %v3758 = vpack.c.bf16 %v3446, %v3444
    %3759 = vmatprep.subr.bf16.mxu0 %v3688
    %3760 = vmatpush1.bf16.msra.mxu0 %v3687
    %3761 = vmatprep.subr.bf16.mxu0 %v3690
    %3762 = vmatpush1.bf16.msra.mxu0 %v3689
    %3763 = vmatprep.subr.bf16.mxu0 %v3692
    %3764 = vmatpush1.bf16.msra.mxu0 %v3691
    %3765 = vmatprep.subr.bf16.mxu0 %v3694
    %3766 = vmatpush1.bf16.msra.mxu0 %v3693
    %3767 = vmatprep.subr.bf16.mxu0 %v3696
    %3768 = vmatpush1.bf16.msra.mxu0 %v3695
    %3769 = vmatprep.subr.bf16.mxu0 %v3698
    %3770 = vmatpush1.bf16.msra.mxu0 %v3697
    %3771 = vmatprep.subr.bf16.mxu0 %v3700
    %3772 = vmatpush1.bf16.msra.mxu0 %v3699
    %3773 = vmatprep.subr.bf16.mxu0 %v3702
    %3774 = vmatpush1.bf16.msra.mxu0 %v3701
    %3775 = vmatprep.subr.bf16.mxu0 %v3704
    %3776 = vmatpush1.bf16.msra.mxu0 %v3703
    %3777 = vmatprep.subr.bf16.mxu0 %v3706
    %3778 = vmatpush1.bf16.msra.mxu0 %v3705
    %3779 = vmatprep.subr.bf16.mxu0 %v3708
    %3780 = vmatpush1.bf16.msra.mxu0 %v3707
    %3781 = vmatprep.subr.bf16.mxu0 %v3710
    %3782 = vmatpush1.bf16.msra.mxu0 %v3709
    %3783 = vmatprep.subr.bf16.mxu0 %v3712
    %3784 = vmatpush1.bf16.msra.mxu0 %v3711
    %3785 = vmatprep.subr.bf16.mxu0 %v3714
    %3786 = vmatpush1.bf16.msra.mxu0 %v3713
    %3787 = vmatprep.subr.bf16.mxu0 %v3716
    %3788 = vmatpush1.bf16.msra.mxu0 %v3715
    %3789 = vmatprep.subr.bf16.mxu0 %v3718
    %3790 = vmatpush1.bf16.msra.mxu0 %v3717
    %3791 = vmatprep.mubr.bf16.mxu0 %v1216
    %3792 = vmatmul.mubr.bf16.gmra.mrb[0].mxu0 %v1215
    %v3793 = vpop.f32.mrb[0].mxu0
    %v3794 = vadd.f32 %v1114, %v3793
    %v3795 = vpop.f32.mrb[0].mxu0
    %v3796 = vadd.f32 %v1114, %v3795
    %v3797 = vpop.f32.mrb[0].mxu0
    %v3798 = vadd.f32 %v1119, %v3797
    %v3799 = vpop.f32.mrb[0].mxu0
    %v3800 = vadd.f32 %v1119, %v3799
    %3801 = vmatprep.mubr.bf16.mxu0 %v1221
    %3802 = vmatmul.mubr.bf16.gmra.mrb[0].mxu0 %v1220
    %v3803 = vpop.f32.mrb[0].mxu0
    %v3804 = vadd.f32 %v1124, %v3803
    %v3805 = vpop.f32.mrb[0].mxu0
    %v3806 = vadd.f32 %v1124, %v3805
    %v3807 = vpop.f32.mrb[0].mxu0
    %v3808 = vadd.f32 %v1129, %v3807
    %v3809 = vpop.f32.mrb[0].mxu0
    %v3810 = vadd.f32 %v1129, %v3809
    %3811 = vmatprep.mubr.bf16.mxu0 %v1226
    %3812 = vmatmul.mubr.bf16.gmra.mrb[0].mxu0 %v1225
    %v3813 = vpop.f32.mrb[0].mxu0
    %v3814 = vadd.f32 %v1134, %v3813
    %v3815 = vpop.f32.mrb[0].mxu0
    %v3816 = vadd.f32 %v1134, %v3815
    %v3817 = vpop.f32.mrb[0].mxu0
    %v3818 = vadd.f32 %v1139, %v3817
    %v3819 = vpop.f32.mrb[0].mxu0
    %v3820 = vadd.f32 %v1139, %v3819
    %3821 = vmatprep.mubr.bf16.mxu0 %v1231
    %3822 = vmatmul.mubr.bf16.gmra.mrb[0].mxu0 %v1230
    %v3823 = vpop.f32.mrb[0].mxu0
    %v3824 = vadd.f32 %v1144, %v3823
    %v3825 = vpop.f32.mrb[0].mxu0
    %v3826 = vadd.f32 %v1144, %v3825
    %v3827 = vpop.f32.mrb[0].mxu0
    %v3828 = vadd.f32 %v1149, %v3827
    %v3829 = vpop.f32.mrb[0].mxu0
    %v3830 = vadd.f32 %v1149, %v3829
    %3831 = vdwg.mxu0
    %3832 = vmatprep.subr.bf16.mxu0 %v3720
    %3833 = vmatpush1.bf16.msra.mxu0 %v3719
    %3834 = vmatprep.subr.bf16.mxu0 %v3722
    %3835 = vmatpush1.bf16.msra.mxu0 %v3721
    %3836 = vmatprep.subr.bf16.mxu0 %v3724
    %3837 = vmatpush1.bf16.msra.mxu0 %v3723
    %3838 = vmatprep.subr.bf16.mxu0 %v3726
    %3839 = vmatpush1.bf16.msra.mxu0 %v3725
    %3840 = vmatprep.subr.bf16.mxu0 %v3728
    %3841 = vmatpush1.bf16.msra.mxu0 %v3727
    %3842 = vmatprep.subr.bf16.mxu0 %v3730
    %3843 = vmatpush1.bf16.msra.mxu0 %v3729
    %3844 = vmatprep.subr.bf16.mxu0 %v3732
    %3845 = vmatpush1.bf16.msra.mxu0 %v3731
    %3846 = vmatprep.subr.bf16.mxu0 %v3734
    %3847 = vmatpush1.bf16.msra.mxu0 %v3733
    %3848 = vmatprep.subr.bf16.mxu0 %v3736
    %3849 = vmatpush1.bf16.msra.mxu0 %v3735
    %3850 = vmatprep.subr.bf16.mxu0 %v3738
    %3851 = vmatpush1.bf16.msra.mxu0 %v3737
    %3852 = vmatprep.subr.bf16.mxu0 %v3740
    %3853 = vmatpush1.bf16.msra.mxu0 %v3739
    %3854 = vmatprep.subr.bf16.mxu0 %v3742
    %3855 = vmatpush1.bf16.msra.mxu0 %v3741
    %3856 = vmatprep.subr.bf16.mxu0 %v3744
    %3857 = vmatpush1.bf16.msra.mxu0 %v3743
    %3858 = vmatprep.subr.bf16.mxu0 %v3746
    %3859 = vmatpush1.bf16.msra.mxu0 %v3745
    %3860 = vmatprep.subr.bf16.mxu0 %v3748
    %3861 = vmatpush1.bf16.msra.mxu0 %v3747
    %3862 = vmatprep.subr.bf16.mxu0 %v3750
    %3863 = vmatpush1.bf16.msra.mxu0 %v3749
    %3864 = vmatprep.mubr.bf16.mxu0 %v1218
    %3865 = vmatmul.mubr.bf16.gmra.mrb[0].mxu0 %v1217
    %v3866 = vpop.f32.mrb[0].mxu0
    %v3867 = vadd.f32 %v3794, %v3866
    %v3868 = vpop.f32.mrb[0].mxu0
    %v3869 = vadd.f32 %v3796, %v3868
    %v3870 = vpop.f32.mrb[0].mxu0
    %v3871 = vadd.f32 %v3798, %v3870
    %v3872 = vpop.f32.mrb[0].mxu0
    %v3873 = vadd.f32 %v3800, %v3872
    %3874 = vmatprep.mubr.bf16.mxu0 %v1223
    %3875 = vmatmul.mubr.bf16.gmra.mrb[0].mxu0 %v1222
    %v3876 = vpop.f32.mrb[0].mxu0
    %v3877 = vadd.f32 %v3804, %v3876
    %v3878 = vpop.f32.mrb[0].mxu0
    %v3879 = vadd.f32 %v3806, %v3878
    %v3880 = vpop.f32.mrb[0].mxu0
    %v3881 = vadd.f32 %v3808, %v3880
    %v3882 = vpop.f32.mrb[0].mxu0
    %v3883 = vadd.f32 %v3810, %v3882
    %3884 = vmatprep.mubr.bf16.mxu0 %v1228
    %3885 = vmatmul.mubr.bf16.gmra.mrb[0].mxu0 %v1227
    %v3886 = vpop.f32.mrb[0].mxu0
    %v3887 = vadd.f32 %v3814, %v3886
    %v3888 = vpop.f32.mrb[0].mxu0
    %v3889 = vadd.f32 %v3816, %v3888
    %v3890 = vpop.f32.mrb[0].mxu0
    %v3891 = vadd.f32 %v3818, %v3890
    %v3892 = vpop.f32.mrb[0].mxu0
    %v3893 = vadd.f32 %v3820, %v3892
    %3894 = vmatprep.mubr.bf16.mxu0 %v1233
    %3895 = vmatmul.mubr.bf16.gmra.mrb[0].mxu0 %v1232
    %v3896 = vpop.f32.mrb[0].mxu0
    %v3897 = vadd.f32 %v3824, %v3896
    %v3898 = vpop.f32.mrb[0].mxu0
    %v3899 = vadd.f32 %v3826, %v3898
    %v3900 = vpop.f32.mrb[0].mxu0
    %v3901 = vadd.f32 %v3828, %v3900
    %v3902 = vpop.f32.mrb[0].mxu0
    %v3903 = vadd.f32 %v3830, %v3902
    %3904 = vdwg.mxu0
    %3905 = vmatprep.subr.bf16.mxu0 %v3752
    %3906 = vmatpush1.bf16.msra.mxu0 %v3751
    %3907 = vmatprep.subr.bf16.mxu0 %v3754
    %3908 = vmatpush1.bf16.msra.mxu0 %v3753
    %3909 = vmatprep.subr.bf16.mxu0 %v3756
    %3910 = vmatpush1.bf16.msra.mxu0 %v3755
    %3911 = vmatprep.subr.bf16.mxu0 %v3758
    %3912 = vmatpush1.bf16.msra.mxu0 %v3757
    %3913 = vmatprep.subr.bf16.mxu0 0
    %3914 = vmatpush1.bf16.msra.mxu0 0
    %3915 = vmatprep.subr.bf16.mxu0 0
    %3916 = vmatpush1.bf16.msra.mxu0 0
    %3917 = vmatprep.subr.bf16.mxu0 0
    %3918 = vmatpush1.bf16.msra.mxu0 0
    %3919 = vmatprep.subr.bf16.mxu0 0
    %3920 = vmatpush1.bf16.msra.mxu0 0
    %3921 = vmatprep.subr.bf16.mxu0 0
    %3922 = vmatpush1.bf16.msra.mxu0 0
    %3923 = vmatprep.subr.bf16.mxu0 0
    %3924 = vmatpush1.bf16.msra.mxu0 0
    %3925 = vmatprep.subr.bf16.mxu0 0
    %3926 = vmatpush1.bf16.msra.mxu0 0
    %3927 = vmatprep.subr.bf16.mxu0 0
    %3928 = vmatpush1.bf16.msra.mxu0 0
    %3929 = vmatprep.subr.bf16.mxu0 0
    %3930 = vmatpush1.bf16.msra.mxu0 0
    %3931 = vmatprep.subr.bf16.mxu0 0
    %3932 = vmatpush1.bf16.msra.mxu0 0
    %3933 = vmatprep.subr.bf16.mxu0 0
    %3934 = vmatpush1.bf16.msra.mxu0 0
    %3935 = vmatprep.subr.bf16.mxu0 0
    %3936 = vmatpush1.bf16.msra.mxu0 0
    %3937 = vmatprep.mubr.bf16.mxu0 0
    %3938 = vmatmul.mubr.bf16.gmra.mrb[0].mxu0 %v1253
    %v3939 = vpop.f32.mrb[0].mxu0
    %v3940 = vadd.f32 %v3867, %v3939
    %v3941 = vpop.f32.mrb[0].mxu0
    %v3942 = vadd.f32 %v3869, %v3941
    %v3943 = vpop.f32.mrb[0].mxu0
    %v3944 = vadd.f32 %v3871, %v3943
    %v3945 = vpop.f32.mrb[0].mxu0
    %v3946 = vadd.f32 %v3873, %v3945
    %3947 = vmatprep.mubr.bf16.mxu0 0
    %3948 = vmatmul.mubr.bf16.gmra.mrb[0].mxu0 %v1256
    %v3949 = vpop.f32.mrb[0].mxu0
    %v3950 = vadd.f32 %v3877, %v3949
    %v3951 = vpop.f32.mrb[0].mxu0
    %v3952 = vadd.f32 %v3879, %v3951
    %v3953 = vpop.f32.mrb[0].mxu0
    %v3954 = vadd.f32 %v3881, %v3953
    %v3955 = vpop.f32.mrb[0].mxu0
    %v3956 = vadd.f32 %v3883, %v3955
    %3957 = vmatprep.mubr.bf16.mxu0 0
    %3958 = vmatmul.mubr.bf16.gmra.mrb[0].mxu0 %v1259
    %v3959 = vpop.f32.mrb[0].mxu0
    %v3960 = vadd.f32 %v3887, %v3959
    %v3961 = vpop.f32.mrb[0].mxu0
    %v3962 = vadd.f32 %v3889, %v3961
    %v3963 = vpop.f32.mrb[0].mxu0
    %v3964 = vadd.f32 %v3891, %v3963
    %v3965 = vpop.f32.mrb[0].mxu0
    %v3966 = vadd.f32 %v3893, %v3965
    %3967 = vmatprep.mubr.bf16.mxu0 0
    %3968 = vmatmul.mubr.bf16.gmra.mrb[0].mxu0 %v1262
    %v3969 = vpop.f32.mrb[0].mxu0
    %v3970 = vadd.f32 %v3897, %v3969
    %v3971 = vpop.f32.mrb[0].mxu0
    %v3972 = vadd.f32 %v3899, %v3971
    %v3973 = vpop.f32.mrb[0].mxu0
    %v3974 = vadd.f32 %v3901, %v3973
    %v3975 = vpop.f32.mrb[0].mxu0
    %v3976 = vadd.f32 %v3903, %v3975
    %3977 = vdwg.mxu0
    %v3978 = vmax.f32 %v3940, 0.0
    %v3979 = vmax.f32 %v3942, 0.0
    %v3980 = vmax.f32 %v3944, 0.0
    %v3981 = vmax.f32 %v3946, 0.0
    %v3982 = vmax.f32 %v3950, 0.0
    %v3983 = vmax.f32 %v3952, 0.0
    %v3984 = vmax.f32 %v3954, 0.0
    %v3985 = vmax.f32 %v3956, 0.0
    %v3986 = vmax.f32 %v3960, 0.0
    %v3987 = vmax.f32 %v3962, 0.0
    %v3988 = vmax.f32 %v3964, 0.0
    %v3989 = vmax.f32 %v3966, 0.0
    %v3990 = vmax.f32 %v3970, 0.0
    %v3991 = vmax.f32 %v3972, 0.0
    %v3992 = vmax.f32 %v3974, 0.0
    %v3993 = vmax.f32 %v3976, 0.0
    %4010 = vrot.lane.b32.xlu0 %v3978, 17
    %v4011 = vpop.permute.xlu0 %4010
    %4012 = vrot.lane.b32.xlu0 %v3979, 17
    %v4013 = vpop.permute.xlu0 %4012
    %4014 = vrot.lane.b32.xlu0 %v3980, 17
    %v4015 = vpop.permute.xlu0 %4014
    %4016 = vrot.lane.b32.xlu0 %v3981, 17
    %v4017 = vpop.permute.xlu0 %4016
    %4018 = vrot.lane.b32.xlu0 %v3982, 17
    %v4019 = vpop.permute.xlu0 %4018
    %4020 = vrot.lane.b32.xlu0 %v3983, 17
    %v4021 = vpop.permute.xlu0 %4020
    %4022 = vrot.lane.b32.xlu0 %v3984, 17
    %v4023 = vpop.permute.xlu0 %4022
    %4024 = vrot.lane.b32.xlu0 %v3985, 17
    %v4025 = vpop.permute.xlu0 %4024
    %4026 = vrot.lane.b32.xlu0 %v3986, 17
    %v4027 = vpop.permute.xlu0 %4026
    %4028 = vrot.lane.b32.xlu0 %v3987, 17
    %v4029 = vpop.permute.xlu0 %4028
    %4030 = vrot.lane.b32.xlu0 %v3988, 17
    %v4031 = vpop.permute.xlu0 %4030
    %4032 = vrot.lane.b32.xlu0 %v3989, 17
    %v4033 = vpop.permute.xlu0 %4032
    %4034 = vrot.lane.b32.xlu0 %v3990, 17
    %v4035 = vpop.permute.xlu0 %4034
    %4036 = vrot.lane.b32.xlu0 %v3991, 17
    %v4037 = vpop.permute.xlu0 %4036
    %4038 = vrot.lane.b32.xlu0 %v3992, 17
    %v4039 = vpop.permute.xlu0 %4038
    %4040 = vrot.lane.b32.xlu0 %v3993, 17
    %v4041 = vpop.permute.xlu0 %4040
    %v4042 = vsel %vm218, %v4011, %v4013
    %v4043 = vsel %vm218, %v4015, %v4017
    %v4044 = vsel %vm218, %v4019, %v4021
    %v4045 = vsel %vm218, %v4023, %v4025
    %v4046 = vsel %vm218, %v4027, %v4029
    %v4047 = vsel %vm218, %v4031, %v4033
    %v4048 = vsel %vm218, %v4035, %v4037
    %v4049 = vsel %vm218, %v4039, %v4041
    %v4074 = vsel %vm218, 0.0, %v4011
    %v4075 = vsel %vm218, 0.0, %v4015
    %v4076 = vsel %vm218, 0.0, %v4019
    %v4077 = vsel %vm218, 0.0, %v4023
    %v4078 = vsel %vm218, 0.0, %v4027
    %v4079 = vsel %vm218, 0.0, %v4031
    %v4080 = vsel %vm218, 0.0, %v4035
    %v4081 = vsel %vm218, 0.0, %v4039
    %v4082 = vsel %vm218, %v4013, 0.0
    %v4083 = vsel %vm218, %v4017, 0.0
    %v4084 = vsel %vm218, %v4021, 0.0
    %v4085 = vsel %vm218, %v4025, 0.0
    %v4086 = vsel %vm218, %v4029, 0.0
    %v4087 = vsel %vm218, %v4033, 0.0
    %v4088 = vsel %vm218, %v4037, 0.0
    %v4089 = vsel %vm218, %v4041, 0.0
    %v4090 = vsel %vm271, %v4074, 0.0
    %v4091 = vsel %vm272, %v4042, 0.0
    %v4092 = vsel %vm271, %v4075, 0.0
    %v4093 = vsel %vm272, %v4043, 0.0
    %v4094 = vsel %vm271, %v4076, 0.0
    %v4095 = vsel %vm272, %v4044, 0.0
    %v4096 = vsel %vm271, %v4077, 0.0
    %v4097 = vsel %vm272, %v4045, 0.0
    %v4098 = vsel %vm271, %v4078, 0.0
    %v4099 = vsel %vm272, %v4046, 0.0
    %v4100 = vsel %vm271, %v4079, 0.0
    %v4101 = vsel %vm272, %v4047, 0.0
    %v4102 = vsel %vm271, %v4080, 0.0
    %v4103 = vsel %vm272, %v4048, 0.0
    %v4104 = vsel %vm271, %v4081, 0.0
    %v4105 = vsel %vm272, %v4049, 0.0
    %4122 = vrot.lane.b32.xlu0 %v4074, 126
    %v4123 = vpop.permute.xlu0 %4122
    %4124 = vrot.lane.b32.xlu0 %v4042, 126
    %v4125 = vpop.permute.xlu0 %4124
    %4126 = vrot.lane.b32.xlu0 %v4082, 126
    %v4127 = vpop.permute.xlu0 %4126
    %4128 = vrot.lane.b32.xlu0 %v4075, 126
    %v4129 = vpop.permute.xlu0 %4128
    %4130 = vrot.lane.b32.xlu0 %v4043, 126
    %v4131 = vpop.permute.xlu0 %4130
    %4132 = vrot.lane.b32.xlu0 %v4083, 126
    %v4133 = vpop.permute.xlu0 %4132
    %4134 = vrot.lane.b32.xlu0 %v4076, 126
    %v4135 = vpop.permute.xlu0 %4134
    %4136 = vrot.lane.b32.xlu0 %v4044, 126
    %v4137 = vpop.permute.xlu0 %4136
    %4138 = vrot.lane.b32.xlu0 %v4084, 126
    %v4139 = vpop.permute.xlu0 %4138
    %4140 = vrot.lane.b32.xlu0 %v4077, 126
    %v4141 = vpop.permute.xlu0 %4140
    %4142 = vrot.lane.b32.xlu0 %v4045, 126
    %v4143 = vpop.permute.xlu0 %4142
    %4144 = vrot.lane.b32.xlu0 %v4085, 126
    %v4145 = vpop.permute.xlu0 %4144
    %4146 = vrot.lane.b32.xlu0 %v4078, 126
    %v4147 = vpop.permute.xlu0 %4146
    %4148 = vrot.lane.b32.xlu0 %v4046, 126
    %v4149 = vpop.permute.xlu0 %4148
    %4150 = vrot.lane.b32.xlu0 %v4086, 126
    %v4151 = vpop.permute.xlu0 %4150
    %4152 = vrot.lane.b32.xlu0 %v4079, 126
    %v4153 = vpop.permute.xlu0 %4152
    %4154 = vrot.lane.b32.xlu0 %v4047, 126
    %v4155 = vpop.permute.xlu0 %4154
    %4156 = vrot.lane.b32.xlu0 %v4087, 126
    %v4157 = vpop.permute.xlu0 %4156
    %4158 = vrot.lane.b32.xlu0 %v4080, 126
    %v4159 = vpop.permute.xlu0 %4158
    %4160 = vrot.lane.b32.xlu0 %v4048, 126
    %v4161 = vpop.permute.xlu0 %4160
    %4162 = vrot.lane.b32.xlu0 %v4088, 126
    %v4163 = vpop.permute.xlu0 %4162
    %4164 = vrot.lane.b32.xlu0 %v4081, 126
    %v4165 = vpop.permute.xlu0 %4164
    %4166 = vrot.lane.b32.xlu0 %v4049, 126
    %v4167 = vpop.permute.xlu0 %4166
    %4168 = vrot.lane.b32.xlu0 %v4089, 126
    %v4169 = vpop.permute.xlu0 %4168
    %v4170 = vsel %vm359, %v4123, %v4125
    %v4171 = vsel %vm359, %v4125, %v4127
    %v4172 = vsel %vm359, %v4129, %v4131
    %v4173 = vsel %vm359, %v4131, %v4133
    %v4174 = vsel %vm359, %v4135, %v4137
    %v4175 = vsel %vm359, %v4137, %v4139
    %v4176 = vsel %vm359, %v4141, %v4143
    %v4177 = vsel %vm359, %v4143, %v4145
    %v4178 = vsel %vm359, %v4147, %v4149
    %v4179 = vsel %vm359, %v4149, %v4151
    %v4180 = vsel %vm359, %v4153, %v4155
    %v4181 = vsel %vm359, %v4155, %v4157
    %v4182 = vsel %vm359, %v4159, %v4161
    %v4183 = vsel %vm359, %v4161, %v4163
    %v4184 = vsel %vm359, %v4165, %v4167
    %v4185 = vsel %vm359, %v4167, %v4169
    %v4202 = vsel %vm293, %v4170, 0.0
    %v4203 = vsel %vm294, %v4171, 0.0
    %v4204 = vsel %vm293, %v4172, 0.0
    %v4205 = vsel %vm294, %v4173, 0.0
    %v4206 = vsel %vm293, %v4174, 0.0
    %v4207 = vsel %vm294, %v4175, 0.0
    %v4208 = vsel %vm293, %v4176, 0.0
    %v4209 = vsel %vm294, %v4177, 0.0
    %v4210 = vsel %vm293, %v4178, 0.0
    %v4211 = vsel %vm294, %v4179, 0.0
    %v4212 = vsel %vm293, %v4180, 0.0
    %v4213 = vsel %vm294, %v4181, 0.0
    %v4214 = vsel %vm293, %v4182, 0.0
    %v4215 = vsel %vm294, %v4183, 0.0
    %v4216 = vsel %vm293, %v4184, 0.0
    %v4217 = vsel %vm294, %v4185, 0.0
    %4218 = vrot.lane.b32.xlu0 %v4074, 112
    %v4219 = vpop.permute.xlu0 %4218
    %4220 = vrot.lane.b32.xlu0 %v4042, 112
    %v4221 = vpop.permute.xlu0 %4220
    %4222 = vrot.lane.b32.xlu0 %v4082, 112
    %v4223 = vpop.permute.xlu0 %4222
    %4224 = vrot.lane.b32.xlu0 %v4075, 112
    %v4225 = vpop.permute.xlu0 %4224
    %4226 = vrot.lane.b32.xlu0 %v4043, 112
    %v4227 = vpop.permute.xlu0 %4226
    %4228 = vrot.lane.b32.xlu0 %v4083, 112
    %v4229 = vpop.permute.xlu0 %4228
    %4230 = vrot.lane.b32.xlu0 %v4076, 112
    %v4231 = vpop.permute.xlu0 %4230
    %4232 = vrot.lane.b32.xlu0 %v4044, 112
    %v4233 = vpop.permute.xlu0 %4232
    %4234 = vrot.lane.b32.xlu0 %v4084, 112
    %v4235 = vpop.permute.xlu0 %4234
    %4236 = vrot.lane.b32.xlu0 %v4077, 112
    %v4237 = vpop.permute.xlu0 %4236
    %4238 = vrot.lane.b32.xlu0 %v4045, 112
    %v4239 = vpop.permute.xlu0 %4238
    %4240 = vrot.lane.b32.xlu0 %v4085, 112
    %v4241 = vpop.permute.xlu0 %4240
    %4242 = vrot.lane.b32.xlu0 %v4078, 112
    %v4243 = vpop.permute.xlu0 %4242
    %4244 = vrot.lane.b32.xlu0 %v4046, 112
    %v4245 = vpop.permute.xlu0 %4244
    %4246 = vrot.lane.b32.xlu0 %v4086, 112
    %v4247 = vpop.permute.xlu0 %4246
    %4248 = vrot.lane.b32.xlu0 %v4079, 112
    %v4249 = vpop.permute.xlu0 %4248
    %4250 = vrot.lane.b32.xlu0 %v4047, 112
    %v4251 = vpop.permute.xlu0 %4250
    %4252 = vrot.lane.b32.xlu0 %v4087, 112
    %v4253 = vpop.permute.xlu0 %4252
    %4254 = vrot.lane.b32.xlu0 %v4080, 112
    %v4255 = vpop.permute.xlu0 %4254
    %4256 = vrot.lane.b32.xlu0 %v4048, 112
    %v4257 = vpop.permute.xlu0 %4256
    %4258 = vrot.lane.b32.xlu0 %v4088, 112
    %v4259 = vpop.permute.xlu0 %4258
    %4260 = vrot.lane.b32.xlu0 %v4081, 112
    %v4261 = vpop.permute.xlu0 %4260
    %4262 = vrot.lane.b32.xlu0 %v4049, 112
    %v4263 = vpop.permute.xlu0 %4262
    %4264 = vrot.lane.b32.xlu0 %v4089, 112
    %v4265 = vpop.permute.xlu0 %4264
    %v4266 = vsel %vm456, %v4219, %v4221
    %v4267 = vsel %vm456, %v4221, %v4223
    %v4268 = vsel %vm456, %v4225, %v4227
    %v4269 = vsel %vm456, %v4227, %v4229
    %v4270 = vsel %vm456, %v4231, %v4233
    %v4271 = vsel %vm456, %v4233, %v4235
    %v4272 = vsel %vm456, %v4237, %v4239
    %v4273 = vsel %vm456, %v4239, %v4241
    %v4274 = vsel %vm456, %v4243, %v4245
    %v4275 = vsel %vm456, %v4245, %v4247
    %v4276 = vsel %vm456, %v4249, %v4251
    %v4277 = vsel %vm456, %v4251, %v4253
    %v4278 = vsel %vm456, %v4255, %v4257
    %v4279 = vsel %vm456, %v4257, %v4259
    %v4280 = vsel %vm456, %v4261, %v4263
    %v4281 = vsel %vm456, %v4263, %v4265
    %v4298 = vsel %vm271, %v4266, 0.0
    %v4299 = vsel %vm272, %v4267, 0.0
    %v4300 = vsel %vm271, %v4268, 0.0
    %v4301 = vsel %vm272, %v4269, 0.0
    %v4302 = vsel %vm271, %v4270, 0.0
    %v4303 = vsel %vm272, %v4271, 0.0
    %v4304 = vsel %vm271, %v4272, 0.0
    %v4305 = vsel %vm272, %v4273, 0.0
    %v4306 = vsel %vm271, %v4274, 0.0
    %v4307 = vsel %vm272, %v4275, 0.0
    %v4308 = vsel %vm271, %v4276, 0.0
    %v4309 = vsel %vm272, %v4277, 0.0
    %v4310 = vsel %vm271, %v4278, 0.0
    %v4311 = vsel %vm272, %v4279, 0.0
    %v4312 = vsel %vm271, %v4280, 0.0
    %v4313 = vsel %vm272, %v4281, 0.0
    %4314 = vrot.lane.b32.xlu0 %v4074, 110
    %v4315 = vpop.permute.xlu0 %4314
    %4316 = vrot.lane.b32.xlu0 %v4042, 110
    %v4317 = vpop.permute.xlu0 %4316
    %4318 = vrot.lane.b32.xlu0 %v4082, 110
    %v4319 = vpop.permute.xlu0 %4318
    %4320 = vrot.lane.b32.xlu0 %v4075, 110
    %v4321 = vpop.permute.xlu0 %4320
    %4322 = vrot.lane.b32.xlu0 %v4043, 110
    %v4323 = vpop.permute.xlu0 %4322
    %4324 = vrot.lane.b32.xlu0 %v4083, 110
    %v4325 = vpop.permute.xlu0 %4324
    %4326 = vrot.lane.b32.xlu0 %v4076, 110
    %v4327 = vpop.permute.xlu0 %4326
    %4328 = vrot.lane.b32.xlu0 %v4044, 110
    %v4329 = vpop.permute.xlu0 %4328
    %4330 = vrot.lane.b32.xlu0 %v4084, 110
    %v4331 = vpop.permute.xlu0 %4330
    %4332 = vrot.lane.b32.xlu0 %v4077, 110
    %v4333 = vpop.permute.xlu0 %4332
    %4334 = vrot.lane.b32.xlu0 %v4045, 110
    %v4335 = vpop.permute.xlu0 %4334
    %4336 = vrot.lane.b32.xlu0 %v4085, 110
    %v4337 = vpop.permute.xlu0 %4336
    %4338 = vrot.lane.b32.xlu0 %v4078, 110
    %v4339 = vpop.permute.xlu0 %4338
    %4340 = vrot.lane.b32.xlu0 %v4046, 110
    %v4341 = vpop.permute.xlu0 %4340
    %4342 = vrot.lane.b32.xlu0 %v4086, 110
    %v4343 = vpop.permute.xlu0 %4342
    %4344 = vrot.lane.b32.xlu0 %v4079, 110
    %v4345 = vpop.permute.xlu0 %4344
    %4346 = vrot.lane.b32.xlu0 %v4047, 110
    %v4347 = vpop.permute.xlu0 %4346
    %4348 = vrot.lane.b32.xlu0 %v4087, 110
    %v4349 = vpop.permute.xlu0 %4348
    %4350 = vrot.lane.b32.xlu0 %v4080, 110
    %v4351 = vpop.permute.xlu0 %4350
    %4352 = vrot.lane.b32.xlu0 %v4048, 110
    %v4353 = vpop.permute.xlu0 %4352
    %4354 = vrot.lane.b32.xlu0 %v4088, 110
    %v4355 = vpop.permute.xlu0 %4354
    %4356 = vrot.lane.b32.xlu0 %v4081, 110
    %v4357 = vpop.permute.xlu0 %4356
    %4358 = vrot.lane.b32.xlu0 %v4049, 110
    %v4359 = vpop.permute.xlu0 %4358
    %4360 = vrot.lane.b32.xlu0 %v4089, 110
    %v4361 = vpop.permute.xlu0 %4360
    %v4362 = vsel %vm553, %v4315, %v4317
    %v4363 = vsel %vm553, %v4317, %v4319
    %v4364 = vsel %vm553, %v4321, %v4323
    %v4365 = vsel %vm553, %v4323, %v4325
    %v4366 = vsel %vm553, %v4327, %v4329
    %v4367 = vsel %vm553, %v4329, %v4331
    %v4368 = vsel %vm553, %v4333, %v4335
    %v4369 = vsel %vm553, %v4335, %v4337
    %v4370 = vsel %vm553, %v4339, %v4341
    %v4371 = vsel %vm553, %v4341, %v4343
    %v4372 = vsel %vm553, %v4345, %v4347
    %v4373 = vsel %vm553, %v4347, %v4349
    %v4374 = vsel %vm553, %v4351, %v4353
    %v4375 = vsel %vm553, %v4353, %v4355
    %v4376 = vsel %vm553, %v4357, %v4359
    %v4377 = vsel %vm553, %v4359, %v4361
    %v4394 = vsel %vm293, %v4362, 0.0
    %v4395 = vsel %vm294, %v4363, 0.0
    %v4396 = vsel %vm293, %v4364, 0.0
    %v4397 = vsel %vm294, %v4365, 0.0
    %v4398 = vsel %vm293, %v4366, 0.0
    %v4399 = vsel %vm294, %v4367, 0.0
    %v4400 = vsel %vm293, %v4368, 0.0
    %v4401 = vsel %vm294, %v4369, 0.0
    %v4402 = vsel %vm293, %v4370, 0.0
    %v4403 = vsel %vm294, %v4371, 0.0
    %v4404 = vsel %vm293, %v4372, 0.0
    %v4405 = vsel %vm294, %v4373, 0.0
    %v4406 = vsel %vm293, %v4374, 0.0
    %v4407 = vsel %vm294, %v4375, 0.0
    %v4408 = vsel %vm293, %v4376, 0.0
    %v4409 = vsel %vm294, %v4377, 0.0
    %4410 = vrot.lane.b32.xlu0 %v4074, 96
    %v4411 = vpop.permute.xlu0 %4410
    %4412 = vrot.lane.b32.xlu0 %v4042, 96
    %v4413 = vpop.permute.xlu0 %4412
    %4414 = vrot.lane.b32.xlu0 %v4082, 96
    %v4415 = vpop.permute.xlu0 %4414
    %4416 = vrot.lane.b32.xlu0 %v4075, 96
    %v4417 = vpop.permute.xlu0 %4416
    %4418 = vrot.lane.b32.xlu0 %v4043, 96
    %v4419 = vpop.permute.xlu0 %4418
    %4420 = vrot.lane.b32.xlu0 %v4083, 96
    %v4421 = vpop.permute.xlu0 %4420
    %4422 = vrot.lane.b32.xlu0 %v4076, 96
    %v4423 = vpop.permute.xlu0 %4422
    %4424 = vrot.lane.b32.xlu0 %v4044, 96
    %v4425 = vpop.permute.xlu0 %4424
    %4426 = vrot.lane.b32.xlu0 %v4084, 96
    %v4427 = vpop.permute.xlu0 %4426
    %4428 = vrot.lane.b32.xlu0 %v4077, 96
    %v4429 = vpop.permute.xlu0 %4428
    %4430 = vrot.lane.b32.xlu0 %v4045, 96
    %v4431 = vpop.permute.xlu0 %4430
    %4432 = vrot.lane.b32.xlu0 %v4085, 96
    %v4433 = vpop.permute.xlu0 %4432
    %4434 = vrot.lane.b32.xlu0 %v4078, 96
    %v4435 = vpop.permute.xlu0 %4434
    %4436 = vrot.lane.b32.xlu0 %v4046, 96
    %v4437 = vpop.permute.xlu0 %4436
    %4438 = vrot.lane.b32.xlu0 %v4086, 96
    %v4439 = vpop.permute.xlu0 %4438
    %4440 = vrot.lane.b32.xlu0 %v4079, 96
    %v4441 = vpop.permute.xlu0 %4440
    %4442 = vrot.lane.b32.xlu0 %v4047, 96
    %v4443 = vpop.permute.xlu0 %4442
    %4444 = vrot.lane.b32.xlu0 %v4087, 96
    %v4445 = vpop.permute.xlu0 %4444
    %4446 = vrot.lane.b32.xlu0 %v4080, 96
    %v4447 = vpop.permute.xlu0 %4446
    %4448 = vrot.lane.b32.xlu0 %v4048, 96
    %v4449 = vpop.permute.xlu0 %4448
    %4450 = vrot.lane.b32.xlu0 %v4088, 96
    %v4451 = vpop.permute.xlu0 %4450
    %4452 = vrot.lane.b32.xlu0 %v4081, 96
    %v4453 = vpop.permute.xlu0 %4452
    %4454 = vrot.lane.b32.xlu0 %v4049, 96
    %v4455 = vpop.permute.xlu0 %4454
    %4456 = vrot.lane.b32.xlu0 %v4089, 96
    %v4457 = vpop.permute.xlu0 %4456
    %v4458 = vsel %vm650, %v4411, %v4413
    %v4459 = vsel %vm650, %v4413, %v4415
    %v4460 = vsel %vm650, %v4417, %v4419
    %v4461 = vsel %vm650, %v4419, %v4421
    %v4462 = vsel %vm650, %v4423, %v4425
    %v4463 = vsel %vm650, %v4425, %v4427
    %v4464 = vsel %vm650, %v4429, %v4431
    %v4465 = vsel %vm650, %v4431, %v4433
    %v4466 = vsel %vm650, %v4435, %v4437
    %v4467 = vsel %vm650, %v4437, %v4439
    %v4468 = vsel %vm650, %v4441, %v4443
    %v4469 = vsel %vm650, %v4443, %v4445
    %v4470 = vsel %vm650, %v4447, %v4449
    %v4471 = vsel %vm650, %v4449, %v4451
    %v4472 = vsel %vm650, %v4453, %v4455
    %v4473 = vsel %vm650, %v4455, %v4457
    %v4490 = vsel %vm271, %v4458, 0.0
    %v4491 = vsel %vm272, %v4459, 0.0
    %v4492 = vsel %vm271, %v4460, 0.0
    %v4493 = vsel %vm272, %v4461, 0.0
    %v4494 = vsel %vm271, %v4462, 0.0
    %v4495 = vsel %vm272, %v4463, 0.0
    %v4496 = vsel %vm271, %v4464, 0.0
    %v4497 = vsel %vm272, %v4465, 0.0
    %v4498 = vsel %vm271, %v4466, 0.0
    %v4499 = vsel %vm272, %v4467, 0.0
    %v4500 = vsel %vm271, %v4468, 0.0
    %v4501 = vsel %vm272, %v4469, 0.0
    %v4502 = vsel %vm271, %v4470, 0.0
    %v4503 = vsel %vm272, %v4471, 0.0
    %v4504 = vsel %vm271, %v4472, 0.0
    %v4505 = vsel %vm272, %v4473, 0.0
    %4506 = vrot.lane.b32.xlu0 %v4074, 94
    %v4507 = vpop.permute.xlu0 %4506
    %4508 = vrot.lane.b32.xlu0 %v4042, 94
    %v4509 = vpop.permute.xlu0 %4508
    %4510 = vrot.lane.b32.xlu0 %v4082, 94
    %v4511 = vpop.permute.xlu0 %4510
    %4512 = vrot.lane.b32.xlu0 %v4075, 94
    %v4513 = vpop.permute.xlu0 %4512
    %4514 = vrot.lane.b32.xlu0 %v4043, 94
    %v4515 = vpop.permute.xlu0 %4514
    %4516 = vrot.lane.b32.xlu0 %v4083, 94
    %v4517 = vpop.permute.xlu0 %4516
    %4518 = vrot.lane.b32.xlu0 %v4076, 94
    %v4519 = vpop.permute.xlu0 %4518
    %4520 = vrot.lane.b32.xlu0 %v4044, 94
    %v4521 = vpop.permute.xlu0 %4520
    %4522 = vrot.lane.b32.xlu0 %v4084, 94
    %v4523 = vpop.permute.xlu0 %4522
    %4524 = vrot.lane.b32.xlu0 %v4077, 94
    %v4525 = vpop.permute.xlu0 %4524
    %4526 = vrot.lane.b32.xlu0 %v4045, 94
    %v4527 = vpop.permute.xlu0 %4526
    %4528 = vrot.lane.b32.xlu0 %v4085, 94
    %v4529 = vpop.permute.xlu0 %4528
    %4530 = vrot.lane.b32.xlu0 %v4078, 94
    %v4531 = vpop.permute.xlu0 %4530
    %4532 = vrot.lane.b32.xlu0 %v4046, 94
    %v4533 = vpop.permute.xlu0 %4532
    %4534 = vrot.lane.b32.xlu0 %v4086, 94
    %v4535 = vpop.permute.xlu0 %4534
    %4536 = vrot.lane.b32.xlu0 %v4079, 94
    %v4537 = vpop.permute.xlu0 %4536
    %4538 = vrot.lane.b32.xlu0 %v4047, 94
    %v4539 = vpop.permute.xlu0 %4538
    %4540 = vrot.lane.b32.xlu0 %v4087, 94
    %v4541 = vpop.permute.xlu0 %4540
    %4542 = vrot.lane.b32.xlu0 %v4080, 94
    %v4543 = vpop.permute.xlu0 %4542
    %4544 = vrot.lane.b32.xlu0 %v4048, 94
    %v4545 = vpop.permute.xlu0 %4544
    %4546 = vrot.lane.b32.xlu0 %v4088, 94
    %v4547 = vpop.permute.xlu0 %4546
    %4548 = vrot.lane.b32.xlu0 %v4081, 94
    %v4549 = vpop.permute.xlu0 %4548
    %4550 = vrot.lane.b32.xlu0 %v4049, 94
    %v4551 = vpop.permute.xlu0 %4550
    %4552 = vrot.lane.b32.xlu0 %v4089, 94
    %v4553 = vpop.permute.xlu0 %4552
    %v4554 = vsel %vm747, %v4507, %v4509
    %v4555 = vsel %vm747, %v4509, %v4511
    %v4556 = vsel %vm747, %v4513, %v4515
    %v4557 = vsel %vm747, %v4515, %v4517
    %v4558 = vsel %vm747, %v4519, %v4521
    %v4559 = vsel %vm747, %v4521, %v4523
    %v4560 = vsel %vm747, %v4525, %v4527
    %v4561 = vsel %vm747, %v4527, %v4529
    %v4562 = vsel %vm747, %v4531, %v4533
    %v4563 = vsel %vm747, %v4533, %v4535
    %v4564 = vsel %vm747, %v4537, %v4539
    %v4565 = vsel %vm747, %v4539, %v4541
    %v4566 = vsel %vm747, %v4543, %v4545
    %v4567 = vsel %vm747, %v4545, %v4547
    %v4568 = vsel %vm747, %v4549, %v4551
    %v4569 = vsel %vm747, %v4551, %v4553
    %v4586 = vsel %vm293, %v4554, 0.0
    %v4587 = vsel %vm294, %v4555, 0.0
    %v4588 = vsel %vm293, %v4556, 0.0
    %v4589 = vsel %vm294, %v4557, 0.0
    %v4590 = vsel %vm293, %v4558, 0.0
    %v4591 = vsel %vm294, %v4559, 0.0
    %v4592 = vsel %vm293, %v4560, 0.0
    %v4593 = vsel %vm294, %v4561, 0.0
    %v4594 = vsel %vm293, %v4562, 0.0
    %v4595 = vsel %vm294, %v4563, 0.0
    %v4596 = vsel %vm293, %v4564, 0.0
    %v4597 = vsel %vm294, %v4565, 0.0
    %v4598 = vsel %vm293, %v4566, 0.0
    %v4599 = vsel %vm294, %v4567, 0.0
    %v4600 = vsel %vm293, %v4568, 0.0
    %v4601 = vsel %vm294, %v4569, 0.0
    %4602 = vrot.lane.b32.xlu0 %v4074, 127
    %v4603 = vpop.permute.xlu0 %4602
    %4604 = vrot.lane.b32.xlu0 %v4042, 127
    %v4605 = vpop.permute.xlu0 %4604
    %4606 = vrot.lane.b32.xlu0 %v4082, 127
    %v4607 = vpop.permute.xlu0 %4606
    %4608 = vrot.lane.b32.xlu0 %v4075, 127
    %v4609 = vpop.permute.xlu0 %4608
    %4610 = vrot.lane.b32.xlu0 %v4043, 127
    %v4611 = vpop.permute.xlu0 %4610
    %4612 = vrot.lane.b32.xlu0 %v4083, 127
    %v4613 = vpop.permute.xlu0 %4612
    %4614 = vrot.lane.b32.xlu0 %v4076, 127
    %v4615 = vpop.permute.xlu0 %4614
    %4616 = vrot.lane.b32.xlu0 %v4044, 127
    %v4617 = vpop.permute.xlu0 %4616
    %4618 = vrot.lane.b32.xlu0 %v4084, 127
    %v4619 = vpop.permute.xlu0 %4618
    %4620 = vrot.lane.b32.xlu0 %v4077, 127
    %v4621 = vpop.permute.xlu0 %4620
    %4622 = vrot.lane.b32.xlu0 %v4045, 127
    %v4623 = vpop.permute.xlu0 %4622
    %4624 = vrot.lane.b32.xlu0 %v4085, 127
    %v4625 = vpop.permute.xlu0 %4624
    %4626 = vrot.lane.b32.xlu0 %v4078, 127
    %v4627 = vpop.permute.xlu0 %4626
    %4628 = vrot.lane.b32.xlu0 %v4046, 127
    %v4629 = vpop.permute.xlu0 %4628
    %4630 = vrot.lane.b32.xlu0 %v4086, 127
    %v4631 = vpop.permute.xlu0 %4630
    %4632 = vrot.lane.b32.xlu0 %v4079, 127
    %v4633 = vpop.permute.xlu0 %4632
    %4634 = vrot.lane.b32.xlu0 %v4047, 127
    %v4635 = vpop.permute.xlu0 %4634
    %4636 = vrot.lane.b32.xlu0 %v4087, 127
    %v4637 = vpop.permute.xlu0 %4636
    %4638 = vrot.lane.b32.xlu0 %v4080, 127
    %v4639 = vpop.permute.xlu0 %4638
    %4640 = vrot.lane.b32.xlu0 %v4048, 127
    %v4641 = vpop.permute.xlu0 %4640
    %4642 = vrot.lane.b32.xlu0 %v4088, 127
    %v4643 = vpop.permute.xlu0 %4642
    %4644 = vrot.lane.b32.xlu0 %v4081, 127
    %v4645 = vpop.permute.xlu0 %4644
    %4646 = vrot.lane.b32.xlu0 %v4049, 127
    %v4647 = vpop.permute.xlu0 %4646
    %4648 = vrot.lane.b32.xlu0 %v4089, 127
    %v4649 = vpop.permute.xlu0 %4648
    %v4650 = vsel %vm844, %v4603, %v4605
    %v4651 = vsel %vm844, %v4605, %v4607
    %v4652 = vsel %vm844, %v4609, %v4611
    %v4653 = vsel %vm844, %v4611, %v4613
    %v4654 = vsel %vm844, %v4615, %v4617
    %v4655 = vsel %vm844, %v4617, %v4619
    %v4656 = vsel %vm844, %v4621, %v4623
    %v4657 = vsel %vm844, %v4623, %v4625
    %v4658 = vsel %vm844, %v4627, %v4629
    %v4659 = vsel %vm844, %v4629, %v4631
    %v4660 = vsel %vm844, %v4633, %v4635
    %v4661 = vsel %vm844, %v4635, %v4637
    %v4662 = vsel %vm844, %v4639, %v4641
    %v4663 = vsel %vm844, %v4641, %v4643
    %v4664 = vsel %vm844, %v4645, %v4647
    %v4665 = vsel %vm844, %v4647, %v4649
    %4682 = vrot.lane.b32.xlu0 %v4074, 111
    %v4683 = vpop.permute.xlu0 %4682
    %4684 = vrot.lane.b32.xlu0 %v4042, 111
    %v4685 = vpop.permute.xlu0 %4684
    %4686 = vrot.lane.b32.xlu0 %v4082, 111
    %v4687 = vpop.permute.xlu0 %4686
    %4688 = vrot.lane.b32.xlu0 %v4075, 111
    %v4689 = vpop.permute.xlu0 %4688
    %4690 = vrot.lane.b32.xlu0 %v4043, 111
    %v4691 = vpop.permute.xlu0 %4690
    %4692 = vrot.lane.b32.xlu0 %v4083, 111
    %v4693 = vpop.permute.xlu0 %4692
    %4694 = vrot.lane.b32.xlu0 %v4076, 111
    %v4695 = vpop.permute.xlu0 %4694
    %4696 = vrot.lane.b32.xlu0 %v4044, 111
    %v4697 = vpop.permute.xlu0 %4696
    %4698 = vrot.lane.b32.xlu0 %v4084, 111
    %v4699 = vpop.permute.xlu0 %4698
    %4700 = vrot.lane.b32.xlu0 %v4077, 111
    %v4701 = vpop.permute.xlu0 %4700
    %4702 = vrot.lane.b32.xlu0 %v4045, 111
    %v4703 = vpop.permute.xlu0 %4702
    %4704 = vrot.lane.b32.xlu0 %v4085, 111
    %v4705 = vpop.permute.xlu0 %4704
    %4706 = vrot.lane.b32.xlu0 %v4078, 111
    %v4707 = vpop.permute.xlu0 %4706
    %4708 = vrot.lane.b32.xlu0 %v4046, 111
    %v4709 = vpop.permute.xlu0 %4708
    %4710 = vrot.lane.b32.xlu0 %v4086, 111
    %v4711 = vpop.permute.xlu0 %4710
    %4712 = vrot.lane.b32.xlu0 %v4079, 111
    %v4713 = vpop.permute.xlu0 %4712
    %4714 = vrot.lane.b32.xlu0 %v4047, 111
    %v4715 = vpop.permute.xlu0 %4714
    %4716 = vrot.lane.b32.xlu0 %v4087, 111
    %v4717 = vpop.permute.xlu0 %4716
    %4718 = vrot.lane.b32.xlu0 %v4080, 111
    %v4719 = vpop.permute.xlu0 %4718
    %4720 = vrot.lane.b32.xlu0 %v4048, 111
    %v4721 = vpop.permute.xlu0 %4720
    %4722 = vrot.lane.b32.xlu0 %v4088, 111
    %v4723 = vpop.permute.xlu0 %4722
    %4724 = vrot.lane.b32.xlu0 %v4081, 111
    %v4725 = vpop.permute.xlu0 %4724
    %4726 = vrot.lane.b32.xlu0 %v4049, 111
    %v4727 = vpop.permute.xlu0 %4726
    %4728 = vrot.lane.b32.xlu0 %v4089, 111
    %v4729 = vpop.permute.xlu0 %4728
    %v4730 = vsel %vm925, %v4683, %v4685
    %v4731 = vsel %vm925, %v4685, %v4687
    %v4732 = vsel %vm925, %v4689, %v4691
    %v4733 = vsel %vm925, %v4691, %v4693
    %v4734 = vsel %vm925, %v4695, %v4697
    %v4735 = vsel %vm925, %v4697, %v4699
    %v4736 = vsel %vm925, %v4701, %v4703
    %v4737 = vsel %vm925, %v4703, %v4705
    %v4738 = vsel %vm925, %v4707, %v4709
    %v4739 = vsel %vm925, %v4709, %v4711
    %v4740 = vsel %vm925, %v4713, %v4715
    %v4741 = vsel %vm925, %v4715, %v4717
    %v4742 = vsel %vm925, %v4719, %v4721
    %v4743 = vsel %vm925, %v4721, %v4723
    %v4744 = vsel %vm925, %v4725, %v4727
    %v4745 = vsel %vm925, %v4727, %v4729
    %4762 = vrot.lane.b32.xlu0 %v4074, 95
    %v4763 = vpop.permute.xlu0 %4762
    %4764 = vrot.lane.b32.xlu0 %v4042, 95
    %v4765 = vpop.permute.xlu0 %4764
    %4766 = vrot.lane.b32.xlu0 %v4082, 95
    %v4767 = vpop.permute.xlu0 %4766
    %4768 = vrot.lane.b32.xlu0 %v4075, 95
    %v4769 = vpop.permute.xlu0 %4768
    %4770 = vrot.lane.b32.xlu0 %v4043, 95
    %v4771 = vpop.permute.xlu0 %4770
    %4772 = vrot.lane.b32.xlu0 %v4083, 95
    %v4773 = vpop.permute.xlu0 %4772
    %4774 = vrot.lane.b32.xlu0 %v4076, 95
    %v4775 = vpop.permute.xlu0 %4774
    %4776 = vrot.lane.b32.xlu0 %v4044, 95
    %v4777 = vpop.permute.xlu0 %4776
    %4778 = vrot.lane.b32.xlu0 %v4084, 95
    %v4779 = vpop.permute.xlu0 %4778
    %4780 = vrot.lane.b32.xlu0 %v4077, 95
    %v4781 = vpop.permute.xlu0 %4780
    %4782 = vrot.lane.b32.xlu0 %v4045, 95
    %v4783 = vpop.permute.xlu0 %4782
    %4784 = vrot.lane.b32.xlu0 %v4085, 95
    %v4785 = vpop.permute.xlu0 %4784
    %4786 = vrot.lane.b32.xlu0 %v4078, 95
    %v4787 = vpop.permute.xlu0 %4786
    %4788 = vrot.lane.b32.xlu0 %v4046, 95
    %v4789 = vpop.permute.xlu0 %4788
    %4790 = vrot.lane.b32.xlu0 %v4086, 95
    %v4791 = vpop.permute.xlu0 %4790
    %4792 = vrot.lane.b32.xlu0 %v4079, 95
    %v4793 = vpop.permute.xlu0 %4792
    %4794 = vrot.lane.b32.xlu0 %v4047, 95
    %v4795 = vpop.permute.xlu0 %4794
    %4796 = vrot.lane.b32.xlu0 %v4087, 95
    %v4797 = vpop.permute.xlu0 %4796
    %4798 = vrot.lane.b32.xlu0 %v4080, 95
    %v4799 = vpop.permute.xlu0 %4798
    %4800 = vrot.lane.b32.xlu0 %v4048, 95
    %v4801 = vpop.permute.xlu0 %4800
    %4802 = vrot.lane.b32.xlu0 %v4088, 95
    %v4803 = vpop.permute.xlu0 %4802
    %4804 = vrot.lane.b32.xlu0 %v4081, 95
    %v4805 = vpop.permute.xlu0 %4804
    %4806 = vrot.lane.b32.xlu0 %v4049, 95
    %v4807 = vpop.permute.xlu0 %4806
    %4808 = vrot.lane.b32.xlu0 %v4089, 95
    %v4809 = vpop.permute.xlu0 %4808
    %v4810 = vsel %vm1006, %v4763, %v4765
    %v4811 = vsel %vm1006, %v4765, %v4767
    %v4812 = vsel %vm1006, %v4769, %v4771
    %v4813 = vsel %vm1006, %v4771, %v4773
    %v4814 = vsel %vm1006, %v4775, %v4777
    %v4815 = vsel %vm1006, %v4777, %v4779
    %v4816 = vsel %vm1006, %v4781, %v4783
    %v4817 = vsel %vm1006, %v4783, %v4785
    %v4818 = vsel %vm1006, %v4787, %v4789
    %v4819 = vsel %vm1006, %v4789, %v4791
    %v4820 = vsel %vm1006, %v4793, %v4795
    %v4821 = vsel %vm1006, %v4795, %v4797
    %v4822 = vsel %vm1006, %v4799, %v4801
    %v4823 = vsel %vm1006, %v4801, %v4803
    %v4824 = vsel %vm1006, %v4805, %v4807
    %v4825 = vsel %vm1006, %v4807, %v4809
    %v4842 = vpack.c.bf16 %v4092, %v4090
    %v4843 = vpack.c.bf16 %v4093, %v4091
    %v4844 = vpack.c.bf16 %v4096, %v4094
    %v4845 = vpack.c.bf16 %v4097, %v4095
    %v4846 = vpack.c.bf16 %v4100, %v4098
    %v4847 = vpack.c.bf16 %v4101, %v4099
    %v4848 = vpack.c.bf16 %v4104, %v4102
    %v4849 = vpack.c.bf16 %v4105, %v4103
    %v4850 = vpack.c.bf16 %v4652, %v4650
    %v4851 = vpack.c.bf16 %v4653, %v4651
    %v4852 = vpack.c.bf16 %v4656, %v4654
    %v4853 = vpack.c.bf16 %v4657, %v4655
    %v4854 = vpack.c.bf16 %v4660, %v4658
    %v4855 = vpack.c.bf16 %v4661, %v4659
    %v4856 = vpack.c.bf16 %v4664, %v4662
    %v4857 = vpack.c.bf16 %v4665, %v4663
    %v4858 = vpack.c.bf16 %v4204, %v4202
    %v4859 = vpack.c.bf16 %v4205, %v4203
    %v4860 = vpack.c.bf16 %v4208, %v4206
    %v4861 = vpack.c.bf16 %v4209, %v4207
    %v4862 = vpack.c.bf16 %v4212, %v4210
    %v4863 = vpack.c.bf16 %v4213, %v4211
    %v4864 = vpack.c.bf16 %v4216, %v4214
    %v4865 = vpack.c.bf16 %v4217, %v4215
    %v4866 = vpack.c.bf16 %v4300, %v4298
    %v4867 = vpack.c.bf16 %v4301, %v4299
    %v4868 = vpack.c.bf16 %v4304, %v4302
    %v4869 = vpack.c.bf16 %v4305, %v4303
    %v4870 = vpack.c.bf16 %v4308, %v4306
    %v4871 = vpack.c.bf16 %v4309, %v4307
    %v4872 = vpack.c.bf16 %v4312, %v4310
    %v4873 = vpack.c.bf16 %v4313, %v4311
    %v4874 = vpack.c.bf16 %v4732, %v4730
    %v4875 = vpack.c.bf16 %v4733, %v4731
    %v4876 = vpack.c.bf16 %v4736, %v4734
    %v4877 = vpack.c.bf16 %v4737, %v4735
    %v4878 = vpack.c.bf16 %v4740, %v4738
    %v4879 = vpack.c.bf16 %v4741, %v4739
    %v4880 = vpack.c.bf16 %v4744, %v4742
    %v4881 = vpack.c.bf16 %v4745, %v4743
    %v4882 = vpack.c.bf16 %v4396, %v4394
    %v4883 = vpack.c.bf16 %v4397, %v4395
    %v4884 = vpack.c.bf16 %v4400, %v4398
    %v4885 = vpack.c.bf16 %v4401, %v4399
    %v4886 = vpack.c.bf16 %v4404, %v4402
    %v4887 = vpack.c.bf16 %v4405, %v4403
    %v4888 = vpack.c.bf16 %v4408, %v4406
    %v4889 = vpack.c.bf16 %v4409, %v4407
    %v4890 = vpack.c.bf16 %v4492, %v4490
    %v4891 = vpack.c.bf16 %v4493, %v4491
    %v4892 = vpack.c.bf16 %v4496, %v4494
    %v4893 = vpack.c.bf16 %v4497, %v4495
    %v4894 = vpack.c.bf16 %v4500, %v4498
    %v4895 = vpack.c.bf16 %v4501, %v4499
    %v4896 = vpack.c.bf16 %v4504, %v4502
    %v4897 = vpack.c.bf16 %v4505, %v4503
    %v4898 = vpack.c.bf16 %v4812, %v4810
    %v4899 = vpack.c.bf16 %v4813, %v4811
    %v4900 = vpack.c.bf16 %v4816, %v4814
    %v4901 = vpack.c.bf16 %v4817, %v4815
    %v4902 = vpack.c.bf16 %v4820, %v4818
    %v4903 = vpack.c.bf16 %v4821, %v4819
    %v4904 = vpack.c.bf16 %v4824, %v4822
    %v4905 = vpack.c.bf16 %v4825, %v4823
    %v4906 = vpack.c.bf16 %v4588, %v4586
    %v4907 = vpack.c.bf16 %v4589, %v4587
    %v4908 = vpack.c.bf16 %v4592, %v4590
    %v4909 = vpack.c.bf16 %v4593, %v4591
    %v4910 = vpack.c.bf16 %v4596, %v4594
    %v4911 = vpack.c.bf16 %v4597, %v4595
    %v4912 = vpack.c.bf16 %v4600, %v4598
    %v4913 = vpack.c.bf16 %v4601, %v4599
    %4914 = vmatprep.subr.bf16.mxu0 %v4843
    %4915 = vmatpush1.bf16.msra.mxu0 %v4842
    %4916 = vmatprep.subr.bf16.mxu0 %v4845
    %4917 = vmatpush1.bf16.msra.mxu0 %v4844
    %4918 = vmatprep.subr.bf16.mxu0 %v4847
    %4919 = vmatpush1.bf16.msra.mxu0 %v4846
    %4920 = vmatprep.subr.bf16.mxu0 %v4849
    %4921 = vmatpush1.bf16.msra.mxu0 %v4848
    %4922 = vmatprep.subr.bf16.mxu0 %v4851
    %4923 = vmatpush1.bf16.msra.mxu0 %v4850
    %4924 = vmatprep.subr.bf16.mxu0 %v4853
    %4925 = vmatpush1.bf16.msra.mxu0 %v4852
    %4926 = vmatprep.subr.bf16.mxu0 %v4855
    %4927 = vmatpush1.bf16.msra.mxu0 %v4854
    %4928 = vmatprep.subr.bf16.mxu0 %v4857
    %4929 = vmatpush1.bf16.msra.mxu0 %v4856
    %4930 = vmatprep.subr.bf16.mxu0 %v4859
    %4931 = vmatpush1.bf16.msra.mxu0 %v4858
    %4932 = vmatprep.subr.bf16.mxu0 %v4861
    %4933 = vmatpush1.bf16.msra.mxu0 %v4860
    %4934 = vmatprep.subr.bf16.mxu0 %v4863
    %4935 = vmatpush1.bf16.msra.mxu0 %v4862
    %4936 = vmatprep.subr.bf16.mxu0 %v4865
    %4937 = vmatpush1.bf16.msra.mxu0 %v4864
    %4938 = vmatprep.subr.bf16.mxu0 %v4867
    %4939 = vmatpush1.bf16.msra.mxu0 %v4866
    %4940 = vmatprep.subr.bf16.mxu0 %v4869
    %4941 = vmatpush1.bf16.msra.mxu0 %v4868
    %4942 = vmatprep.subr.bf16.mxu0 %v4871
    %4943 = vmatpush1.bf16.msra.mxu0 %v4870
    %4944 = vmatprep.subr.bf16.mxu0 %v4873
    %4945 = vmatpush1.bf16.msra.mxu0 %v4872
    %4946 = vmatprep.mubr.bf16.mxu0 %v2524
    %4947 = vmatmul.mubr.bf16.gmra.mrb[0].mxu0 %v2523
    %v4948 = vpop.f32.mrb[0].mxu0
    %v4949 = vadd.f32 %v2422, %v4948
    %v4950 = vpop.f32.mrb[0].mxu0
    %v4951 = vadd.f32 %v2422, %v4950
    %v4952 = vpop.f32.mrb[0].mxu0
    %v4953 = vadd.f32 %v2427, %v4952
    %v4954 = vpop.f32.mrb[0].mxu0
    %v4955 = vadd.f32 %v2427, %v4954
    %4956 = vmatprep.mubr.bf16.mxu0 %v2529
    %4957 = vmatmul.mubr.bf16.gmra.mrb[0].mxu0 %v2528
    %v4958 = vpop.f32.mrb[0].mxu0
    %v4959 = vadd.f32 %v2432, %v4958
    %v4960 = vpop.f32.mrb[0].mxu0
    %v4961 = vadd.f32 %v2432, %v4960
    %v4962 = vpop.f32.mrb[0].mxu0
    %v4963 = vadd.f32 %v2437, %v4962
    %v4964 = vpop.f32.mrb[0].mxu0
    %v4965 = vadd.f32 %v2437, %v4964
    %4966 = vmatprep.mubr.bf16.mxu0 %v2534
    %4967 = vmatmul.mubr.bf16.gmra.mrb[0].mxu0 %v2533
    %v4968 = vpop.f32.mrb[0].mxu0
    %v4969 = vadd.f32 %v2442, %v4968
    %v4970 = vpop.f32.mrb[0].mxu0
    %v4971 = vadd.f32 %v2442, %v4970
    %v4972 = vpop.f32.mrb[0].mxu0
    %v4973 = vadd.f32 %v2447, %v4972
    %v4974 = vpop.f32.mrb[0].mxu0
    %v4975 = vadd.f32 %v2447, %v4974
    %4976 = vmatprep.mubr.bf16.mxu0 %v2539
    %4977 = vmatmul.mubr.bf16.gmra.mrb[0].mxu0 %v2538
    %v4978 = vpop.f32.mrb[0].mxu0
    %v4979 = vadd.f32 %v2452, %v4978
    %v4980 = vpop.f32.mrb[0].mxu0
    %v4981 = vadd.f32 %v2452, %v4980
    %v4982 = vpop.f32.mrb[0].mxu0
    %v4983 = vadd.f32 %v2457, %v4982
    %v4984 = vpop.f32.mrb[0].mxu0
    %v4985 = vadd.f32 %v2457, %v4984
    %4986 = vdwg.mxu0
    %4987 = vmatprep.subr.bf16.mxu0 %v4875
    %4988 = vmatpush1.bf16.msra.mxu0 %v4874
    %4989 = vmatprep.subr.bf16.mxu0 %v4877
    %4990 = vmatpush1.bf16.msra.mxu0 %v4876
    %4991 = vmatprep.subr.bf16.mxu0 %v4879
    %4992 = vmatpush1.bf16.msra.mxu0 %v4878
    %4993 = vmatprep.subr.bf16.mxu0 %v4881
    %4994 = vmatpush1.bf16.msra.mxu0 %v4880
    %4995 = vmatprep.subr.bf16.mxu0 %v4883
    %4996 = vmatpush1.bf16.msra.mxu0 %v4882
    %4997 = vmatprep.subr.bf16.mxu0 %v4885
    %4998 = vmatpush1.bf16.msra.mxu0 %v4884
    %4999 = vmatprep.subr.bf16.mxu0 %v4887
    %5000 = vmatpush1.bf16.msra.mxu0 %v4886
    %5001 = vmatprep.subr.bf16.mxu0 %v4889
    %5002 = vmatpush1.bf16.msra.mxu0 %v4888
    %5003 = vmatprep.subr.bf16.mxu0 %v4891
    %5004 = vmatpush1.bf16.msra.mxu0 %v4890
    %5005 = vmatprep.subr.bf16.mxu0 %v4893
    %5006 = vmatpush1.bf16.msra.mxu0 %v4892
    %5007 = vmatprep.subr.bf16.mxu0 %v4895
    %5008 = vmatpush1.bf16.msra.mxu0 %v4894
    %5009 = vmatprep.subr.bf16.mxu0 %v4897
    %5010 = vmatpush1.bf16.msra.mxu0 %v4896
    %5011 = vmatprep.subr.bf16.mxu0 %v4899
    %5012 = vmatpush1.bf16.msra.mxu0 %v4898
    %5013 = vmatprep.subr.bf16.mxu0 %v4901
    %5014 = vmatpush1.bf16.msra.mxu0 %v4900
    %5015 = vmatprep.subr.bf16.mxu0 %v4903
    %5016 = vmatpush1.bf16.msra.mxu0 %v4902
    %5017 = vmatprep.subr.bf16.mxu0 %v4905
    %5018 = vmatpush1.bf16.msra.mxu0 %v4904
    %5019 = vmatprep.mubr.bf16.mxu0 %v2526
    %5020 = vmatmul.mubr.bf16.gmra.mrb[0].mxu0 %v2525
    %v5021 = vpop.f32.mrb[0].mxu0
    %v5022 = vadd.f32 %v4949, %v5021
    %v5023 = vpop.f32.mrb[0].mxu0
    %v5024 = vadd.f32 %v4951, %v5023
    %v5025 = vpop.f32.mrb[0].mxu0
    %v5026 = vadd.f32 %v4953, %v5025
    %v5027 = vpop.f32.mrb[0].mxu0
    %v5028 = vadd.f32 %v4955, %v5027
    %5029 = vmatprep.mubr.bf16.mxu0 %v2531
    %5030 = vmatmul.mubr.bf16.gmra.mrb[0].mxu0 %v2530
    %v5031 = vpop.f32.mrb[0].mxu0
    %v5032 = vadd.f32 %v4959, %v5031
    %v5033 = vpop.f32.mrb[0].mxu0
    %v5034 = vadd.f32 %v4961, %v5033
    %v5035 = vpop.f32.mrb[0].mxu0
    %v5036 = vadd.f32 %v4963, %v5035
    %v5037 = vpop.f32.mrb[0].mxu0
    %v5038 = vadd.f32 %v4965, %v5037
    %5039 = vmatprep.mubr.bf16.mxu0 %v2536
    %5040 = vmatmul.mubr.bf16.gmra.mrb[0].mxu0 %v2535
    %v5041 = vpop.f32.mrb[0].mxu0
    %v5042 = vadd.f32 %v4969, %v5041
    %v5043 = vpop.f32.mrb[0].mxu0
    %v5044 = vadd.f32 %v4971, %v5043
    %v5045 = vpop.f32.mrb[0].mxu0
    %v5046 = vadd.f32 %v4973, %v5045
    %v5047 = vpop.f32.mrb[0].mxu0
    %v5048 = vadd.f32 %v4975, %v5047
    %5049 = vmatprep.mubr.bf16.mxu0 %v2541
    %5050 = vmatmul.mubr.bf16.gmra.mrb[0].mxu0 %v2540
    %v5051 = vpop.f32.mrb[0].mxu0
    %v5052 = vadd.f32 %v4979, %v5051
    %v5053 = vpop.f32.mrb[0].mxu0
    %v5054 = vadd.f32 %v4981, %v5053
    %v5055 = vpop.f32.mrb[0].mxu0
    %v5056 = vadd.f32 %v4983, %v5055
    %v5057 = vpop.f32.mrb[0].mxu0
    %v5058 = vadd.f32 %v4985, %v5057
    %5059 = vdwg.mxu0
    %5060 = vmatprep.subr.bf16.mxu0 %v4907
    %5061 = vmatpush1.bf16.msra.mxu0 %v4906
    %5062 = vmatprep.subr.bf16.mxu0 %v4909
    %5063 = vmatpush1.bf16.msra.mxu0 %v4908
    %5064 = vmatprep.subr.bf16.mxu0 %v4911
    %5065 = vmatpush1.bf16.msra.mxu0 %v4910
    %5066 = vmatprep.subr.bf16.mxu0 %v4913
    %5067 = vmatpush1.bf16.msra.mxu0 %v4912
    %5068 = vmatprep.subr.bf16.mxu0 0
    %5069 = vmatpush1.bf16.msra.mxu0 0
    %5070 = vmatprep.subr.bf16.mxu0 0
    %5071 = vmatpush1.bf16.msra.mxu0 0
    %5072 = vmatprep.subr.bf16.mxu0 0
    %5073 = vmatpush1.bf16.msra.mxu0 0
    %5074 = vmatprep.subr.bf16.mxu0 0
    %5075 = vmatpush1.bf16.msra.mxu0 0
    %5076 = vmatprep.subr.bf16.mxu0 0
    %5077 = vmatpush1.bf16.msra.mxu0 0
    %5078 = vmatprep.subr.bf16.mxu0 0
    %5079 = vmatpush1.bf16.msra.mxu0 0
    %5080 = vmatprep.subr.bf16.mxu0 0
    %5081 = vmatpush1.bf16.msra.mxu0 0
    %5082 = vmatprep.subr.bf16.mxu0 0
    %5083 = vmatpush1.bf16.msra.mxu0 0
    %5084 = vmatprep.subr.bf16.mxu0 0
    %5085 = vmatpush1.bf16.msra.mxu0 0
    %5086 = vmatprep.subr.bf16.mxu0 0
    %5087 = vmatpush1.bf16.msra.mxu0 0
    %5088 = vmatprep.subr.bf16.mxu0 0
    %5089 = vmatpush1.bf16.msra.mxu0 0
    %5090 = vmatprep.subr.bf16.mxu0 0
    %5091 = vmatpush1.bf16.msra.mxu0 0
    %5092 = vmatprep.mubr.bf16.mxu0 0
    %5093 = vmatmul.mubr.bf16.gmra.mrb[0].mxu0 %v2560
    %v5094 = vpop.f32.mrb[0].mxu0
    %v5095 = vadd.f32 %v5022, %v5094
    %v5096 = vpop.f32.mrb[0].mxu0
    %v5097 = vadd.f32 %v5024, %v5096
    %v5098 = vpop.f32.mrb[0].mxu0
    %v5099 = vadd.f32 %v5026, %v5098
    %v5100 = vpop.f32.mrb[0].mxu0
    %v5101 = vadd.f32 %v5028, %v5100
    %5102 = vmatprep.mubr.bf16.mxu0 0
    %5103 = vmatmul.mubr.bf16.gmra.mrb[0].mxu0 %v2563
    %v5104 = vpop.f32.mrb[0].mxu0
    %v5105 = vadd.f32 %v5032, %v5104
    %v5106 = vpop.f32.mrb[0].mxu0
    %v5107 = vadd.f32 %v5034, %v5106
    %v5108 = vpop.f32.mrb[0].mxu0
    %v5109 = vadd.f32 %v5036, %v5108
    %v5110 = vpop.f32.mrb[0].mxu0
    %v5111 = vadd.f32 %v5038, %v5110
    %5112 = vmatprep.mubr.bf16.mxu0 0
    %5113 = vmatmul.mubr.bf16.gmra.mrb[0].mxu0 %v2566
    %v5114 = vpop.f32.mrb[0].mxu0
    %v5115 = vadd.f32 %v5042, %v5114
    %v5116 = vpop.f32.mrb[0].mxu0
    %v5117 = vadd.f32 %v5044, %v5116
    %v5118 = vpop.f32.mrb[0].mxu0
    %v5119 = vadd.f32 %v5046, %v5118
    %v5120 = vpop.f32.mrb[0].mxu0
    %v5121 = vadd.f32 %v5048, %v5120
    %5122 = vmatprep.mubr.bf16.mxu0 0
    %5123 = vmatmul.mubr.bf16.gmra.mrb[0].mxu0 %v2569
    %v5124 = vpop.f32.mrb[0].mxu0
    %v5125 = vadd.f32 %v5052, %v5124
    %v5126 = vpop.f32.mrb[0].mxu0
    %v5127 = vadd.f32 %v5054, %v5126
    %v5128 = vpop.f32.mrb[0].mxu0
    %v5129 = vadd.f32 %v5056, %v5128
    %v5130 = vpop.f32.mrb[0].mxu0
    %v5131 = vadd.f32 %v5058, %v5130
    %5132 = vdwg.mxu0
    %v5133 = vadd.f32 %v5095, %v2823
    %v5134 = vadd.f32 %v5097, %v2824
    %v5135 = vadd.f32 %v5099, %v2825
    %v5136 = vadd.f32 %v5101, %v2826
    %v5137 = vadd.f32 %v5105, %v2827
    %v5138 = vadd.f32 %v5107, %v2828
    %v5139 = vadd.f32 %v5109, %v2829
    %v5140 = vadd.f32 %v5111, %v2830
    %v5141 = vadd.f32 %v5115, %v2831
    %v5142 = vadd.f32 %v5117, %v2832
    %v5143 = vadd.f32 %v5119, %v2833
    %v5144 = vadd.f32 %v5121, %v2834
    %v5145 = vadd.f32 %v5125, %v2835
    %v5146 = vadd.f32 %v5127, %v2836
    %v5147 = vadd.f32 %v5129, %v2837
    %v5148 = vadd.f32 %v5131, %v2838
    %s5149 = scalar_lea.vmem [#allocation8], 128
    %5150 = vst [vmem:[%s5149] sm:$0xff] %v5133
    %5151 = vst [vmem:[%s5149 + $0x8] sm:$0xff] %v5134
    %5152 = vst [vmem:[%s5149 + $0x10] sm:$0xff] %v5135
    %5153 = vst [vmem:[%s5149 + $0x18] sm:$0xff] %v5136
    %5154 = vst [vmem:[%s5149 + $0x20] sm:$0xff] %v5137
    %5155 = vst [vmem:[%s5149 + $0x28] sm:$0xff] %v5138
    %5156 = vst [vmem:[%s5149 + $0x30] sm:$0xff] %v5139
    %5157 = vst [vmem:[%s5149 + $0x38] sm:$0xff] %v5140
    %5158 = vst [vmem:[%s5149 + $0x40] sm:$0xff] %v5141
    %5159 = vst [vmem:[%s5149 + $0x48] sm:$0xff] %v5142
    %5160 = vst [vmem:[%s5149 + $0x50] sm:$0xff] %v5143
    %5161 = vst [vmem:[%s5149 + $0x58] sm:$0xff] %v5144
    %5162 = vst [vmem:[%s5149 + $0x60] sm:$0xff] %v5145
    %5163 = vst [vmem:[%s5149 + $0x68] sm:$0xff] %v5146
    %5164 = vst [vmem:[%s5149 + $0x70] sm:$0xff] %v5147
    %5165 = vst [vmem:[%s5149 + $0x78] sm:$0xff] %v5148
    // Predicated region
    $region34: #{tpu_custom_call.1} parent=1 // pred_check
      _
    $region35: #{tpu_custom_call.1} parent=1 // pred_check_branch
      %5167 = sbr.rel (0) target = $region37
    $region36: #{tpu_custom_call.1} parent=1 // pred_region
      %s5169 = ssub.s32 4096, 4096
      %5170 = vsyncadd [#allocation4], %s5169
      %s5171 = sshll.u32 [#allocation8], 4
      %s5172 = int_to_ptr.vmem [resolvable:$true] %s5171
      %5177 = dma.vmem_to_hbm [thread:$0]  %s5172, 4096, %s5, [#allocation4], 256, 256, 16
    $region37: #{tpu_custom_call.1} parent=1 // pred_fallthru
      _
    // Predicated region
    $region38: #{tpu_custom_call.1} parent=1 // pred_check
      _
    $region39: #{tpu_custom_call.1} parent=1 // pred_check_branch
      %5179 = sbr.rel (0) target = $region41
    $region40: #{tpu_custom_call.1} parent=1 // pred_region
      %5180 = dma.done [#allocation4], 4096
    $region41: #{tpu_custom_call.1} parent=1 // pred_fallthru
      _
    %5181 = vsyncpa [#allocation3], 1
    %5182 = vsyncpa [#allocation6], 1
    %5183 = vsyncpa [#allocation4], 1

</llo_original>
